<compile_context>
chip_gen: v7x
topology: tpu7x:2x2x1
jax: 0.10.0
libtpu: 0.0.40
codegen_flags: <defaults>
</compile_context>

<pallas_src>
from functools import partial

import jax
import jax.numpy as jnp
from jax import lax
from jax.experimental import pallas as pl
from jax.experimental.pallas import tpu as pltpu


def _vmem_limit_bytes():
    # ~75% of physical VMEM, capped at 96 MiB (v5e/v6e: 128 MiB, v7x: 64 MiB).
    cap = 64 * 1024 * 1024
    try:
        info = pltpu.get_tpu_info()
        cap = int(getattr(info, "vmem_capacity_bytes", cap))
    except Exception:
        pass
    return int(min(0.75 * cap, 96 * 1024 * 1024))


VMEM_LIMIT = _vmem_limit_bytes()


def _silu(x):
    # exp on the EUP; divide kept exact so the bf16 check stays tight.
    return x * (1.0 / (1.0 + jnp.exp(-x)))


def _pick_row_tile(h):
    for t in (32, 16, 8):
        if h % t == 0 and h > t:
            return t
    return h


# ----------------------------------------------------------------------------
# Kernel 1: row-tiled matmul + bias + SiLU  (1x1 convs, downsample conv)
# ----------------------------------------------------------------------------
def _matmul_bias_silu_kernel(x_ref, w_ref, b_ref, o_ref):
    acc = jnp.dot(x_ref[...], w_ref[...], preferred_element_type=jnp.float32)
    o_ref[...] = _silu(acc + b_ref[...]).astype(o_ref.dtype)


def matmul_bias_silu(x_flat, w, b, *, tm=2048, out_dtype=jnp.bfloat16):
    M, Cin = x_flat.shape
    Cout = w.shape[1]
    tm = min(tm, M)
    return pl.pallas_call(
        _matmul_bias_silu_kernel,
        out_shape=jax.ShapeDtypeStruct((M, Cout), out_dtype),
        grid=(pl.cdiv(M, tm),),
        in_specs=[
            pl.BlockSpec((tm, Cin), lambda i: (i, 0)),
            pl.BlockSpec((Cin, Cout), lambda i: (0, 0)),
            pl.BlockSpec((1, Cout), lambda i: (0, 0)),
        ],
        out_specs=pl.BlockSpec((tm, Cout), lambda i: (i, 0)),
        compiler_params=pltpu.CompilerParams(
            dimension_semantics=("parallel",), vmem_limit_bytes=VMEM_LIMIT),
    )(x_flat.astype(jnp.bfloat16), w.astype(jnp.bfloat16),
      b.reshape(1, Cout).astype(jnp.float32))


def conv1x1_silu(x_nhwc, w, b):
    N, H, W, Cin = x_nhwc.shape
    out = matmul_bias_silu(x_nhwc.reshape(N * H * W, Cin), w, b)
    return out.reshape(N, H, W, w.shape[1])


# ----------------------------------------------------------------------------
# Kernel 2: C2f cv2 without the HBM concat: out = silu(t@Wa + m@Wb + bias)
# ----------------------------------------------------------------------------
def _matmul2_bias_silu_kernel(a_ref, c_ref, wa_ref, wb_ref, bias_ref, o_ref):
    acc = jnp.dot(a_ref[...], wa_ref[...], preferred_element_type=jnp.float32)
    acc = acc + jnp.dot(c_ref[...], wb_ref[...], preferred_element_type=jnp.float32)
    o_ref[...] = _silu(acc + bias_ref[...]).astype(o_ref.dtype)


def matmul2_bias_silu(a, c, wa, wb, bias, *, tm=2048, out_dtype=jnp.bfloat16):
    M, Ka = a.shape
    Kb = c.shape[1]
    Cout = wa.shape[1]
    tm = min(tm, M)
    return pl.pallas_call(
        _matmul2_bias_silu_kernel,
        out_shape=jax.ShapeDtypeStruct((M, Cout), out_dtype),
        grid=(pl.cdiv(M, tm),),
        in_specs=[
            pl.BlockSpec((tm, Ka), lambda i: (i, 0)),
            pl.BlockSpec((tm, Kb), lambda i: (i, 0)),
            pl.BlockSpec((Ka, Cout), lambda i: (0, 0)),
            pl.BlockSpec((Kb, Cout), lambda i: (0, 0)),
            pl.BlockSpec((1, Cout), lambda i: (0, 0)),
        ],
        out_specs=pl.BlockSpec((tm, Cout), lambda i: (i, 0)),
        compiler_params=pltpu.CompilerParams(
            dimension_semantics=("parallel",), vmem_limit_bytes=VMEM_LIMIT),
    )(a.astype(jnp.bfloat16), c.astype(jnp.bfloat16),
      wa.astype(jnp.bfloat16), wb.astype(jnp.bfloat16),
      bias.reshape(1, Cout).astype(jnp.float32))


# ----------------------------------------------------------------------------
# Kernel 3: 3x3 SAME conv + bias + SiLU, row-tiled with a 1-row halo.
# Column taps grouped into one K=3*Cin operand; only valid rows are written.
# ----------------------------------------------------------------------------
def _conv3x3_silu_kernel(x_ref, w_ref, b_ref, o_ref, *, th, w_out):
    # x: (1, 1, th+2, w_out+2, Cin) bf16   w: (3, 3*Cin, Cout) bf16   b: (1, Cout) f32
    x = x_ref[0, 0]
    cin = x.shape[-1]
    cout = o_ref.shape[-1]
    # Group the 3 dx taps along the channel (lane) axis -> K = 3*Cin.
    xcat = jnp.concatenate([x[:, dx:dx + w_out, :] for dx in range(3)], axis=-1)
    acc = jnp.zeros((th * w_out, cout), jnp.float32)
    for dy in range(3):
        rows = xcat[dy:dy + th].reshape(th * w_out, 3 * cin)
        acc = acc + jnp.dot(rows, w_ref[dy], preferred_element_type=jnp.float32)
    acc = _silu(acc + b_ref[...])
    o_ref[0] = acc.reshape(th, w_out, cout).astype(o_ref.dtype)


def conv3x3_silu(x_nhwc, w, b, *, out_dtype=jnp.bfloat16):
    # w: (3, 3, Cin, Cout) HWIO; stride=1, padding=1 (SAME).
    N, H, W, Cin = x_nhwc.shape
    Cout = w.shape[-1]
    th = _pick_row_tile(H)
    r = H // th
    # Zero-pad once, then gather overlapped row tiles (halo = 1 row each side).
    xp = jnp.pad(x_nhwc.astype(jnp.bfloat16), ((0, 0), (1, 1), (1, 1), (0, 0)))
    row_idx = jnp.arange(r)[:, None] * th + jnp.arange(th + 2)[None, :]
    xt = jnp.take(xp, row_idx, axis=1)                       # (N, r, th+2, W+2, Cin)
    w3 = w.reshape(3, 3 * Cin, Cout).astype(jnp.bfloat16)    # rows ordered (dx, cin)
    return pl.pallas_call(
        partial(_conv3x3_silu_kernel, th=th, w_out=W),
        out_shape=jax.ShapeDtypeStruct((N, H, W, Cout), out_dtype),
        grid=(N, r),
        in_specs=[
            pl.BlockSpec((1, 1, th + 2, W + 2, Cin), lambda n, i: (n, i, 0, 0, 0)),
            pl.BlockSpec((3, 3 * Cin, Cout), lambda n, i: (0, 0, 0)),
            pl.BlockSpec((1, Cout), lambda n, i: (0, 0)),
        ],
        out_specs=pl.BlockSpec((1, th, W, Cout), lambda n, i: (n, i, 0, 0)),
        compiler_params=pltpu.CompilerParams(
            dimension_semantics=("parallel", "parallel"),
            vmem_limit_bytes=VMEM_LIMIT),
    )(xt, w3, b.reshape(1, Cout).astype(jnp.float32))


# ----------------------------------------------------------------------------
# Kernel 4 (level=0): fused Upsample(1x1 conv + 2x bilinear) + ASFF weighting.
#   u   = SiLU(conv1x1(x2_half))        (half-res, stays in VMEM)
#   x2  = bilinear_2x(u)                (computed in VMEM, never hits HBM)
#   a1  = SiLU(conv1x1(x1)); a2 = SiLU(conv1x1(x2))
#   w0  = sigmoid(l0 - l1)  (== 2-way softmax), out = x1*w0 + x2*(1-w0)
# ----------------------------------------------------------------------------
def _upfuse_kernel(x2t_ref, x1_ref, wup_ref, bup_ref, w1_ref, b1_ref,
                   w2_ref, b2_ref, wl1_ref, wl2_ref, bl_ref, o_ref,
                   *, th2, w_half):
    c1 = o_ref.shape[-1]
    w_full = 2 * w_half
    x2 = x2t_ref[0, 0]                                   # (th2+2, w_half+2, C2) bf16
    rows = (th2 + 2) * (w_half + 2)
    # Upsample's 1x1 conv (+folded BN) + SiLU.
    u = jnp.dot(x2.reshape(rows, x2.shape[-1]), wup_ref[...],
                preferred_element_type=jnp.float32) + bup_ref[...]
    u = _silu(u).astype(jnp.bfloat16).reshape(th2 + 2, w_half + 2, c1)
    # 2x bilinear upsample, align_corners=False (edges handled by replicate pad /
    # clamped row halo done in the wrapper).  Columns first, then rows.
    uc = u[:, 1:w_half + 1, :].astype(jnp.float32)
    ul = u[:, 0:w_half, :].astype(jnp.float32)
    ur = u[:, 2:w_half + 2, :].astype(jnp.float32)
    uw = jnp.stack([0.75 * uc + 0.25 * ul, 0.75 * uc + 0.25 * ur],
                   axis=2).reshape(th2 + 2, w_full, c1)
    rc = uw[1:th2 + 1]
    ru = uw[0:th2]
    rd = uw[2:th2 + 2]
    x2up = jnp.stack([0.75 * rc + 0.25 * ru, 0.75 * rc + 0.25 * rd],
                     axis=1).reshape(2 * th2, w_full, c1)
    x2up_b = x2up.astype(jnp.bfloat16).reshape(2 * th2 * w_full, c1)
    x1_b = x1_ref[0].reshape(2 * th2 * w_full, c1)        # bf16
    # ASFF per-pixel weights (8-ch compress convs + 2-ch weight conv).
    a1 = _silu(jnp.dot(x1_b, w1_ref[...], preferred_element_type=jnp.float32)
               + b1_ref[...]).astype(jnp.bfloat16)
    a2 = _silu(jnp.dot(x2up_b, w2_ref[...], preferred_element_type=jnp.float32)
               + b2_ref[...]).astype(jnp.bfloat16)
    logits = (jnp.dot(a1, wl1_ref[...], preferred_element_type=jnp.float32)
              + jnp.dot(a2, wl2_ref[...], preferred_element_type=jnp.float32)
              + bl_ref[...])                              # (M, 2)
    # softmax over 2 classes == sigmoid of the logit difference (no XLU max/sum).
    w0 = 1.0 / (1.0 + jnp.exp(logits[:, 1:2] - logits[:, 0:1]))
    fused = x1_b.astype(jnp.float32) * w0 + x2up_b.astype(jnp.float32) * (1.0 - w0)
    o_ref[0] = fused.reshape(2 * th2, w_full, c1).astype(o_ref.dtype)


def upsample_fuse(x1_nhwc, x2h_nhwc, params):
    N, H, W, C1 = x1_nhwc.shape
    _, H2, W2, C2 = x2h_nhwc.shape
    assert H == 2 * H2 and W == 2 * W2
    th2 = _pick_row_tile(H2)
    r = H2 // th2
    wup, bup = params["up_conv"]
    w1, b1 = params["weight_level_1"]
    w2, b2 = params["weight_level_2"]
    wl = params["weight_levels_w"]
    bl = params["weight_levels_b"]
    cc = w1.shape[1]
    # Replicate-pad columns (pointwise conv commutes with replicate padding) and
    # gather clamped, overlapping row tiles (halo = 1 half-res row each side).
    x2p = jnp.pad(x2h_nhwc.astype(jnp.bfloat16),
                  ((0, 0), (0, 0), (1, 1), (0, 0)), mode="edge")
    row_idx = jnp.clip(jnp.arange(r)[:, None] * th2
                       + jnp.arange(-1, th2 + 1)[None, :], 0, H2 - 1)
    x2t = jnp.take(x2p, row_idx, axis=1)                  # (N, r, th2+2, W2+2, C2)
    return pl.pallas_call(
        partial(_upfuse_kernel, th2=th2, w_half=W2),
        out_shape=jax.ShapeDtypeStruct((N, H, W, C1), jnp.bfloat16),
        grid=(N, r),
        in_specs=[
            pl.BlockSpec((1, 1, th2 + 2, W2 + 2, C2), lambda n, i: (n, i, 0, 0, 0)),
            pl.BlockSpec((1, 2 * th2, W, C1), lambda n, i: (n, i, 0, 0)),
            pl.BlockSpec((C2, C1), lambda n, i: (0, 0)),
            pl.BlockSpec((1, C1), lambda n, i: (0, 0)),
            pl.BlockSpec((C1, cc), lambda n, i: (0, 0)),
            pl.BlockSpec((1, cc), lambda n, i: (0, 0)),
            pl.BlockSpec((C1, cc), lambda n, i: (0, 0)),
            pl.BlockSpec((1, cc), lambda n, i: (0, 0)),
            pl.BlockSpec((cc, 2), lambda n, i: (0, 0)),
            pl.BlockSpec((cc, 2), lambda n, i: (0, 0)),
            pl.BlockSpec((1, 2), lambda n, i: (0, 0)),
        ],
        out_specs=pl.BlockSpec((1, 2 * th2, W, C1), lambda n, i: (n, i, 0, 0)),
        compiler_params=pltpu.CompilerParams(
            dimension_semantics=("parallel", "parallel"),
            vmem_limit_bytes=VMEM_LIMIT),
    )(x2t, x1_nhwc.astype(jnp.bfloat16),
      wup.astype(jnp.bfloat16), bup.reshape(1, C1).astype(jnp.float32),
      w1.astype(jnp.bfloat16), b1.reshape(1, cc).astype(jnp.float32),
      w2.astype(jnp.bfloat16), b2.reshape(1, cc).astype(jnp.float32),
      wl[:cc].astype(jnp.bfloat16), wl[cc:].astype(jnp.bfloat16),
      bl.reshape(1, 2).astype(jnp.float32))


# ----------------------------------------------------------------------------
# Kernel 5 (level=1 path): flat ASFF fuse when both inputs are already same-res.
# ----------------------------------------------------------------------------
def _fuse_kernel(x1_ref, x2_ref, w1_ref, b1_ref, w2_ref, b2_ref,
                 wl1_ref, wl2_ref, bl_ref, o_ref):
    x1 = x1_ref[...]
    x2 = x2_ref[...]
    a1 = _silu(jnp.dot(x1, w1_ref[...], preferred_element_type=jnp.float32)
               + b1_ref[...]).astype(jnp.bfloat16)
    a2 = _silu(jnp.dot(x2, w2_ref[...], preferred_element_type=jnp.float32)
               + b2_ref[...]).astype(jnp.bfloat16)
    logits = (jnp.dot(a1, wl1_ref[...], preferred_element_type=jnp.float32)
              + jnp.dot(a2, wl2_ref[...], preferred_element_type=jnp.float32)
              + bl_ref[...])
    w0 = 1.0 / (1.0 + jnp.exp(logits[:, 1:2] - logits[:, 0:1]))
    fused = x1.astype(jnp.float32) * w0 + x2.astype(jnp.float32) * (1.0 - w0)
    o_ref[...] = fused.astype(o_ref.dtype)


def asff_fuse(x1_nhwc, x2_nhwc, params, *, tm=2048):
    N, H, W, C = x1_nhwc.shape
    M = N * H * W
    tm = min(tm, M)
    w1, b1 = params["weight_level_1"]
    w2, b2 = params["weight_level_2"]
    wl = params["weight_levels_w"]
    bl = params["weight_levels_b"]
    cc = w1.shape[1]
    out = pl.pallas_call(
        _fuse_kernel,
        out_shape=jax.ShapeDtypeStruct((M, C), jnp.bfloat16),
        grid=(pl.cdiv(M, tm),),
        in_specs=[pl.BlockSpec((tm, C), lambda i: (i, 0)),
                  pl.BlockSpec((tm, C), lambda i: (i, 0)),
                  pl.BlockSpec((C, cc), lambda i: (0, 0)),
                  pl.BlockSpec((1, cc), lambda i: (0, 0)),
                  pl.BlockSpec((C, cc), lambda i: (0, 0)),
                  pl.BlockSpec((1, cc), lambda i: (0, 0)),
                  pl.BlockSpec((cc, 2), lambda i: (0, 0)),
                  pl.BlockSpec((cc, 2), lambda i: (0, 0)),
                  pl.BlockSpec((1, 2), lambda i: (0, 0))],
        out_specs=pl.BlockSpec((tm, C), lambda i: (i, 0)),
        compiler_params=pltpu.CompilerParams(
            dimension_semantics=("parallel",), vmem_limit_bytes=VMEM_LIMIT),
    )(x1_nhwc.reshape(M, C).astype(jnp.bfloat16),
      x2_nhwc.reshape(M, C).astype(jnp.bfloat16),
      w1.astype(jnp.bfloat16), b1.reshape(1, cc).astype(jnp.float32),
      w2.astype(jnp.bfloat16), b2.reshape(1, cc).astype(jnp.float32),
      wl[:cc].astype(jnp.bfloat16), wl[cc:].astype(jnp.bfloat16),
      bl.reshape(1, 2).astype(jnp.float32))
    return out.reshape(N, H, W, C)


def downsample_conv2x2_s2_silu(x_nhwc, w, b):
    # Conv(k=2, s=2, p=0) + BN + SiLU via space-to-depth + Pallas matmul (level=1).
    N, H, W, Cin = x_nhwc.shape
    Cout = w.shape[-1]
    xr = x_nhwc.reshape(N, H // 2, 2, W // 2, 2, Cin)
    xr = jnp.transpose(xr, (0, 1, 3, 2, 4, 5)).reshape(N * (H // 2) * (W // 2), 4 * Cin)
    out = matmul_bias_silu(xr, w.reshape(4 * Cin, Cout), b)
    return out.reshape(N, H // 2, W // 2, Cout)


def bilinear_upsample_2x(x):
    """2x bilinear upsample, NHWC, torch Upsample(align_corners=False). (reference)"""
    def up1d(a, axis):
        n = a.shape[axis]
        left = jnp.concatenate([lax.slice_in_dim(a, 0, 1, axis=axis),
                                lax.slice_in_dim(a, 0, n - 1, axis=axis)], axis=axis)
        right = jnp.concatenate([lax.slice_in_dim(a, 1, n, axis=axis),
                                 lax.slice_in_dim(a, n - 1, n, axis=axis)], axis=axis)
        even = 0.75 * a + 0.25 * left
        odd = 0.75 * a + 0.25 * right
        out = jnp.stack([even, odd], axis=axis + 1)
        new_shape = list(a.shape)
        new_shape[axis] *= 2
        return out.reshape(new_shape)
    return up1d(up1d(x, 1), 2)


# ----------------------------------------------------------------------------
# Parameters (deterministic, BatchNorm folded into conv weight/bias)
# ----------------------------------------------------------------------------
def make_conv_params(key, cin, cout, k):
    k1, k2, k3, k4, k5 = jax.random.split(key, 5)
    shape = (cin, cout) if k == 1 else (k, k, cin, cout)        # HWIO for k>1
    w = 0.1 * jax.random.normal(k1, shape, jnp.float32)
    gamma = 1.0 + 0.1 * jax.random.normal(k2, (cout,), jnp.float32)
    beta = 0.1 * jax.random.normal(k3, (cout,), jnp.float32)
    mean = 0.1 * jax.random.normal(k4, (cout,), jnp.float32)
    var = jnp.abs(jax.random.normal(k5, (cout,), jnp.float32)) + 0.5
    scale = gamma / jnp.sqrt(var + 1e-3)
    return w * scale, beta - mean * scale


def make_asff2_params(key, inter_dim, channel, compress_c=8):
    keys = jax.random.split(key, 11)
    c = inter_dim // 2                                          # C2f hidden (e=0.5)
    return {
        "up_conv":        make_conv_params(keys[0], channel[1], channel[0], 1),
        "down_conv":      make_conv_params(keys[1], channel[0], channel[1], 2),
        "weight_level_1": make_conv_params(keys[2], inter_dim, compress_c, 1),
        "weight_level_2": make_conv_params(keys[3], inter_dim, compress_c, 1),
        "weight_levels_w": 0.1 * jax.random.normal(keys[4], (2 * compress_c, 2), jnp.float32),
        "weight_levels_b": 0.1 * jax.random.normal(keys[5], (2,), jnp.float32),
        "conv":           make_conv_params(keys[6], inter_dim, inter_dim, 3),
        "c2f_cv1":        make_conv_params(keys[7], inter_dim, 2 * c, 1),
        "c2f_m_cv1":      make_conv_params(keys[8], c, c, 3),
        "c2f_m_cv2":      make_conv_params(keys[9], c, c, 3),
        "c2f_cv2":        make_conv_params(keys[10], 3 * c, inter_dim, 1),
    }


# ----------------------------------------------------------------------------
# ASFF_2 forward (NCHW in / NCHW out, like the PyTorch module)
# ----------------------------------------------------------------------------
def asff2_forward(inputs, params, *, level=0):
    input1, input2 = inputs
    x1 = jnp.transpose(input1, (0, 2, 3, 1)).astype(jnp.bfloat16)   # NHWC, bf16
    x2 = jnp.transpose(input2, (0, 2, 3, 1)).astype(jnp.bfloat16)
    if level == 0:
        fused = upsample_fuse(x1, x2, params)
    elif level == 1:
        x1 = downsample_conv2x2_s2_silu(x1, *params["down_conv"])
        fused = asff_fuse(x1, x2, params)
    else:
        fused = asff_fuse(x1, x2, params)
    out = conv3x3_silu(fused, *params["conv"])
    # C2f(inter, inter, n=1, shortcut=False), no HBM concat:
    t = conv1x1_silu(out, *params["c2f_cv1"])           # (N,H,W,2c) = [y0 | y1]
    c = t.shape[-1] // 2
    m = conv3x3_silu(t[..., c:], *params["c2f_m_cv1"])
    m = conv3x3_silu(m, *params["c2f_m_cv2"])           # shortcut=False: no residual
    w_cv2, b_cv2 = params["c2f_cv2"]                     # (3c, inter_dim)
    N, H, W, _ = t.shape
    M = N * H * W
    out = matmul2_bias_silu(t.reshape(M, 2 * c), m.reshape(M, c),
                            w_cv2[:2 * c], w_cv2[2 * c:], b_cv2,
                            out_dtype=jnp.float32)
    return jnp.transpose(out.reshape(N, H, W, -1), (0, 3, 1, 2))


# ----------------------------------------------------------------------------
# Pure-JAX reference (bf16 rounding points matched to the kernel path)
# ----------------------------------------------------------------------------
def _ref_conv(x, w, b, stride=1, padding="SAME", out_dtype=jnp.bfloat16):
    wk = w if w.ndim == 4 else w[None, None]
    y = lax.conv_general_dilated(x.astype(jnp.bfloat16), wk.astype(jnp.bfloat16),
                                 (stride, stride), padding,
                                 dimension_numbers=("NHWC", "HWIO", "NHWC"),
                                 preferred_element_type=jnp.float32) + b
    return _silu(y).astype(out_dtype)


def asff2_reference(inputs, params, *, level=0):
    input1, input2 = inputs
    x1 = jnp.transpose(input1, (0, 2, 3, 1)).astype(jnp.bfloat16)
    x2 = jnp.transpose(input2, (0, 2, 3, 1)).astype(jnp.bfloat16)
    if level == 0:
        x2 = _ref_conv(x2, *params["up_conv"])
        x2 = bilinear_upsample_2x(x2.astype(jnp.float32)).astype(jnp.bfloat16)
    elif level == 1:
        x1 = _ref_conv(x1, *params["down_conv"], stride=2, padding="VALID")
    a1 = _ref_conv(x1, *params["weight_level_1"])
    a2 = _ref_conv(x2, *params["weight_level_2"])
    logits = jnp.einsum("nhwc,co->nhwo", jnp.concatenate([a1, a2], axis=-1),
                        params["weight_levels_w"].astype(jnp.bfloat16),
                        preferred_element_type=jnp.float32) + params["weight_levels_b"]
    wgt = jax.nn.softmax(logits, axis=-1)
    fused = (x1.astype(jnp.float32) * wgt[..., 0:1]
             + x2.astype(jnp.float32) * wgt[..., 1:2]).astype(jnp.bfloat16)
    out = _ref_conv(fused, *params["conv"])
    t = _ref_conv(out, *params["c2f_cv1"])
    c = t.shape[-1] // 2
    y0, y1 = t[..., :c], t[..., c:]
    m = _ref_conv(y1, *params["c2f_m_cv1"])
    m = _ref_conv(m, *params["c2f_m_cv2"])
    out = _ref_conv(jnp.concatenate([y0, y1, m], axis=-1), *params["c2f_cv2"],
                    out_dtype=jnp.float32)
    return jnp.transpose(out, (0, 3, 1, 2))


# ----------------------------------------------------------------------------
if __name__ == "__main__":
    key = jax.random.PRNGKey(0)
    k1, k2, kp = jax.random.split(key, 3)

    # level=0: input1 full-res (inter_dim ch), input2 half-res (channel[1] ch)
    N, H, W = 2, 16, 16
    inter_dim, channel, level = 32, (32, 64), 0
    x1 = jax.random.normal(k1, (N, inter_dim, H, W), jnp.float32)
    x2 = jax.random.normal(k2, (N, channel[1], H // 2, W // 2), jnp.float32)
    params = make_asff2_params(kp, inter_dim, channel)

    out = jax.block_until_ready(asff2_forward((x1, x2), params, level=level))
    ref = jax.block_until_ready(asff2_reference((x1, x2), params, level=level))

    assert out.shape == (N, inter_dim, H, W), out.shape
    max_err = float(jnp.max(jnp.abs(out - ref)))
    assert jnp.allclose(out, ref, rtol=2e-2, atol=2e-2), max_err

    print("KERNEL_OK")
</pallas_src>

<mosaic_0001>
module attributes {stable_mosaic.version = 11 : i64} {
  func.func @_upfuse_kernel(%arg0: i32, %arg1: i32, %arg2: memref<1x1x10x10x64xbf16, #tpu.memory_space<vmem>>, %arg3: memref<1x16x16x32xbf16, #tpu.memory_space<vmem>>, %arg4: memref<64x32xbf16, #tpu.memory_space<vmem>>, %arg5: memref<1x32xf32, #tpu.memory_space<vmem>>, %arg6: memref<32x8xbf16, #tpu.memory_space<vmem>>, %arg7: memref<1x8xf32, #tpu.memory_space<vmem>>, %arg8: memref<32x8xbf16, #tpu.memory_space<vmem>>, %arg9: memref<1x8xf32, #tpu.memory_space<vmem>>, %arg10: memref<8x2xbf16, #tpu.memory_space<vmem>>, %arg11: memref<8x2xbf16, #tpu.memory_space<vmem>>, %arg12: memref<1x2xf32, #tpu.memory_space<vmem>>, %arg13: memref<1x16x16x32xbf16, #tpu.memory_space<vmem>>) attributes {dimension_semantics = [#tpu.dimension_semantics<parallel>, #tpu.dimension_semantics<parallel>], iteration_bounds = array<i64: 2, 1>, scalar_prefetch = 0 : i64, scratch_operands = 0 : i64, tpu.core_type = #tpu.core_type<tc>, window_params = [{transform_indices = @transform_0, window_bounds = array<i64: 1, 1, 10, 10, 64>}, {transform_indices = @transform_1, window_bounds = array<i64: 1, 16, 16, 32>}, {pipeline_mode = #tpu.pipeline_mode<synchronous>, transform_indices = @transform_2, window_bounds = array<i64: 64, 32>}, {pipeline_mode = #tpu.pipeline_mode<synchronous>, transform_indices = @transform_3, window_bounds = array<i64: 1, 32>}, {pipeline_mode = #tpu.pipeline_mode<synchronous>, transform_indices = @transform_4, window_bounds = array<i64: 32, 8>}, {pipeline_mode = #tpu.pipeline_mode<synchronous>, transform_indices = @transform_5, window_bounds = array<i64: 1, 8>}, {pipeline_mode = #tpu.pipeline_mode<synchronous>, transform_indices = @transform_6, window_bounds = array<i64: 32, 8>}, {pipeline_mode = #tpu.pipeline_mode<synchronous>, transform_indices = @transform_7, window_bounds = array<i64: 1, 8>}, {pipeline_mode = #tpu.pipeline_mode<synchronous>, transform_indices = @transform_8, window_bounds = array<i64: 8, 2>}, {pipeline_mode = #tpu.pipeline_mode<synchronous>, transform_indices = @transform_9, window_bounds = array<i64: 8, 2>}, {pipeline_mode = #tpu.pipeline_mode<synchronous>, transform_indices = @transform_10, window_bounds = array<i64: 1, 2>}, {transform_indices = @transform_11, window_bounds = array<i64: 1, 16, 16, 32>}]} {
    %c0 = arith.constant 0 : index
    %c0_0 = arith.constant 0 : index
    %c0_1 = arith.constant 0 : index
    %c0_2 = arith.constant 0 : index
    %c0_3 = arith.constant 0 : index
    %0 = vector.load %arg2[%c0, %c0_0, %c0_1, %c0_2, %c0_3] : memref<1x1x10x10x64xbf16, #tpu.memory_space<vmem>>, vector<1x1x10x10x64xbf16>
    %1 = vector.shape_cast %0 : vector<1x1x10x10x64xbf16> to vector<10x10x64xbf16>
    %2 = vector.shape_cast %1 : vector<10x10x64xbf16> to vector<100x64xbf16>
    %c0_4 = arith.constant 0 : index
    %c0_5 = arith.constant 0 : index
    %3 = vector.load %arg4[%c0_4, %c0_5] : memref<64x32xbf16, #tpu.memory_space<vmem>>, vector<64x32xbf16>
    %cst = arith.constant dense<0.000000e+00> : vector<100x32xf32>
    %4 = tpu.matmul %2, %3, %cst {dimension_numbers = #tpu.dot_dimension_numbers<[1], [0], [0], [1], [0, 0, 1, 1], [], []>} : vector<100x64xbf16>, vector<64x32xbf16>, vector<100x32xf32> -> vector<100x32xf32>
    %c0_6 = arith.constant 0 : index
    %c0_7 = arith.constant 0 : index
    %5 = vector.load %arg5[%c0_6, %c0_7] : memref<1x32xf32, #tpu.memory_space<vmem>>, vector<1x32xf32>
    %6 = vector.broadcast %5 : vector<1x32xf32> to vector<100x32xf32>
    %7 = arith.addf %4, %6 : vector<100x32xf32>
    %cst_8 = arith.constant 0.000000e+00 : f32
    %8 = vector.broadcast %cst_8 : f32 to vector<100x32xf32>
    %9 = arith.subf %8, %7 : vector<100x32xf32>
    %10 = math.exp %9 : vector<100x32xf32>
    %cst_9 = arith.constant 1.000000e+00 : f32
    %11 = vector.broadcast %cst_9 : f32 to vector<100x32xf32>
    %12 = arith.addf %11, %10 : vector<100x32xf32>
    %cst_10 = arith.constant 1.000000e+00 : f32
    %13 = vector.broadcast %cst_10 : f32 to vector<100x32xf32>
    %14 = arith.divf %13, %12 : vector<100x32xf32>
    %15 = arith.mulf %7, %14 : vector<100x32xf32>
    %16 = arith.truncf %15 : vector<100x32xf32> to vector<100x32xbf16>
    %17 = vector.shape_cast %16 : vector<100x32xbf16> to vector<10x10x32xbf16>
    %18 = vector.extract_strided_slice %17 {offsets = [0, 1, 0], sizes = [10, 8, 32], strides = [1, 1, 1]} : vector<10x10x32xbf16> to vector<10x8x32xbf16>
    %19 = arith.extf %18 : vector<10x8x32xbf16> to vector<10x8x32xf32>
    %20 = vector.extract_strided_slice %17 {offsets = [0, 0, 0], sizes = [10, 8, 32], strides = [1, 1, 1]} : vector<10x10x32xbf16> to vector<10x8x32xbf16>
    %21 = arith.extf %20 : vector<10x8x32xbf16> to vector<10x8x32xf32>
    %22 = vector.extract_strided_slice %17 {offsets = [0, 2, 0], sizes = [10, 8, 32], strides = [1, 1, 1]} : vector<10x10x32xbf16> to vector<10x8x32xbf16>
    %23 = arith.extf %22 : vector<10x8x32xbf16> to vector<10x8x32xf32>
    %cst_11 = arith.constant 7.500000e-01 : f32
    %24 = vector.broadcast %cst_11 : f32 to vector<10x8x32xf32>
    %25 = arith.mulf %24, %19 : vector<10x8x32xf32>
    %cst_12 = arith.constant 2.500000e-01 : f32
    %26 = vector.broadcast %cst_12 : f32 to vector<10x8x32xf32>
    %27 = arith.mulf %26, %21 : vector<10x8x32xf32>
    %28 = arith.addf %25, %27 : vector<10x8x32xf32>
    %cst_13 = arith.constant 7.500000e-01 : f32
    %29 = vector.broadcast %cst_13 : f32 to vector<10x8x32xf32>
    %30 = arith.mulf %29, %19 : vector<10x8x32xf32>
    %cst_14 = arith.constant 2.500000e-01 : f32
    %31 = vector.broadcast %cst_14 : f32 to vector<10x8x32xf32>
    %32 = arith.mulf %31, %23 : vector<10x8x32xf32>
    %33 = arith.addf %30, %32 : vector<10x8x32xf32>
    %34 = vector.shape_cast %28 : vector<10x8x32xf32> to vector<10x8x1x32xf32>
    %35 = vector.shape_cast %33 : vector<10x8x32xf32> to vector<10x8x1x32xf32>
    %36 = tpu.concatenate %34, %35 in 2 : vector<10x8x1x32xf32>, vector<10x8x1x32xf32> -> vector<10x8x2x32xf32>
    %37 = vector.shape_cast %36 : vector<10x8x2x32xf32> to vector<10x16x32xf32>
    %38 = vector.extract_strided_slice %37 {offsets = [1, 0, 0], sizes = [8, 16, 32], strides = [1, 1, 1]} : vector<10x16x32xf32> to vector<8x16x32xf32>
    %39 = vector.extract_strided_slice %37 {offsets = [0, 0, 0], sizes = [8, 16, 32], strides = [1, 1, 1]} : vector<10x16x32xf32> to vector<8x16x32xf32>
    %40 = vector.extract_strided_slice %37 {offsets = [2, 0, 0], sizes = [8, 16, 32], strides = [1, 1, 1]} : vector<10x16x32xf32> to vector<8x16x32xf32>
    %cst_15 = arith.constant 7.500000e-01 : f32
    %41 = vector.broadcast %cst_15 : f32 to vector<8x16x32xf32>
    %42 = arith.mulf %41, %38 : vector<8x16x32xf32>
    %cst_16 = arith.constant 2.500000e-01 : f32
    %43 = vector.broadcast %cst_16 : f32 to vector<8x16x32xf32>
    %44 = arith.mulf %43, %39 : vector<8x16x32xf32>
    %45 = arith.addf %42, %44 : vector<8x16x32xf32>
    %cst_17 = arith.constant 7.500000e-01 : f32
    %46 = vector.broadcast %cst_17 : f32 to vector<8x16x32xf32>
    %47 = arith.mulf %46, %38 : vector<8x16x32xf32>
    %cst_18 = arith.constant 2.500000e-01 : f32
    %48 = vector.broadcast %cst_18 : f32 to vector<8x16x32xf32>
    %49 = arith.mulf %48, %40 : vector<8x16x32xf32>
    %50 = arith.addf %47, %49 : vector<8x16x32xf32>
    %51 = vector.shape_cast %45 : vector<8x16x32xf32> to vector<8x1x16x32xf32>
    %52 = vector.shape_cast %50 : vector<8x16x32xf32> to vector<8x1x16x32xf32>
    %53 = tpu.concatenate %51, %52 in 1 : vector<8x1x16x32xf32>, vector<8x1x16x32xf32> -> vector<8x2x16x32xf32>
    %54 = vector.shape_cast %53 : vector<8x2x16x32xf32> to vector<16x16x32xf32>
    %55 = arith.truncf %54 : vector<16x16x32xf32> to vector<16x16x32xbf16>
    %56 = vector.shape_cast %55 : vector<16x16x32xbf16> to vector<256x32xbf16>
    %c0_19 = arith.constant 0 : index
    %c0_20 = arith.constant 0 : index
    %c0_21 = arith.constant 0 : index
    %c0_22 = arith.constant 0 : index
    %57 = vector.load %arg3[%c0_19, %c0_20, %c0_21, %c0_22] : memref<1x16x16x32xbf16, #tpu.memory_space<vmem>>, vector<1x16x16x32xbf16>
    %58 = vector.shape_cast %57 : vector<1x16x16x32xbf16> to vector<16x16x32xbf16>
    %59 = vector.shape_cast %58 : vector<16x16x32xbf16> to vector<256x32xbf16>
    %c0_23 = arith.constant 0 : index
    %c0_24 = arith.constant 0 : index
    %60 = vector.load %arg6[%c0_23, %c0_24] : memref<32x8xbf16, #tpu.memory_space<vmem>>, vector<32x8xbf16>
    %cst_25 = arith.constant dense<0.000000e+00> : vector<256x8xf32>
    %61 = tpu.matmul %59, %60, %cst_25 {dimension_numbers = #tpu.dot_dimension_numbers<[1], [0], [0], [1], [0, 0, 1, 1], [], []>} : vector<256x32xbf16>, vector<32x8xbf16>, vector<256x8xf32> -> vector<256x8xf32>
    %c0_26 = arith.constant 0 : index
    %c0_27 = arith.constant 0 : index
    %62 = vector.load %arg7[%c0_26, %c0_27] : memref<1x8xf32, #tpu.memory_space<vmem>>, vector<1x8xf32>
    %63 = vector.broadcast %62 : vector<1x8xf32> to vector<256x8xf32>
    %64 = arith.addf %61, %63 : vector<256x8xf32>
    %cst_28 = arith.constant 0.000000e+00 : f32
    %65 = vector.broadcast %cst_28 : f32 to vector<256x8xf32>
    %66 = arith.subf %65, %64 : vector<256x8xf32>
    %67 = math.exp %66 : vector<256x8xf32>
    %cst_29 = arith.constant 1.000000e+00 : f32
    %68 = vector.broadcast %cst_29 : f32 to vector<256x8xf32>
    %69 = arith.addf %68, %67 : vector<256x8xf32>
    %cst_30 = arith.constant 1.000000e+00 : f32
    %70 = vector.broadcast %cst_30 : f32 to vector<256x8xf32>
    %71 = arith.divf %70, %69 : vector<256x8xf32>
    %72 = arith.mulf %64, %71 : vector<256x8xf32>
    %73 = arith.truncf %72 : vector<256x8xf32> to vector<256x8xbf16>
    %c0_31 = arith.constant 0 : index
    %c0_32 = arith.constant 0 : index
    %74 = vector.load %arg8[%c0_31, %c0_32] : memref<32x8xbf16, #tpu.memory_space<vmem>>, vector<32x8xbf16>
    %cst_33 = arith.constant dense<0.000000e+00> : vector<256x8xf32>
    %75 = tpu.matmul %56, %74, %cst_33 {dimension_numbers = #tpu.dot_dimension_numbers<[1], [0], [0], [1], [0, 0, 1, 1], [], []>} : vector<256x32xbf16>, vector<32x8xbf16>, vector<256x8xf32> -> vector<256x8xf32>
    %c0_34 = arith.constant 0 : index
    %c0_35 = arith.constant 0 : index
    %76 = vector.load %arg9[%c0_34, %c0_35] : memref<1x8xf32, #tpu.memory_space<vmem>>, vector<1x8xf32>
    %77 = vector.broadcast %76 : vector<1x8xf32> to vector<256x8xf32>
    %78 = arith.addf %75, %77 : vector<256x8xf32>
    %cst_36 = arith.constant 0.000000e+00 : f32
    %79 = vector.broadcast %cst_36 : f32 to vector<256x8xf32>
    %80 = arith.subf %79, %78 : vector<256x8xf32>
    %81 = math.exp %80 : vector<256x8xf32>
    %cst_37 = arith.constant 1.000000e+00 : f32
    %82 = vector.broadcast %cst_37 : f32 to vector<256x8xf32>
    %83 = arith.addf %82, %81 : vector<256x8xf32>
    %cst_38 = arith.constant 1.000000e+00 : f32
    %84 = vector.broadcast %cst_38 : f32 to vector<256x8xf32>
    %85 = arith.divf %84, %83 : vector<256x8xf32>
    %86 = arith.mulf %78, %85 : vector<256x8xf32>
    %87 = arith.truncf %86 : vector<256x8xf32> to vector<256x8xbf16>
    %c0_39 = arith.constant 0 : index
    %c0_40 = arith.constant 0 : index
    %88 = vector.load %arg10[%c0_39, %c0_40] : memref<8x2xbf16, #tpu.memory_space<vmem>>, vector<8x2xbf16>
    %cst_41 = arith.constant dense<0.000000e+00> : vector<256x2xf32>
    %89 = tpu.matmul %73, %88, %cst_41 {dimension_numbers = #tpu.dot_dimension_numbers<[1], [0], [0], [1], [0, 0, 1, 1], [], []>} : vector<256x8xbf16>, vector<8x2xbf16>, vector<256x2xf32> -> vector<256x2xf32>
    %c0_42 = arith.constant 0 : index
    %c0_43 = arith.constant 0 : index
    %90 = vector.load %arg11[%c0_42, %c0_43] : memref<8x2xbf16, #tpu.memory_space<vmem>>, vector<8x2xbf16>
    %cst_44 = arith.constant dense<0.000000e+00> : vector<256x2xf32>
    %91 = tpu.matmul %87, %90, %cst_44 {dimension_numbers = #tpu.dot_dimension_numbers<[1], [0], [0], [1], [0, 0, 1, 1], [], []>} : vector<256x8xbf16>, vector<8x2xbf16>, vector<256x2xf32> -> vector<256x2xf32>
    %92 = arith.addf %89, %91 : vector<256x2xf32>
    %c0_45 = arith.constant 0 : index
    %c0_46 = arith.constant 0 : index
    %93 = vector.load %arg12[%c0_45, %c0_46] : memref<1x2xf32, #tpu.memory_space<vmem>>, vector<1x2xf32>
    %94 = vector.broadcast %93 : vector<1x2xf32> to vector<256x2xf32>
    %95 = arith.addf %92, %94 : vector<256x2xf32>
    %96 = vector.extract_strided_slice %95 {offsets = [0, 1], sizes = [256, 1], strides = [1, 1]} : vector<256x2xf32> to vector<256x1xf32>
    %97 = vector.extract_strided_slice %95 {offsets = [0, 0], sizes = [256, 1], strides = [1, 1]} : vector<256x2xf32> to vector<256x1xf32>
    %98 = arith.subf %96, %97 : vector<256x1xf32>
    %99 = math.exp %98 : vector<256x1xf32>
    %cst_47 = arith.constant 1.000000e+00 : f32
    %100 = vector.broadcast %cst_47 : f32 to vector<256x1xf32>
    %101 = arith.addf %100, %99 : vector<256x1xf32>
    %cst_48 = arith.constant 1.000000e+00 : f32
    %102 = vector.broadcast %cst_48 : f32 to vector<256x1xf32>
    %103 = arith.divf %102, %101 : vector<256x1xf32>
    %104 = arith.extf %59 : vector<256x32xbf16> to vector<256x32xf32>
    %105 = vector.broadcast %103 : vector<256x1xf32> to vector<256x32xf32>
    %106 = arith.mulf %104, %105 : vector<256x32xf32>
    %107 = arith.extf %56 : vector<256x32xbf16> to vector<256x32xf32>
    %cst_49 = arith.constant 1.000000e+00 : f32
    %108 = vector.broadcast %cst_49 : f32 to vector<256x1xf32>
    %109 = arith.subf %108, %103 : vector<256x1xf32>
    %110 = vector.broadcast %109 : vector<256x1xf32> to vector<256x32xf32>
    %111 = arith.mulf %107, %110 : vector<256x32xf32>
    %112 = arith.addf %106, %111 : vector<256x32xf32>
    %113 = vector.shape_cast %112 : vector<256x32xf32> to vector<16x16x32xf32>
    %114 = arith.truncf %113 : vector<16x16x32xf32> to vector<16x16x32xbf16>
    %c0_50 = arith.constant 0 : index
    %c0_51 = arith.constant 0 : index
    %c0_52 = arith.constant 0 : index
    %c0_53 = arith.constant 0 : index
    %115 = vector.load %arg13[%c0_50, %c0_51, %c0_52, %c0_53] : memref<1x16x16x32xbf16, #tpu.memory_space<vmem>>, vector<1x16x16x32xbf16>
    %116 = vector.shape_cast %115 : vector<1x16x16x32xbf16> to vector<16x16x32xbf16>
    %117 = vector.shape_cast %114 : vector<16x16x32xbf16> to vector<1x16x16x32xbf16>
    tpu.vector_store %arg13[%c0_50, %c0_51, %c0_52, %c0_53], %117 {strides = array<i32>} : memref<1x16x16x32xbf16, #tpu.memory_space<vmem>>, vector<1x16x16x32xbf16>,
    return
  }
  func.func @transform_0(%arg0: i32, %arg1: i32) -> (i32, i32, i32, i32, i32) {
    %c0_i32 = arith.constant 0 : i32
    %c0_i32_0 = arith.constant 0 : i32
    %c0_i32_1 = arith.constant 0 : i32
    %c0_i32_2 = arith.constant 0 : i32
    return %arg0, %arg1, %c0_i32, %c0_i32_0, %c0_i32_1 : i32, i32, i32, i32, i32
  }
  func.func @transform_1(%arg0: i32, %arg1: i32) -> (i32, i32, i32, i32) {
    %c0_i32 = arith.constant 0 : i32
    %c0_i32_0 = arith.constant 0 : i32
    %c0_i32_1 = arith.constant 0 : i32
    return %arg0, %arg1, %c0_i32, %c0_i32_0 : i32, i32, i32, i32
  }
  func.func @transform_2(%arg0: i32, %arg1: i32) -> (i32, i32) {
    %c0_i32 = arith.constant 0 : i32
    %c0_i32_0 = arith.constant 0 : i32
    %c0_i32_1 = arith.constant 0 : i32
    return %c0_i32, %c0_i32_0 : i32, i32
  }
  func.func @transform_3(%arg0: i32, %arg1: i32) -> (i32, i32) {
    %c0_i32 = arith.constant 0 : i32
    %c0_i32_0 = arith.constant 0 : i32
    %c0_i32_1 = arith.constant 0 : i32
    return %c0_i32, %c0_i32_0 : i32, i32
  }
  func.func @transform_4(%arg0: i32, %arg1: i32) -> (i32, i32) {
    %c0_i32 = arith.constant 0 : i32
    %c0_i32_0 = arith.constant 0 : i32
    %c0_i32_1 = arith.constant 0 : i32
    return %c0_i32, %c0_i32_0 : i32, i32
  }
  func.func @transform_5(%arg0: i32, %arg1: i32) -> (i32, i32) {
    %c0_i32 = arith.constant 0 : i32
    %c0_i32_0 = arith.constant 0 : i32
    %c0_i32_1 = arith.constant 0 : i32
    return %c0_i32, %c0_i32_0 : i32, i32
  }
  func.func @transform_6(%arg0: i32, %arg1: i32) -> (i32, i32) {
    %c0_i32 = arith.constant 0 : i32
    %c0_i32_0 = arith.constant 0 : i32
    %c0_i32_1 = arith.constant 0 : i32
    return %c0_i32, %c0_i32_0 : i32, i32
  }
  func.func @transform_7(%arg0: i32, %arg1: i32) -> (i32, i32) {
    %c0_i32 = arith.constant 0 : i32
    %c0_i32_0 = arith.constant 0 : i32
    %c0_i32_1 = arith.constant 0 : i32
    return %c0_i32, %c0_i32_0 : i32, i32
  }
  func.func @transform_8(%arg0: i32, %arg1: i32) -> (i32, i32) {
    %c0_i32 = arith.constant 0 : i32
    %c0_i32_0 = arith.constant 0 : i32
    %c0_i32_1 = arith.constant 0 : i32
    return %c0_i32, %c0_i32_0 : i32, i32
  }
  func.func @transform_9(%arg0: i32, %arg1: i32) -> (i32, i32) {
    %c0_i32 = arith.constant 0 : i32
    %c0_i32_0 = arith.constant 0 : i32
    %c0_i32_1 = arith.constant 0 : i32
    return %c0_i32, %c0_i32_0 : i32, i32
  }
  func.func @transform_10(%arg0: i32, %arg1: i32) -> (i32, i32) {
    %c0_i32 = arith.constant 0 : i32
    %c0_i32_0 = arith.constant 0 : i32
    %c0_i32_1 = arith.constant 0 : i32
    return %c0_i32, %c0_i32_0 : i32, i32
  }
  func.func @transform_11(%arg0: i32, %arg1: i32) -> (i32, i32, i32, i32) {
    %c0_i32 = arith.constant 0 : i32
    %c0_i32_0 = arith.constant 0 : i32
    %c0_i32_1 = arith.constant 0 : i32
    return %arg0, %arg1, %c0_i32, %c0_i32_0 : i32, i32, i32, i32
  }
}

</mosaic_0001>

<llo_original>
// kernel: tpu_custom_call.1
$region0: #{tpu_custom_call.1}
  #allocation0 [shape = 'u32[]', space=smem, size = 0x4, offset = 0x4, fixed_abs, tag = 'smem constant byte address 0x4 - core index']
  #allocation1 [shape = 'u32[144,128]{1,0:T(1,128)}', space=vmem, size = 0x12000, scoped, tag = 'internal scratch']
  %s0 = inlined_call_operand.vmem [shape: bf16[2,1,10,10,64], index: 0, kind: input, shape index: {}]
  %s1 = inlined_call_operand.vmem [shape: bf16[2,16,16,32], index: 1, kind: input, shape index: {}]
  %s2 = inlined_call_operand.vmem [shape: bf16[64,32], index: 2, kind: input, shape index: {}]
  %s3 = inlined_call_operand.vmem [shape: f32[1,32], index: 3, kind: input, shape index: {}]
  %s4 = inlined_call_operand.vmem [shape: bf16[32,8], index: 4, kind: input, shape index: {}]
  %s5 = inlined_call_operand.vmem [shape: f32[1,8], index: 5, kind: input, shape index: {}]
  %s6 = inlined_call_operand.vmem [shape: bf16[32,8], index: 6, kind: input, shape index: {}]
  %s7 = inlined_call_operand.vmem [shape: f32[1,8], index: 7, kind: input, shape index: {}]
  %s8 = inlined_call_operand.vmem [shape: bf16[8,2], index: 8, kind: input, shape index: {}]
  %s9 = inlined_call_operand.vmem [shape: bf16[8,2], index: 9, kind: input, shape index: {}]
  %s10 = inlined_call_operand.vmem [shape: f32[1,2], index: 10, kind: input, shape index: {}]
  %s11 = inlined_call_operand.hbm [shape: bf16[2,16,16,32], index: 11, kind: output, shape index: {}]
  %s12 = sld [smem:[#allocation0]]
  $region77: #{tpu_custom_call.1} parent=0
    _
  %s14 = ssub.s32 1, %s12
  %s15 = scalar_select 0, %s14, %s12
  $region1: #{tpu_custom_call.1} parent=0
    #allocation2 [shape = 'u8[131072]{0}', space=vmem, size = 0x20000, scoped, tag = 'output window, operand 0']
    #allocation3 [shape = 's32[2]{0}', space=sflag, size = 0x8, scoped, tag = 'scoped memory for tpu_custom_call.1']
    %16 = vsyncpa [#allocation3], 0
    %s17 = scalar_lea.sflag [#allocation3], 1
    %18 = vsyncpa %s17, 0
    loop: start=0, step=1, limit=4
    $region2: #{tpu_custom_call.1} parent=1 // loop_pre_header
      _
    $region3: #{tpu_custom_call.1} parent=1 // loop_header
      %s20 = sphi 0, %s24
      %p21 = scmp.ge.s32.totalorder %s20, 4
      %s27 = sphi 0, %s39
      %s28 = sphi 0, %s35
      %s29 = sphi 0, %s27
      %s30 = sphi 0, %s28
      %s31 = sphi 0, %s29
      %s32 = sphi 0, %s30
      %s44 = sphi 0, %s46
      %s47 = sphi 0, %s44
      %s48 = sphi 0, %s47
      %s64 = sphi 0, %s48
      %s72 = sphi 0, %s74
      %s75 = sphi 0, %s72
      %s76 = sphi 0, %s75
      %s92 = sphi 0, %s76
      %s96 = sphi 0, %s96
      %s98 = sphi 0, %s96
      %s99 = sphi 0, %s98
      %s113 = sphi 0, %s99
      %s117 = sphi 0, %s117
      %s119 = sphi 0, %s117
      %s120 = sphi 0, %s119
      %s134 = sphi 0, %s120
      %s138 = sphi 0, %s138
      %s140 = sphi 0, %s138
      %s141 = sphi 0, %s140
      %s155 = sphi 0, %s141
      %s159 = sphi 0, %s159
      %s161 = sphi 0, %s159
      %s162 = sphi 0, %s161
      %s176 = sphi 0, %s162
      %s180 = sphi 0, %s180
      %s182 = sphi 0, %s180
      %s183 = sphi 0, %s182
      %s197 = sphi 0, %s183
      %s201 = sphi 0, %s201
      %s203 = sphi 0, %s201
      %s204 = sphi 0, %s203
      %s218 = sphi 0, %s204
      %s222 = sphi 0, %s222
      %s224 = sphi 0, %s222
      %s225 = sphi 0, %s224
      %s239 = sphi 0, %s225
      %s243 = sphi 0, %s243
      %s245 = sphi 0, %s243
      %s246 = sphi 0, %s245
      %s260 = sphi 0, %s246
      %s264 = sphi 0, %s264
      %s266 = sphi 0, %s264
      %s267 = sphi 0, %s266
      %s281 = sphi 0, %s267
      %s289 = sphi 0, %s291
      %s292 = sphi 0, %s289
      %s293 = sphi 0, %s292
      %s309 = sphi 0, %s293
    $region4: #{tpu_custom_call.1} parent=1 // loop_header_branch
      %23 = sbr.rel (%p21) target = $region8
    $region5: #{tpu_custom_call.1} parent=1 // loop_body
      %s25 = ssub.s32 %s20, 1
      %s26 = ssub.s32 %s20, 2
      %s33 = sadd.s32 1, %s28
      %p34 = scmp.ge.s32.totalorder %s33, 1
      %s35 = scalar_select %p34, 0, %s33
      %s36 = sadd.s32 1, %s27
      %s37 = scalar_select %p34, %s36, %s27
      %p38 = scmp.ge.s32.totalorder %s37, 2
      %s39 = scalar_select %p38, 0, %s37
      %s40 = ssub.s32 %s27, %s39
      %s41 = ssub.s32 %s28, %s35
      %s42 = sor.u32 %s40, %s41
      %p43 = scmp.eq.s32.totalorder %s42, 0
      %s45 = sadd.s32 %s44, 1
      %s46 = scalar_select %p43, %s44, %s45
      %p49 = pneg %p43
      %p50 = scmp.eq.s32.totalorder %s20, 1
      %p51 = por %p49, %p50
      %p52 = scmp.ne.s32.totalorder %s44, %s47
      %p53 = scmp.eq.s32.totalorder %s20, 0
      %p54 = por %p52, %p53
      %p55 = scmp.ne.s32.totalorder %s44, %s47
      %p56 = scmp.eq.s32.totalorder %s25, 1
      %p57 = por %p55, %p56
      %p58 = scmp.ne.s32.totalorder %s47, %s48
      %p59 = scmp.eq.s32.totalorder %s25, 0
      %p60 = por %p58, %p59
      %p61 = scmp.ne.s32.totalorder %s47, %s48
      %p62 = scmp.eq.s32.totalorder %s26, 1
      %p63 = por %p61, %p62
      %p65 = scmp.ne.s32.totalorder %s48, %s64
      %p66 = scmp.eq.s32.totalorder %s26, 0
      %p67 = por %p65, %p66
      %s68 = ssub.s32 %s27, %s39
      %s69 = ssub.s32 %s28, %s35
      %s70 = sor.u32 %s68, %s69
      %p71 = scmp.eq.s32.totalorder %s70, 0
      %s73 = sadd.s32 %s72, 1
      %s74 = scalar_select %p71, %s72, %s73
      %p77 = pneg %p71
      %p78 = scmp.eq.s32.totalorder %s20, 1
      %p79 = por %p77, %p78
      %p80 = scmp.ne.s32.totalorder %s72, %s75
      %p81 = scmp.eq.s32.totalorder %s20, 0
      %p82 = por %p80, %p81
      %p83 = scmp.ne.s32.totalorder %s72, %s75
      %p84 = scmp.eq.s32.totalorder %s25, 1
      %p85 = por %p83, %p84
      %p86 = scmp.ne.s32.totalorder %s75, %s76
      %p87 = scmp.eq.s32.totalorder %s25, 0
      %p88 = por %p86, %p87
      %p89 = scmp.ne.s32.totalorder %s75, %s76
      %p90 = scmp.eq.s32.totalorder %s26, 1
      %p91 = por %p89, %p90
      %p93 = scmp.ne.s32.totalorder %s76, %s92
      %p94 = scmp.eq.s32.totalorder %s26, 0
      %p95 = por %p93, %p94
      %s97 = sadd.s32 %s96, 1
      %p100 = scmp.eq.s32.totalorder %s20, 1
      %p101 = scmp.ne.s32.totalorder %s96, %s98
      %p102 = scmp.eq.s32.totalorder %s20, 0
      %p103 = por %p101, %p102
      %p104 = scmp.ne.s32.totalorder %s96, %s98
      %p105 = scmp.eq.s32.totalorder %s25, 1
      %p106 = por %p104, %p105
      %p107 = scmp.ne.s32.totalorder %s98, %s99
      %p108 = scmp.eq.s32.totalorder %s25, 0
      %p109 = por %p107, %p108
      %p110 = scmp.ne.s32.totalorder %s98, %s99
      %p111 = scmp.eq.s32.totalorder %s26, 1
      %p112 = por %p110, %p111
      %p114 = scmp.ne.s32.totalorder %s99, %s113
      %p115 = scmp.eq.s32.totalorder %s26, 0
      %p116 = por %p114, %p115
      %s118 = sadd.s32 %s117, 1
      %p121 = scmp.eq.s32.totalorder %s20, 1
      %p122 = scmp.ne.s32.totalorder %s117, %s119
      %p123 = scmp.eq.s32.totalorder %s20, 0
      %p124 = por %p122, %p123
      %p125 = scmp.ne.s32.totalorder %s117, %s119
      %p126 = scmp.eq.s32.totalorder %s25, 1
      %p127 = por %p125, %p126
      %p128 = scmp.ne.s32.totalorder %s119, %s120
      %p129 = scmp.eq.s32.totalorder %s25, 0
      %p130 = por %p128, %p129
      %p131 = scmp.ne.s32.totalorder %s119, %s120
      %p132 = scmp.eq.s32.totalorder %s26, 1
      %p133 = por %p131, %p132
      %p135 = scmp.ne.s32.totalorder %s120, %s134
      %p136 = scmp.eq.s32.totalorder %s26, 0
      %p137 = por %p135, %p136
      %s139 = sadd.s32 %s138, 1
      %p142 = scmp.eq.s32.totalorder %s20, 1
      %p143 = scmp.ne.s32.totalorder %s138, %s140
      %p144 = scmp.eq.s32.totalorder %s20, 0
      %p145 = por %p143, %p144
      %p146 = scmp.ne.s32.totalorder %s138, %s140
      %p147 = scmp.eq.s32.totalorder %s25, 1
      %p148 = por %p146, %p147
      %p149 = scmp.ne.s32.totalorder %s140, %s141
      %p150 = scmp.eq.s32.totalorder %s25, 0
      %p151 = por %p149, %p150
      %p152 = scmp.ne.s32.totalorder %s140, %s141
      %p153 = scmp.eq.s32.totalorder %s26, 1
      %p154 = por %p152, %p153
      %p156 = scmp.ne.s32.totalorder %s141, %s155
      %p157 = scmp.eq.s32.totalorder %s26, 0
      %p158 = por %p156, %p157
      %s160 = sadd.s32 %s159, 1
      %p163 = scmp.eq.s32.totalorder %s20, 1
      %p164 = scmp.ne.s32.totalorder %s159, %s161
      %p165 = scmp.eq.s32.totalorder %s20, 0
      %p166 = por %p164, %p165
      %p167 = scmp.ne.s32.totalorder %s159, %s161
      %p168 = scmp.eq.s32.totalorder %s25, 1
      %p169 = por %p167, %p168
      %p170 = scmp.ne.s32.totalorder %s161, %s162
      %p171 = scmp.eq.s32.totalorder %s25, 0
      %p172 = por %p170, %p171
      %p173 = scmp.ne.s32.totalorder %s161, %s162
      %p174 = scmp.eq.s32.totalorder %s26, 1
      %p175 = por %p173, %p174
      %p177 = scmp.ne.s32.totalorder %s162, %s176
      %p178 = scmp.eq.s32.totalorder %s26, 0
      %p179 = por %p177, %p178
      %s181 = sadd.s32 %s180, 1
      %p184 = scmp.eq.s32.totalorder %s20, 1
      %p185 = scmp.ne.s32.totalorder %s180, %s182
      %p186 = scmp.eq.s32.totalorder %s20, 0
      %p187 = por %p185, %p186
      %p188 = scmp.ne.s32.totalorder %s180, %s182
      %p189 = scmp.eq.s32.totalorder %s25, 1
      %p190 = por %p188, %p189
      %p191 = scmp.ne.s32.totalorder %s182, %s183
      %p192 = scmp.eq.s32.totalorder %s25, 0
      %p193 = por %p191, %p192
      %p194 = scmp.ne.s32.totalorder %s182, %s183
      %p195 = scmp.eq.s32.totalorder %s26, 1
      %p196 = por %p194, %p195
      %p198 = scmp.ne.s32.totalorder %s183, %s197
      %p199 = scmp.eq.s32.totalorder %s26, 0
      %p200 = por %p198, %p199
      %s202 = sadd.s32 %s201, 1
      %p205 = scmp.eq.s32.totalorder %s20, 1
      %p206 = scmp.ne.s32.totalorder %s201, %s203
      %p207 = scmp.eq.s32.totalorder %s20, 0
      %p208 = por %p206, %p207
      %p209 = scmp.ne.s32.totalorder %s201, %s203
      %p210 = scmp.eq.s32.totalorder %s25, 1
      %p211 = por %p209, %p210
      %p212 = scmp.ne.s32.totalorder %s203, %s204
      %p213 = scmp.eq.s32.totalorder %s25, 0
      %p214 = por %p212, %p213
      %p215 = scmp.ne.s32.totalorder %s203, %s204
      %p216 = scmp.eq.s32.totalorder %s26, 1
      %p217 = por %p215, %p216
      %p219 = scmp.ne.s32.totalorder %s204, %s218
      %p220 = scmp.eq.s32.totalorder %s26, 0
      %p221 = por %p219, %p220
      %s223 = sadd.s32 %s222, 1
      %p226 = scmp.eq.s32.totalorder %s20, 1
      %p227 = scmp.ne.s32.totalorder %s222, %s224
      %p228 = scmp.eq.s32.totalorder %s20, 0
      %p229 = por %p227, %p228
      %p230 = scmp.ne.s32.totalorder %s222, %s224
      %p231 = scmp.eq.s32.totalorder %s25, 1
      %p232 = por %p230, %p231
      %p233 = scmp.ne.s32.totalorder %s224, %s225
      %p234 = scmp.eq.s32.totalorder %s25, 0
      %p235 = por %p233, %p234
      %p236 = scmp.ne.s32.totalorder %s224, %s225
      %p237 = scmp.eq.s32.totalorder %s26, 1
      %p238 = por %p236, %p237
      %p240 = scmp.ne.s32.totalorder %s225, %s239
      %p241 = scmp.eq.s32.totalorder %s26, 0
      %p242 = por %p240, %p241
      %s244 = sadd.s32 %s243, 1
      %p247 = scmp.eq.s32.totalorder %s20, 1
      %p248 = scmp.ne.s32.totalorder %s243, %s245
      %p249 = scmp.eq.s32.totalorder %s20, 0
      %p250 = por %p248, %p249
      %p251 = scmp.ne.s32.totalorder %s243, %s245
      %p252 = scmp.eq.s32.totalorder %s25, 1
      %p253 = por %p251, %p252
      %p254 = scmp.ne.s32.totalorder %s245, %s246
      %p255 = scmp.eq.s32.totalorder %s25, 0
      %p256 = por %p254, %p255
      %p257 = scmp.ne.s32.totalorder %s245, %s246
      %p258 = scmp.eq.s32.totalorder %s26, 1
      %p259 = por %p257, %p258
      %p261 = scmp.ne.s32.totalorder %s246, %s260
      %p262 = scmp.eq.s32.totalorder %s26, 0
      %p263 = por %p261, %p262
      %s265 = sadd.s32 %s264, 1
      %p268 = scmp.eq.s32.totalorder %s20, 1
      %p269 = scmp.ne.s32.totalorder %s264, %s266
      %p270 = scmp.eq.s32.totalorder %s20, 0
      %p271 = por %p269, %p270
      %p272 = scmp.ne.s32.totalorder %s264, %s266
      %p273 = scmp.eq.s32.totalorder %s25, 1
      %p274 = por %p272, %p273
      %p275 = scmp.ne.s32.totalorder %s266, %s267
      %p276 = scmp.eq.s32.totalorder %s25, 0
      %p277 = por %p275, %p276
      %p278 = scmp.ne.s32.totalorder %s266, %s267
      %p279 = scmp.eq.s32.totalorder %s26, 1
      %p280 = por %p278, %p279
      %p282 = scmp.ne.s32.totalorder %s267, %s281
      %p283 = scmp.eq.s32.totalorder %s26, 0
      %p284 = por %p282, %p283
      %s285 = ssub.s32 %s27, %s39
      %s286 = ssub.s32 %s28, %s35
      %s287 = sor.u32 %s285, %s286
      %p288 = scmp.eq.s32.totalorder %s287, 0
      %s290 = sadd.s32 %s289, 1
      %s291 = scalar_select %p288, %s289, %s290
      %p294 = pneg %p288
      %p295 = scmp.eq.s32.totalorder %s20, 1
      %p296 = por %p294, %p295
      %p297 = scmp.ne.s32.totalorder %s289, %s292
      %p298 = scmp.eq.s32.totalorder %s20, 0
      %p299 = por %p297, %p298
      %p300 = scmp.ne.s32.totalorder %s289, %s292
      %p301 = scmp.eq.s32.totalorder %s25, 1
      %p302 = por %p300, %p301
      %p303 = scmp.ne.s32.totalorder %s292, %s293
      %p304 = scmp.eq.s32.totalorder %s25, 0
      %p305 = por %p303, %p304
      %p306 = scmp.ne.s32.totalorder %s292, %s293
      %p307 = scmp.eq.s32.totalorder %s26, 1
      %p308 = por %p306, %p307
      %p310 = scmp.ne.s32.totalorder %s293, %s309
      %p311 = scmp.eq.s32.totalorder %s26, 0
      %p312 = por %p310, %p311
      %p313 = scmp.le.s32.totalorder 1, %s20
      %p314 = scmp.lt.s32.totalorder %s20, 3
      %p315 = pnand %p313, %p314
      %p316 = pneg %p315
      // Predicated region
      $region9: #{tpu_custom_call.1} parent=5 // pred_check
        _
      $region10: #{tpu_custom_call.1} parent=5 // pred_check_branch
        %318 = sbr.rel (%p315) target = $region12
      $region11: #{tpu_custom_call.1} parent=5 // pred_region
        %s319 = ssub.s32 %s20, 1
        // Predicated region
        $region13: #{tpu_custom_call.1} parent=11 // pred_check
          %p320 = pneg %p109
        $region14: #{tpu_custom_call.1} parent=11 // pred_check_branch
          %322 = sbr.rel (%p320) target = $region16
        $region15: #{tpu_custom_call.1} parent=11 // pred_region
          _
        $region16: #{tpu_custom_call.1} parent=11 // pred_fallthru
          _
        // Predicated region
        $region17: #{tpu_custom_call.1} parent=11 // pred_check
          %p323 = pneg %p130
        $region18: #{tpu_custom_call.1} parent=11 // pred_check_branch
          %325 = sbr.rel (%p323) target = $region20
        $region19: #{tpu_custom_call.1} parent=11 // pred_region
          _
        $region20: #{tpu_custom_call.1} parent=11 // pred_fallthru
          _
        // Predicated region
        $region21: #{tpu_custom_call.1} parent=11 // pred_check
          %p326 = pneg %p151
        $region22: #{tpu_custom_call.1} parent=11 // pred_check_branch
          %328 = sbr.rel (%p326) target = $region24
        $region23: #{tpu_custom_call.1} parent=11 // pred_region
          _
        $region24: #{tpu_custom_call.1} parent=11 // pred_fallthru
          _
        // Predicated region
        $region25: #{tpu_custom_call.1} parent=11 // pred_check
          %p329 = pneg %p172
        $region26: #{tpu_custom_call.1} parent=11 // pred_check_branch
          %331 = sbr.rel (%p329) target = $region28
        $region27: #{tpu_custom_call.1} parent=11 // pred_region
          _
        $region28: #{tpu_custom_call.1} parent=11 // pred_fallthru
          _
        // Predicated region
        $region29: #{tpu_custom_call.1} parent=11 // pred_check
          %p332 = pneg %p193
        $region30: #{tpu_custom_call.1} parent=11 // pred_check_branch
          %334 = sbr.rel (%p332) target = $region32
        $region31: #{tpu_custom_call.1} parent=11 // pred_region
          _
        $region32: #{tpu_custom_call.1} parent=11 // pred_fallthru
          _
        // Predicated region
        $region33: #{tpu_custom_call.1} parent=11 // pred_check
          %p335 = pneg %p214
        $region34: #{tpu_custom_call.1} parent=11 // pred_check_branch
          %337 = sbr.rel (%p335) target = $region36
        $region35: #{tpu_custom_call.1} parent=11 // pred_region
          _
        $region36: #{tpu_custom_call.1} parent=11 // pred_fallthru
          _
        // Predicated region
        $region37: #{tpu_custom_call.1} parent=11 // pred_check
          %p338 = pneg %p235
        $region38: #{tpu_custom_call.1} parent=11 // pred_check_branch
          %340 = sbr.rel (%p338) target = $region40
        $region39: #{tpu_custom_call.1} parent=11 // pred_region
          _
        $region40: #{tpu_custom_call.1} parent=11 // pred_fallthru
          _
        // Predicated region
        $region41: #{tpu_custom_call.1} parent=11 // pred_check
          %p341 = pneg %p256
        $region42: #{tpu_custom_call.1} parent=11 // pred_check_branch
          %343 = sbr.rel (%p341) target = $region44
        $region43: #{tpu_custom_call.1} parent=11 // pred_region
          _
        $region44: #{tpu_custom_call.1} parent=11 // pred_fallthru
          _
        // Predicated region
        $region45: #{tpu_custom_call.1} parent=11 // pred_check
          %p344 = pneg %p277
        $region46: #{tpu_custom_call.1} parent=11 // pred_check_branch
          %346 = sbr.rel (%p344) target = $region48
        $region47: #{tpu_custom_call.1} parent=11 // pred_region
          _
        $region48: #{tpu_custom_call.1} parent=11 // pred_fallthru
          _
      $region12: #{tpu_custom_call.1} parent=5 // pred_fallthru
        _
      %p347 = scmp.lt.s32.totalorder %s20, 2
      // Predicated region
      $region49: #{tpu_custom_call.1} parent=5 // pred_check
        %p348 = pneg %p347
      $region50: #{tpu_custom_call.1} parent=5 // pred_check_branch
        %350 = sbr.rel (%p348) target = $region52
      $region51: #{tpu_custom_call.1} parent=5 // pred_region
        // Predicated region
        $region53: #{tpu_custom_call.1} parent=51 // pred_check
          %p351 = pneg %p54
        $region54: #{tpu_custom_call.1} parent=51 // pred_check_branch
          %353 = sbr.rel (%p351) target = $region56
        $region55: #{tpu_custom_call.1} parent=51 // pred_region
          %p354 = scmp.lt.s32.totalorder %s27, 1
          %s355 = scalar_select %p354, %s27, 1
          %p356 = scmp.lt.s32.totalorder %s28, 0
          %s357 = scalar_select %p356, %s28, 0
          %s358 = smul.addr %s357, 20
          %s359 = smul.addr %s355, 20
          %s360 = sadd.s32 %s358, %s359
          %s361 = smul.addr %s360, 4
          %s362 = scalar_lea.vmem %s0, %s361
        $region56: #{tpu_custom_call.1} parent=51 // pred_fallthru
          _
        // Predicated region
        $region57: #{tpu_custom_call.1} parent=51 // pred_check
          %p363 = pneg %p82
        $region58: #{tpu_custom_call.1} parent=51 // pred_check_branch
          %365 = sbr.rel (%p363) target = $region60
        $region59: #{tpu_custom_call.1} parent=51 // pred_region
          %s366 = smul.u32 16, %s28
          %p367 = scmp.lt.s32.totalorder %s27, 1
          %s368 = scalar_select %p367, %s27, 1
          %p369 = scmp.lt.s32.totalorder %s366, 15
          %s370 = scalar_select %p369, %s366, 15
          %s371 = smul.addr %s370, 2
          %s372 = smul.addr %s368, 32
          %s373 = sadd.s32 %s371, %s372
          %s374 = smul.addr %s373, 4
          %s375 = scalar_lea.vmem %s1, %s374
          %s376 = smul.u32 16, %s28
        $region60: #{tpu_custom_call.1} parent=51 // pred_fallthru
          _
      $region52: #{tpu_custom_call.1} parent=5 // pred_fallthru
        _
      %p377 = scmp.le.s32.totalorder 1, %s20
      %p378 = scmp.lt.s32.totalorder %s20, 3
      %p379 = pnand %p377, %p378
      %p380 = pneg %p379
      // Predicated region
      $region61: #{tpu_custom_call.1} parent=5 // pred_check
        _
      $region62: #{tpu_custom_call.1} parent=5 // pred_check_branch
        %382 = sbr.rel (%p379) target = $region64
      $region63: #{tpu_custom_call.1} parent=5 // pred_region
        %s383 = ssub.s32 %s20, 1
        %p384 = scmp.lt.s32.totalorder %s29, 1
        %s385 = scalar_select %p384, %s29, 1
        %p386 = scmp.lt.s32.totalorder %s30, 0
        %s387 = scalar_select %p386, %s30, 0
        %s388 = smul.addr %s387, 20
        %s389 = smul.addr %s385, 20
        %s390 = sadd.s32 %s388, %s389
        %s391 = smul.addr %s390, 4
        %s392 = scalar_lea.vmem %s0, %s391
        %p393 = pneg %p60
        %p394 = pneg %p57
        %s395 = smul.u32 16, %s30
        %p396 = scmp.lt.s32.totalorder %s29, 1
        %s397 = scalar_select %p396, %s29, 1
        %p398 = scmp.lt.s32.totalorder %s395, 15
        %s399 = scalar_select %p398, %s395, 15
        %s400 = smul.addr %s399, 2
        %s401 = smul.addr %s397, 32
        %s402 = sadd.s32 %s400, %s401
        %s403 = smul.addr %s402, 4
        %s404 = scalar_lea.vmem %s1, %s403
        %p405 = pneg %p88
        %p406 = pneg %p85
        %p407 = pneg %p109
        %p408 = pneg %p106
        %p409 = pneg %p130
        %p410 = pneg %p127
        %p411 = pneg %p151
        %p412 = pneg %p148
        %p413 = pneg %p172
        %p414 = pneg %p169
        %p415 = pneg %p193
        %p416 = pneg %p190
        %p417 = pneg %p214
        %p418 = pneg %p211
        %p419 = pneg %p235
        %p420 = pneg %p232
        %p421 = pneg %p256
        %p422 = pneg %p253
        %p423 = pneg %p277
        %p424 = pneg %p274
        %p425 = pneg %p305
        %p426 = pneg %p302
        %s427 = sand.u32 %s292, 1
        %s428 = scalar_lea.sflag [#allocation3], %s427
        %s429 = sand.u32 %s292, 1
        %s430 = smul.addr %s429, 128
        %s431 = scalar_lea.vmem [#allocation2], %s430
        %p432 = scmp.lt.s32.totalorder %s29, 1
        %s433 = scalar_select %p432, %s29, 1
        %p434 = scmp.lt.s32.totalorder %s30, 0
        %s435 = scalar_select %p434, %s30, 0
        %s436 = smul.addr %s435, 20
        %s437 = smul.addr %s433, 20
        %s438 = sadd.s32 %s436, %s437
        %s439 = smul.addr %s438, 4
        %s440 = scalar_lea.vmem %s0, %s439
        %s441 = smul.u32 16, %s30
        %p442 = scmp.lt.s32.totalorder %s29, 1
        %s443 = scalar_select %p442, %s29, 1
        %p444 = scmp.lt.s32.totalorder %s441, 15
        %s445 = scalar_select %p444, %s441, 15
        %s446 = smul.addr %s445, 2
        %s447 = smul.addr %s443, 32
        %s448 = sadd.s32 %s446, %s447
        %s449 = smul.addr %s448, 4
        %s450 = scalar_lea.vmem %s1, %s449
        %s451 = smul.u32 16, %s30
        %s452 = smul.u32 16, %s30
        %v454 = vld [vmem:[%s440] sm:$0xf]
        %v455 = vld [vmem:[%s440 + $0x4] sm:$0x1]
        %v456 = vld [vmem:[%s440 + $0x8] sm:$0xf]
        %v457 = vld [vmem:[%s440 + $0xc] sm:$0x1]
        %v458 = vld [vmem:[%s440 + $0x10] sm:$0xf]
        %v459 = vld [vmem:[%s440 + $0x14] sm:$0x1]
        %v460 = vld [vmem:[%s440 + $0x18] sm:$0xf]
        %v461 = vld [vmem:[%s440 + $0x1c] sm:$0x1]
        %v462 = vld [vmem:[%s440 + $0x20] sm:$0xf]
        %v463 = vld [vmem:[%s440 + $0x24] sm:$0x1]
        %v464 = vld [vmem:[%s440 + $0x28] sm:$0xf]
        %v465 = vld [vmem:[%s440 + $0x2c] sm:$0x1]
        %v466 = vld [vmem:[%s440 + $0x30] sm:$0xf]
        %v467 = vld [vmem:[%s440 + $0x34] sm:$0x1]
        %v468 = vld [vmem:[%s440 + $0x38] sm:$0xf]
        %v469 = vld [vmem:[%s440 + $0x3c] sm:$0x1]
        %v470 = vld [vmem:[%s440 + $0x40] sm:$0xf]
        %v471 = vld [vmem:[%s440 + $0x44] sm:$0x1]
        %v472 = vld [vmem:[%s440 + $0x48] sm:$0xf]
        %v473 = vld [vmem:[%s440 + $0x4c] sm:$0x1]
        %v495 = vunpack.c.l.s4 1966171168
        %v496 = vunpack.c.0.s8 %v495
        %v497 = vlaneseq
        %v498 = vshrl.u32 %v497, 7
        %v499 = vsub.s32 %v496, %v498
        %v500 = vrot.slane %v454, %v499
        %v501 = vcombine.high %v500, %v500
        %v503 = vunpack.c.l.s4 1966171168
        %v504 = vunpack.c.0.s8 %v503
        %v505 = vlaneseq
        %v506 = vshrl.u32 %v505, 7
        %v507 = vsub.s32 %v504, %v506
        %v508 = vrot.slane %v500, %v507
        %v510 = vunpack.c.l.s4 1966171168
        %v511 = vunpack.c.0.s8 %v510
        %v512 = vlaneseq
        %v513 = vshrl.u32 %v512, 7
        %v514 = vsub.s32 %v511, %v513
        %v515 = vrot.slane %v501, %v514
        %v516 = vcombine.high %v508, %v508
        %v517 = vcombine.high %v515, %v515
        %v519 = vunpack.c.l.s4 1966171168
        %v520 = vunpack.c.0.s8 %v519
        %v521 = vlaneseq
        %v522 = vshrl.u32 %v521, 7
        %v523 = vsub.s32 %v520, %v522
        %v524 = vrot.slane %v455, %v523
        %v526 = vunpack.c.l.s4 1966171168
        %v527 = vunpack.c.0.s8 %v526
        %v528 = vlaneseq
        %v529 = vshrl.u32 %v528, 7
        %v530 = vsub.s32 %v527, %v529
        %v531 = vrot.slane %v524, %v530
        %v533 = vunpack.c.l.s4 1966171168
        %v534 = vunpack.c.0.s8 %v533
        %v535 = vlaneseq
        %v536 = vshrl.u32 %v535, 7
        %v537 = vsub.s32 %v534, %v536
        %v538 = vrot.slane %v456, %v537
        %v539 = vcombine.high %v538, %v538
        %v541 = vunpack.c.l.s4 1966171168
        %v542 = vunpack.c.0.s8 %v541
        %v543 = vlaneseq
        %v544 = vshrl.u32 %v543, 7
        %v545 = vsub.s32 %v542, %v544
        %v546 = vrot.slane %v538, %v545
        %v548 = vunpack.c.l.s4 1966171168
        %v549 = vunpack.c.0.s8 %v548
        %v550 = vlaneseq
        %v551 = vshrl.u32 %v550, 7
        %v552 = vsub.s32 %v549, %v551
        %v553 = vrot.slane %v539, %v552
        %v554 = vcombine.high %v546, %v546
        %v555 = vcombine.high %v553, %v553
        %v557 = vunpack.c.l.s4 1966171168
        %v558 = vunpack.c.0.s8 %v557
        %v559 = vlaneseq
        %v560 = vshrl.u32 %v559, 7
        %v561 = vsub.s32 %v558, %v560
        %v562 = vrot.slane %v457, %v561
        %v564 = vunpack.c.l.s4 1966171168
        %v565 = vunpack.c.0.s8 %v564
        %v566 = vlaneseq
        %v567 = vshrl.u32 %v566, 7
        %v568 = vsub.s32 %v565, %v567
        %v569 = vrot.slane %v562, %v568
        %v571 = vunpack.c.l.s4 1966171168
        %v572 = vunpack.c.0.s8 %v571
        %v573 = vlaneseq
        %v574 = vshrl.u32 %v573, 7
        %v575 = vsub.s32 %v572, %v574
        %v576 = vrot.slane %v458, %v575
        %v577 = vcombine.high %v576, %v576
        %v579 = vunpack.c.l.s4 1966171168
        %v580 = vunpack.c.0.s8 %v579
        %v581 = vlaneseq
        %v582 = vshrl.u32 %v581, 7
        %v583 = vsub.s32 %v580, %v582
        %v584 = vrot.slane %v576, %v583
        %v586 = vunpack.c.l.s4 1966171168
        %v587 = vunpack.c.0.s8 %v586
        %v588 = vlaneseq
        %v589 = vshrl.u32 %v588, 7
        %v590 = vsub.s32 %v587, %v589
        %v591 = vrot.slane %v577, %v590
        %v592 = vcombine.high %v584, %v584
        %v593 = vcombine.high %v591, %v591
        %v595 = vunpack.c.l.s4 1966171168
        %v596 = vunpack.c.0.s8 %v595
        %v597 = vlaneseq
        %v598 = vshrl.u32 %v597, 7
        %v599 = vsub.s32 %v596, %v598
        %v600 = vrot.slane %v459, %v599
        %v602 = vunpack.c.l.s4 1966171168
        %v603 = vunpack.c.0.s8 %v602
        %v604 = vlaneseq
        %v605 = vshrl.u32 %v604, 7
        %v606 = vsub.s32 %v603, %v605
        %v607 = vrot.slane %v600, %v606
        %v609 = vunpack.c.l.s4 1966171168
        %v610 = vunpack.c.0.s8 %v609
        %v611 = vlaneseq
        %v612 = vshrl.u32 %v611, 7
        %v613 = vsub.s32 %v610, %v612
        %v614 = vrot.slane %v460, %v613
        %v615 = vcombine.high %v614, %v614
        %v617 = vunpack.c.l.s4 1966171168
        %v618 = vunpack.c.0.s8 %v617
        %v619 = vlaneseq
        %v620 = vshrl.u32 %v619, 7
        %v621 = vsub.s32 %v618, %v620
        %v622 = vrot.slane %v614, %v621
        %v624 = vunpack.c.l.s4 1966171168
        %v625 = vunpack.c.0.s8 %v624
        %v626 = vlaneseq
        %v627 = vshrl.u32 %v626, 7
        %v628 = vsub.s32 %v625, %v627
        %v629 = vrot.slane %v615, %v628
        %v630 = vcombine.high %v622, %v622
        %v631 = vcombine.high %v629, %v629
        %v633 = vunpack.c.l.s4 1966171168
        %v634 = vunpack.c.0.s8 %v633
        %v635 = vlaneseq
        %v636 = vshrl.u32 %v635, 7
        %v637 = vsub.s32 %v634, %v636
        %v638 = vrot.slane %v461, %v637
        %v640 = vunpack.c.l.s4 1966171168
        %v641 = vunpack.c.0.s8 %v640
        %v642 = vlaneseq
        %v643 = vshrl.u32 %v642, 7
        %v644 = vsub.s32 %v641, %v643
        %v645 = vrot.slane %v638, %v644
        %v647 = vunpack.c.l.s4 1966171168
        %v648 = vunpack.c.0.s8 %v647
        %v649 = vlaneseq
        %v650 = vshrl.u32 %v649, 7
        %v651 = vsub.s32 %v648, %v650
        %v652 = vrot.slane %v462, %v651
        %v653 = vcombine.high %v652, %v652
        %v655 = vunpack.c.l.s4 1966171168
        %v656 = vunpack.c.0.s8 %v655
        %v657 = vlaneseq
        %v658 = vshrl.u32 %v657, 7
        %v659 = vsub.s32 %v656, %v658
        %v660 = vrot.slane %v652, %v659
        %v662 = vunpack.c.l.s4 1966171168
        %v663 = vunpack.c.0.s8 %v662
        %v664 = vlaneseq
        %v665 = vshrl.u32 %v664, 7
        %v666 = vsub.s32 %v663, %v665
        %v667 = vrot.slane %v653, %v666
        %v668 = vcombine.high %v660, %v660
        %v669 = vcombine.high %v667, %v667
        %v671 = vunpack.c.l.s4 1966171168
        %v672 = vunpack.c.0.s8 %v671
        %v673 = vlaneseq
        %v674 = vshrl.u32 %v673, 7
        %v675 = vsub.s32 %v672, %v674
        %v676 = vrot.slane %v463, %v675
        %v678 = vunpack.c.l.s4 1966171168
        %v679 = vunpack.c.0.s8 %v678
        %v680 = vlaneseq
        %v681 = vshrl.u32 %v680, 7
        %v682 = vsub.s32 %v679, %v681
        %v683 = vrot.slane %v676, %v682
        %v685 = vunpack.c.l.s4 1966171168
        %v686 = vunpack.c.0.s8 %v685
        %v687 = vlaneseq
        %v688 = vshrl.u32 %v687, 7
        %v689 = vsub.s32 %v686, %v688
        %v690 = vrot.slane %v464, %v689
        %v691 = vcombine.high %v690, %v690
        %v693 = vunpack.c.l.s4 1966171168
        %v694 = vunpack.c.0.s8 %v693
        %v695 = vlaneseq
        %v696 = vshrl.u32 %v695, 7
        %v697 = vsub.s32 %v694, %v696
        %v698 = vrot.slane %v690, %v697
        %v700 = vunpack.c.l.s4 1966171168
        %v701 = vunpack.c.0.s8 %v700
        %v702 = vlaneseq
        %v703 = vshrl.u32 %v702, 7
        %v704 = vsub.s32 %v701, %v703
        %v705 = vrot.slane %v691, %v704
        %v706 = vcombine.high %v698, %v698
        %v707 = vcombine.high %v705, %v705
        %v709 = vunpack.c.l.s4 1966171168
        %v710 = vunpack.c.0.s8 %v709
        %v711 = vlaneseq
        %v712 = vshrl.u32 %v711, 7
        %v713 = vsub.s32 %v710, %v712
        %v714 = vrot.slane %v465, %v713
        %v716 = vunpack.c.l.s4 1966171168
        %v717 = vunpack.c.0.s8 %v716
        %v718 = vlaneseq
        %v719 = vshrl.u32 %v718, 7
        %v720 = vsub.s32 %v717, %v719
        %v721 = vrot.slane %v714, %v720
        %v723 = vunpack.c.l.s4 1966171168
        %v724 = vunpack.c.0.s8 %v723
        %v725 = vlaneseq
        %v726 = vshrl.u32 %v725, 7
        %v727 = vsub.s32 %v724, %v726
        %v728 = vrot.slane %v466, %v727
        %v729 = vcombine.high %v728, %v728
        %v731 = vunpack.c.l.s4 1966171168
        %v732 = vunpack.c.0.s8 %v731
        %v733 = vlaneseq
        %v734 = vshrl.u32 %v733, 7
        %v735 = vsub.s32 %v732, %v734
        %v736 = vrot.slane %v728, %v735
        %v738 = vunpack.c.l.s4 1966171168
        %v739 = vunpack.c.0.s8 %v738
        %v740 = vlaneseq
        %v741 = vshrl.u32 %v740, 7
        %v742 = vsub.s32 %v739, %v741
        %v743 = vrot.slane %v729, %v742
        %v744 = vcombine.high %v736, %v736
        %v745 = vcombine.high %v743, %v743
        %v747 = vunpack.c.l.s4 1966171168
        %v748 = vunpack.c.0.s8 %v747
        %v749 = vlaneseq
        %v750 = vshrl.u32 %v749, 7
        %v751 = vsub.s32 %v748, %v750
        %v752 = vrot.slane %v467, %v751
        %v754 = vunpack.c.l.s4 1966171168
        %v755 = vunpack.c.0.s8 %v754
        %v756 = vlaneseq
        %v757 = vshrl.u32 %v756, 7
        %v758 = vsub.s32 %v755, %v757
        %v759 = vrot.slane %v752, %v758
        %v761 = vunpack.c.l.s4 1966171168
        %v762 = vunpack.c.0.s8 %v761
        %v763 = vlaneseq
        %v764 = vshrl.u32 %v763, 7
        %v765 = vsub.s32 %v762, %v764
        %v766 = vrot.slane %v468, %v765
        %v767 = vcombine.high %v766, %v766
        %v769 = vunpack.c.l.s4 1966171168
        %v770 = vunpack.c.0.s8 %v769
        %v771 = vlaneseq
        %v772 = vshrl.u32 %v771, 7
        %v773 = vsub.s32 %v770, %v772
        %v774 = vrot.slane %v766, %v773
        %v776 = vunpack.c.l.s4 1966171168
        %v777 = vunpack.c.0.s8 %v776
        %v778 = vlaneseq
        %v779 = vshrl.u32 %v778, 7
        %v780 = vsub.s32 %v777, %v779
        %v781 = vrot.slane %v767, %v780
        %v782 = vcombine.high %v774, %v774
        %v783 = vcombine.high %v781, %v781
        %v785 = vunpack.c.l.s4 1966171168
        %v786 = vunpack.c.0.s8 %v785
        %v787 = vlaneseq
        %v788 = vshrl.u32 %v787, 7
        %v789 = vsub.s32 %v786, %v788
        %v790 = vrot.slane %v469, %v789
        %v792 = vunpack.c.l.s4 1966171168
        %v793 = vunpack.c.0.s8 %v792
        %v794 = vlaneseq
        %v795 = vshrl.u32 %v794, 7
        %v796 = vsub.s32 %v793, %v795
        %v797 = vrot.slane %v790, %v796
        %v799 = vunpack.c.l.s4 1966171168
        %v800 = vunpack.c.0.s8 %v799
        %v801 = vlaneseq
        %v802 = vshrl.u32 %v801, 7
        %v803 = vsub.s32 %v800, %v802
        %v804 = vrot.slane %v470, %v803
        %v805 = vcombine.high %v804, %v804
        %v807 = vunpack.c.l.s4 1966171168
        %v808 = vunpack.c.0.s8 %v807
        %v809 = vlaneseq
        %v810 = vshrl.u32 %v809, 7
        %v811 = vsub.s32 %v808, %v810
        %v812 = vrot.slane %v804, %v811
        %v814 = vunpack.c.l.s4 1966171168
        %v815 = vunpack.c.0.s8 %v814
        %v816 = vlaneseq
        %v817 = vshrl.u32 %v816, 7
        %v818 = vsub.s32 %v815, %v817
        %v819 = vrot.slane %v805, %v818
        %v820 = vcombine.high %v812, %v812
        %v821 = vcombine.high %v819, %v819
        %v823 = vunpack.c.l.s4 1966171168
        %v824 = vunpack.c.0.s8 %v823
        %v825 = vlaneseq
        %v826 = vshrl.u32 %v825, 7
        %v827 = vsub.s32 %v824, %v826
        %v828 = vrot.slane %v471, %v827
        %v830 = vunpack.c.l.s4 1966171168
        %v831 = vunpack.c.0.s8 %v830
        %v832 = vlaneseq
        %v833 = vshrl.u32 %v832, 7
        %v834 = vsub.s32 %v831, %v833
        %v835 = vrot.slane %v828, %v834
        %v837 = vunpack.c.l.s4 1966171168
        %v838 = vunpack.c.0.s8 %v837
        %v839 = vlaneseq
        %v840 = vshrl.u32 %v839, 7
        %v841 = vsub.s32 %v838, %v840
        %v842 = vrot.slane %v472, %v841
        %v843 = vcombine.high %v842, %v842
        %v845 = vunpack.c.l.s4 1966171168
        %v846 = vunpack.c.0.s8 %v845
        %v847 = vlaneseq
        %v848 = vshrl.u32 %v847, 7
        %v849 = vsub.s32 %v846, %v848
        %v850 = vrot.slane %v842, %v849
        %v852 = vunpack.c.l.s4 1966171168
        %v853 = vunpack.c.0.s8 %v852
        %v854 = vlaneseq
        %v855 = vshrl.u32 %v854, 7
        %v856 = vsub.s32 %v853, %v855
        %v857 = vrot.slane %v843, %v856
        %v858 = vcombine.high %v850, %v850
        %v859 = vcombine.high %v857, %v857
        %v861 = vunpack.c.l.s4 1966171168
        %v862 = vunpack.c.0.s8 %v861
        %v863 = vlaneseq
        %v864 = vshrl.u32 %v863, 7
        %v865 = vsub.s32 %v862, %v864
        %v866 = vrot.slane %v473, %v865
        %v868 = vunpack.c.l.s4 1966171168
        %v869 = vunpack.c.0.s8 %v868
        %v870 = vlaneseq
        %v871 = vshrl.u32 %v870, 7
        %v872 = vsub.s32 %v869, %v871
        %v873 = vrot.slane %v866, %v872
        %v874 = vld [vmem:[%s2] sm:$0xf]
        %v875 = vld [vmem:[%s2 + $0x4] sm:$0xf]
        %v876 = vld [vmem:[%s2 + $0x8] sm:$0xf]
        %v877 = vld [vmem:[%s2 + $0xc] sm:$0xf]
        %v878 = vld [vmem:[%s2 + $0x10] sm:$0xf]
        %v879 = vld [vmem:[%s2 + $0x14] sm:$0xf]
        %v880 = vld [vmem:[%s2 + $0x18] sm:$0xf]
        %v881 = vld [vmem:[%s2 + $0x1c] sm:$0xf]
        %v882 = vld [vmem:[%s3] sm:$0x1]
        %v884 = vlaneseq
        %v885 = vshrl.u32 %v884, 7
        %v886 = vsub.s32 0, %v885
        %v887 = vrot.slane %v882, %v886
        %v889 = vcombine.low %v508, %v515
        %v890 = vcombine.low %v516, %v517
        %v891 = vcombine.low %v531, %v546
        %v892 = vcombine.low %v553, %v554
        %v894 = vunpack.c.l.s4 1966171168
        %v895 = vunpack.c.0.s8 %v894
        %v896 = vlaneseq
        %v897 = vshrl.u32 %v896, 7
        %v898 = vsub.s32 %v895, %v897
        %v899 = vrot.slane %v889, %v898
        %v901 = vunpack.c.l.s4 1966171168
        %v902 = vunpack.c.0.s8 %v901
        %v903 = vlaneseq
        %v904 = vshrl.u32 %v903, 7
        %v905 = vsub.s32 %v902, %v904
        %v906 = vrot.slane %v890, %v905
        %v908 = vunpack.c.l.s4 1966171168
        %v909 = vunpack.c.0.s8 %v908
        %v910 = vlaneseq
        %v911 = vshrl.u32 %v910, 7
        %v912 = vsub.s32 %v909, %v911
        %v913 = vrot.slane %v891, %v912
        %v915 = vunpack.c.l.s4 1966171168
        %v916 = vunpack.c.0.s8 %v915
        %v917 = vlaneseq
        %v918 = vshrl.u32 %v917, 7
        %v919 = vsub.s32 %v916, %v918
        %v920 = vrot.slane %v892, %v919
        %v921 = vcombine.low %v899, %v906
        %v922 = vcombine.low %v913, %v920
        %v924 = vunpack.c.l.s4 1966171168
        %v925 = vunpack.c.0.s8 %v924
        %v926 = vlaneseq
        %v927 = vshrl.u32 %v926, 7
        %v928 = vsub.s32 %v925, %v927
        %v929 = vrot.slane %v921, %v928
        %v931 = vunpack.c.l.s4 1966171168
        %v932 = vunpack.c.0.s8 %v931
        %v933 = vlaneseq
        %v934 = vshrl.u32 %v933, 7
        %v935 = vsub.s32 %v932, %v934
        %v936 = vrot.slane %v922, %v935
        %v937 = vcombine.low %v929, %v936
        %v938 = vcombine.low %v555, %v569
        %v939 = vcombine.low %v584, %v591
        %v940 = vcombine.low %v592, %v593
        %v941 = vcombine.low %v607, %v622
        %v943 = vunpack.c.l.s4 1966171168
        %v944 = vunpack.c.0.s8 %v943
        %v945 = vlaneseq
        %v946 = vshrl.u32 %v945, 7
        %v947 = vsub.s32 %v944, %v946
        %v948 = vrot.slane %v938, %v947
        %v950 = vunpack.c.l.s4 1966171168
        %v951 = vunpack.c.0.s8 %v950
        %v952 = vlaneseq
        %v953 = vshrl.u32 %v952, 7
        %v954 = vsub.s32 %v951, %v953
        %v955 = vrot.slane %v939, %v954
        %v957 = vunpack.c.l.s4 1966171168
        %v958 = vunpack.c.0.s8 %v957
        %v959 = vlaneseq
        %v960 = vshrl.u32 %v959, 7
        %v961 = vsub.s32 %v958, %v960
        %v962 = vrot.slane %v940, %v961
        %v964 = vunpack.c.l.s4 1966171168
        %v965 = vunpack.c.0.s8 %v964
        %v966 = vlaneseq
        %v967 = vshrl.u32 %v966, 7
        %v968 = vsub.s32 %v965, %v967
        %v969 = vrot.slane %v941, %v968
        %v970 = vcombine.low %v948, %v955
        %v971 = vcombine.low %v962, %v969
        %v973 = vunpack.c.l.s4 1966171168
        %v974 = vunpack.c.0.s8 %v973
        %v975 = vlaneseq
        %v976 = vshrl.u32 %v975, 7
        %v977 = vsub.s32 %v974, %v976
        %v978 = vrot.slane %v970, %v977
        %v980 = vunpack.c.l.s4 1966171168
        %v981 = vunpack.c.0.s8 %v980
        %v982 = vlaneseq
        %v983 = vshrl.u32 %v982, 7
        %v984 = vsub.s32 %v981, %v983
        %v985 = vrot.slane %v971, %v984
        %v986 = vcombine.low %v978, %v985
        %v987 = vcombine.low %v629, %v630
        %v988 = vcombine.low %v631, %v645
        %v989 = vcombine.low %v660, %v667
        %v990 = vcombine.low %v668, %v669
        %v992 = vunpack.c.l.s4 1966171168
        %v993 = vunpack.c.0.s8 %v992
        %v994 = vlaneseq
        %v995 = vshrl.u32 %v994, 7
        %v996 = vsub.s32 %v993, %v995
        %v997 = vrot.slane %v987, %v996
        %v999 = vunpack.c.l.s4 1966171168
        %v1000 = vunpack.c.0.s8 %v999
        %v1001 = vlaneseq
        %v1002 = vshrl.u32 %v1001, 7
        %v1003 = vsub.s32 %v1000, %v1002
        %v1004 = vrot.slane %v988, %v1003
        %v1006 = vunpack.c.l.s4 1966171168
        %v1007 = vunpack.c.0.s8 %v1006
        %v1008 = vlaneseq
        %v1009 = vshrl.u32 %v1008, 7
        %v1010 = vsub.s32 %v1007, %v1009
        %v1011 = vrot.slane %v989, %v1010
        %v1013 = vunpack.c.l.s4 1966171168
        %v1014 = vunpack.c.0.s8 %v1013
        %v1015 = vlaneseq
        %v1016 = vshrl.u32 %v1015, 7
        %v1017 = vsub.s32 %v1014, %v1016
        %v1018 = vrot.slane %v990, %v1017
        %v1019 = vcombine.low %v997, %v1004
        %v1020 = vcombine.low %v1011, %v1018
        %v1022 = vunpack.c.l.s4 1966171168
        %v1023 = vunpack.c.0.s8 %v1022
        %v1024 = vlaneseq
        %v1025 = vshrl.u32 %v1024, 7
        %v1026 = vsub.s32 %v1023, %v1025
        %v1027 = vrot.slane %v1019, %v1026
        %v1029 = vunpack.c.l.s4 1966171168
        %v1030 = vunpack.c.0.s8 %v1029
        %v1031 = vlaneseq
        %v1032 = vshrl.u32 %v1031, 7
        %v1033 = vsub.s32 %v1030, %v1032
        %v1034 = vrot.slane %v1020, %v1033
        %v1035 = vcombine.low %v1027, %v1034
        %v1036 = vcombine.low %v683, %v698
        %v1037 = vcombine.low %v705, %v706
        %v1038 = vcombine.low %v707, %v721
        %v1039 = vcombine.low %v736, %v743
        %v1041 = vunpack.c.l.s4 1966171168
        %v1042 = vunpack.c.0.s8 %v1041
        %v1043 = vlaneseq
        %v1044 = vshrl.u32 %v1043, 7
        %v1045 = vsub.s32 %v1042, %v1044
        %v1046 = vrot.slane %v1036, %v1045
        %v1048 = vunpack.c.l.s4 1966171168
        %v1049 = vunpack.c.0.s8 %v1048
        %v1050 = vlaneseq
        %v1051 = vshrl.u32 %v1050, 7
        %v1052 = vsub.s32 %v1049, %v1051
        %v1053 = vrot.slane %v1037, %v1052
        %v1055 = vunpack.c.l.s4 1966171168
        %v1056 = vunpack.c.0.s8 %v1055
        %v1057 = vlaneseq
        %v1058 = vshrl.u32 %v1057, 7
        %v1059 = vsub.s32 %v1056, %v1058
        %v1060 = vrot.slane %v1038, %v1059
        %v1062 = vunpack.c.l.s4 1966171168
        %v1063 = vunpack.c.0.s8 %v1062
        %v1064 = vlaneseq
        %v1065 = vshrl.u32 %v1064, 7
        %v1066 = vsub.s32 %v1063, %v1065
        %v1067 = vrot.slane %v1039, %v1066
        %v1068 = vcombine.low %v1046, %v1053
        %v1069 = vcombine.low %v1060, %v1067
        %v1071 = vunpack.c.l.s4 1966171168
        %v1072 = vunpack.c.0.s8 %v1071
        %v1073 = vlaneseq
        %v1074 = vshrl.u32 %v1073, 7
        %v1075 = vsub.s32 %v1072, %v1074
        %v1076 = vrot.slane %v1068, %v1075
        %v1078 = vunpack.c.l.s4 1966171168
        %v1079 = vunpack.c.0.s8 %v1078
        %v1080 = vlaneseq
        %v1081 = vshrl.u32 %v1080, 7
        %v1082 = vsub.s32 %v1079, %v1081
        %v1083 = vrot.slane %v1069, %v1082
        %v1084 = vcombine.low %v1076, %v1083
        %v1085 = vcombine.low %v744, %v745
        %v1086 = vcombine.low %v759, %v774
        %v1087 = vcombine.low %v781, %v782
        %v1088 = vcombine.low %v783, %v797
        %v1090 = vunpack.c.l.s4 1966171168
        %v1091 = vunpack.c.0.s8 %v1090
        %v1092 = vlaneseq
        %v1093 = vshrl.u32 %v1092, 7
        %v1094 = vsub.s32 %v1091, %v1093
        %v1095 = vrot.slane %v1085, %v1094
        %v1097 = vunpack.c.l.s4 1966171168
        %v1098 = vunpack.c.0.s8 %v1097
        %v1099 = vlaneseq
        %v1100 = vshrl.u32 %v1099, 7
        %v1101 = vsub.s32 %v1098, %v1100
        %v1102 = vrot.slane %v1086, %v1101
        %v1104 = vunpack.c.l.s4 1966171168
        %v1105 = vunpack.c.0.s8 %v1104
        %v1106 = vlaneseq
        %v1107 = vshrl.u32 %v1106, 7
        %v1108 = vsub.s32 %v1105, %v1107
        %v1109 = vrot.slane %v1087, %v1108
        %v1111 = vunpack.c.l.s4 1966171168
        %v1112 = vunpack.c.0.s8 %v1111
        %v1113 = vlaneseq
        %v1114 = vshrl.u32 %v1113, 7
        %v1115 = vsub.s32 %v1112, %v1114
        %v1116 = vrot.slane %v1088, %v1115
        %v1117 = vcombine.low %v1095, %v1102
        %v1118 = vcombine.low %v1109, %v1116
        %v1120 = vunpack.c.l.s4 1966171168
        %v1121 = vunpack.c.0.s8 %v1120
        %v1122 = vlaneseq
        %v1123 = vshrl.u32 %v1122, 7
        %v1124 = vsub.s32 %v1121, %v1123
        %v1125 = vrot.slane %v1117, %v1124
        %v1127 = vunpack.c.l.s4 1966171168
        %v1128 = vunpack.c.0.s8 %v1127
        %v1129 = vlaneseq
        %v1130 = vshrl.u32 %v1129, 7
        %v1131 = vsub.s32 %v1128, %v1130
        %v1132 = vrot.slane %v1118, %v1131
        %v1133 = vcombine.low %v1125, %v1132
        %v1134 = vcombine.low %v812, %v819
        %v1135 = vcombine.low %v820, %v821
        %v1136 = vcombine.low %v835, %v850
        %v1137 = vcombine.low %v857, %v858
        %v1139 = vunpack.c.l.s4 1966171168
        %v1140 = vunpack.c.0.s8 %v1139
        %v1141 = vlaneseq
        %v1142 = vshrl.u32 %v1141, 7
        %v1143 = vsub.s32 %v1140, %v1142
        %v1144 = vrot.slane %v1134, %v1143
        %v1146 = vunpack.c.l.s4 1966171168
        %v1147 = vunpack.c.0.s8 %v1146
        %v1148 = vlaneseq
        %v1149 = vshrl.u32 %v1148, 7
        %v1150 = vsub.s32 %v1147, %v1149
        %v1151 = vrot.slane %v1135, %v1150
        %v1153 = vunpack.c.l.s4 1966171168
        %v1154 = vunpack.c.0.s8 %v1153
        %v1155 = vlaneseq
        %v1156 = vshrl.u32 %v1155, 7
        %v1157 = vsub.s32 %v1154, %v1156
        %v1158 = vrot.slane %v1136, %v1157
        %v1160 = vunpack.c.l.s4 1966171168
        %v1161 = vunpack.c.0.s8 %v1160
        %v1162 = vlaneseq
        %v1163 = vshrl.u32 %v1162, 7
        %v1164 = vsub.s32 %v1161, %v1163
        %v1165 = vrot.slane %v1137, %v1164
        %v1166 = vcombine.low %v1144, %v1151
        %v1167 = vcombine.low %v1158, %v1165
        %v1169 = vunpack.c.l.s4 1966171168
        %v1170 = vunpack.c.0.s8 %v1169
        %v1171 = vlaneseq
        %v1172 = vshrl.u32 %v1171, 7
        %v1173 = vsub.s32 %v1170, %v1172
        %v1174 = vrot.slane %v1166, %v1173
        %v1176 = vunpack.c.l.s4 1966171168
        %v1177 = vunpack.c.0.s8 %v1176
        %v1178 = vlaneseq
        %v1179 = vshrl.u32 %v1178, 7
        %v1180 = vsub.s32 %v1177, %v1179
        %v1181 = vrot.slane %v1167, %v1180
        %v1182 = vcombine.low %v1174, %v1181
        %v1183 = vcombine.low %v859, %v873
        %v1185 = vunpack.c.l.s4 1966171168
        %v1186 = vunpack.c.0.s8 %v1185
        %v1187 = vlaneseq
        %v1188 = vshrl.u32 %v1187, 7
        %v1189 = vsub.s32 %v1186, %v1188
        %v1190 = vrot.slane %v1183, %v1189
        %v1192 = vunpack.c.l.s4 1966171168
        %v1193 = vunpack.c.0.s8 %v1192
        %v1194 = vlaneseq
        %v1195 = vshrl.u32 %v1194, 7
        %v1196 = vsub.s32 %v1193, %v1195
        %v1197 = vrot.slane %v1190, %v1196
        %v1206 = vunpack.c.l.b16 %v874
        %v1207 = vunpack.c.l.b16 %v875
        %v1208 = vunpack.c.l.b16 %v876
        %v1209 = vunpack.c.l.b16 %v877
        %v1210 = vunpack.c.l.b16 %v878
        %v1211 = vunpack.c.l.b16 %v879
        %v1212 = vunpack.c.l.b16 %v880
        %v1213 = vunpack.c.l.b16 %v881
        %v1214 = vpack.c.b16 %v1207, %v1206
        %v1215 = vpack.c.b16 %v1209, %v1208
        %v1216 = vpack.c.b16 %v1211, %v1210
        %v1217 = vpack.c.b16 %v1213, %v1212
        %vm1222 = vcmask 523264
        %v1224 = vsel %vm1222, %v937, 0
        %v1227 = vsel %vm1222, %v986, 0
        %v1230 = vsel %vm1222, %v1035, 0
        %v1233 = vsel %vm1222, %v1084, 0
        %v1236 = vsel %vm1222, %v1133, 0
        %v1239 = vsel %vm1222, %v1182, 0
        %v1242 = vsel %vm1222, %v1197, 0
        %1244 = vmatprep.subr.bf16.mxu0 0
        %1245 = vmatpush1.bf16.msra.mxu0 %v1214
        %1246 = vmatprep.subr.bf16.mxu0 0
        %1247 = vmatpush1.bf16.msra.mxu0 %v1215
        %1248 = vmatprep.subr.bf16.mxu0 0
        %1249 = vmatpush1.bf16.msra.mxu0 %v1216
        %1250 = vmatprep.subr.bf16.mxu0 0
        %1251 = vmatpush1.bf16.msra.mxu0 %v1217
        %1252 = vmatprep.subr.bf16.mxu0 0
        %1253 = vmatpush1.bf16.msra.mxu0 0
        %1254 = vmatprep.subr.bf16.mxu0 0
        %1255 = vmatpush1.bf16.msra.mxu0 0
        %1256 = vmatprep.subr.bf16.mxu0 0
        %1257 = vmatpush1.bf16.msra.mxu0 0
        %1258 = vmatprep.subr.bf16.mxu0 0
        %1259 = vmatpush1.bf16.msra.mxu0 0
        %1260 = vmatprep.subr.bf16.mxu0 0
        %1261 = vmatpush1.bf16.msra.mxu0 0
        %1262 = vmatprep.subr.bf16.mxu0 0
        %1263 = vmatpush1.bf16.msra.mxu0 0
        %1264 = vmatprep.subr.bf16.mxu0 0
        %1265 = vmatpush1.bf16.msra.mxu0 0
        %1266 = vmatprep.subr.bf16.mxu0 0
        %1267 = vmatpush1.bf16.msra.mxu0 0
        %1268 = vmatprep.subr.bf16.mxu0 0
        %1269 = vmatpush1.bf16.msra.mxu0 0
        %1270 = vmatprep.subr.bf16.mxu0 0
        %1271 = vmatpush1.bf16.msra.mxu0 0
        %1272 = vmatprep.subr.bf16.mxu0 0
        %1273 = vmatpush1.bf16.msra.mxu0 0
        %1274 = vmatprep.subr.bf16.mxu0 0
        %1275 = vmatpush1.bf16.msra.mxu0 0
        %1276 = vmatprep.mubr.bf16.mxu0 0
        %1277 = vmatmul.mubr.bf16.gmra.mrb[0].mxu0 %v1224
        %v1278 = vpop.f32.mrb[0].mxu0
        %v1279 = vadd.f32 %v887, %v1278
        %v1280 = vpop.f32.mrb[0].mxu0
        %v1281 = vpop.f32.mrb[0].mxu0
        %v1282 = vadd.f32 %v887, %v1281
        %v1283 = vpop.f32.mrb[0].mxu0
        %1284 = vmatprep.mubr.bf16.mxu0 0
        %1285 = vmatmul.mubr.bf16.gmra.mrb[0].mxu0 %v1227
        %v1286 = vpop.f32.mrb[0].mxu0
        %v1287 = vadd.f32 %v887, %v1286
        %v1288 = vpop.f32.mrb[0].mxu0
        %v1289 = vpop.f32.mrb[0].mxu0
        %v1290 = vadd.f32 %v887, %v1289
        %v1291 = vpop.f32.mrb[0].mxu0
        %1292 = vmatprep.mubr.bf16.mxu0 0
        %1293 = vmatmul.mubr.bf16.gmra.mrb[0].mxu0 %v1230
        %v1294 = vpop.f32.mrb[0].mxu0
        %v1295 = vadd.f32 %v887, %v1294
        %v1296 = vpop.f32.mrb[0].mxu0
        %v1297 = vpop.f32.mrb[0].mxu0
        %v1298 = vadd.f32 %v887, %v1297
        %v1299 = vpop.f32.mrb[0].mxu0
        %1300 = vmatprep.mubr.bf16.mxu0 0
        %1301 = vmatmul.mubr.bf16.gmra.mrb[0].mxu0 %v1233
        %v1302 = vpop.f32.mrb[0].mxu0
        %v1303 = vadd.f32 %v887, %v1302
        %v1304 = vpop.f32.mrb[0].mxu0
        %v1305 = vpop.f32.mrb[0].mxu0
        %v1306 = vadd.f32 %v887, %v1305
        %v1307 = vpop.f32.mrb[0].mxu0
        %1308 = vmatprep.mubr.bf16.mxu0 0
        %1309 = vmatmul.mubr.bf16.gmra.mrb[0].mxu0 %v1236
        %v1310 = vpop.f32.mrb[0].mxu0
        %v1311 = vadd.f32 %v887, %v1310
        %v1312 = vpop.f32.mrb[0].mxu0
        %v1313 = vpop.f32.mrb[0].mxu0
        %v1314 = vadd.f32 %v887, %v1313
        %v1315 = vpop.f32.mrb[0].mxu0
        %1316 = vmatprep.mubr.bf16.mxu0 0
        %1317 = vmatmul.mubr.bf16.gmra.mrb[0].mxu0 %v1239
        %v1318 = vpop.f32.mrb[0].mxu0
        %v1319 = vadd.f32 %v887, %v1318
        %v1320 = vpop.f32.mrb[0].mxu0
        %v1321 = vpop.f32.mrb[0].mxu0
        %v1322 = vadd.f32 %v887, %v1321
        %v1323 = vpop.f32.mrb[0].mxu0
        %1324 = vmatprep.mubr.bf16.mxu0 0
        %1325 = vmatmul.mubr.bf16.gmra.mrb[0].mxu0 %v1242
        %v1326 = vpop.f32.mrb[0].mxu0
        %v1327 = vadd.f32 %v887, %v1326
        %v1328 = vpop.f32.mrb[0].mxu0
        %v1329 = vpop.f32.mrb[0].mxu0
        %v1330 = vpop.f32.mrb[0].mxu0
        %1331 = vdwg.mxu0
        %v1332 = vsub.f32 0.0, %v1279
        %v1333 = vsub.f32 0.0, %v1282
        %v1334 = vsub.f32 0.0, %v1287
        %v1335 = vsub.f32 0.0, %v1290
        %v1336 = vsub.f32 0.0, %v1295
        %v1337 = vsub.f32 0.0, %v1298
        %v1338 = vsub.f32 0.0, %v1303
        %v1339 = vsub.f32 0.0, %v1306
        %v1340 = vsub.f32 0.0, %v1311
        %v1341 = vsub.f32 0.0, %v1314
        %v1342 = vsub.f32 0.0, %v1319
        %v1343 = vsub.f32 0.0, %v1322
        %v1344 = vsub.f32 0.0, %v1327
        %v1345 = vmul.f32 %v1332, 1.442695
        %v1346 = vpow.pop %v1345
        %v1347 = vmul.f32 %v1333, 1.442695
        %v1348 = vpow.pop %v1347
        %v1349 = vmul.f32 %v1334, 1.442695
        %v1350 = vpow.pop %v1349
        %v1351 = vmul.f32 %v1335, 1.442695
        %v1352 = vpow.pop %v1351
        %v1353 = vmul.f32 %v1336, 1.442695
        %v1354 = vpow.pop %v1353
        %v1355 = vmul.f32 %v1337, 1.442695
        %v1356 = vpow.pop %v1355
        %v1357 = vmul.f32 %v1338, 1.442695
        %v1358 = vpow.pop %v1357
        %v1359 = vmul.f32 %v1339, 1.442695
        %v1360 = vpow.pop %v1359
        %v1361 = vmul.f32 %v1340, 1.442695
        %v1362 = vpow.pop %v1361
        %v1363 = vmul.f32 %v1341, 1.442695
        %v1364 = vpow.pop %v1363
        %v1365 = vmul.f32 %v1342, 1.442695
        %v1366 = vpow.pop %v1365
        %v1367 = vmul.f32 %v1343, 1.442695
        %v1368 = vpow.pop %v1367
        %v1369 = vmul.f32 %v1344, 1.442695
        %v1370 = vpow.pop %v1369
        %v1371 = vadd.f32 %v1346, 1.0
        %v1372 = vadd.f32 %v1348, 1.0
        %v1373 = vadd.f32 %v1350, 1.0
        %v1374 = vadd.f32 %v1352, 1.0
        %v1375 = vadd.f32 %v1354, 1.0
        %v1376 = vadd.f32 %v1356, 1.0
        %v1377 = vadd.f32 %v1358, 1.0
        %v1378 = vadd.f32 %v1360, 1.0
        %v1379 = vadd.f32 %v1362, 1.0
        %v1380 = vadd.f32 %v1364, 1.0
        %v1381 = vadd.f32 %v1366, 1.0
        %v1382 = vadd.f32 %v1368, 1.0
        %v1383 = vadd.f32 %v1370, 1.0
        %v1384 = vrcp.pop %v1371
        %v1385 = vmul.f32 1.0, %v1384
        %v1386 = vrcp.pop %v1372
        %v1387 = vmul.f32 1.0, %v1386
        %v1388 = vrcp.pop %v1373
        %v1389 = vmul.f32 1.0, %v1388
        %v1390 = vrcp.pop %v1374
        %v1391 = vmul.f32 1.0, %v1390
        %v1392 = vrcp.pop %v1375
        %v1393 = vmul.f32 1.0, %v1392
        %v1394 = vrcp.pop %v1376
        %v1395 = vmul.f32 1.0, %v1394
        %v1396 = vrcp.pop %v1377
        %v1397 = vmul.f32 1.0, %v1396
        %v1398 = vrcp.pop %v1378
        %v1399 = vmul.f32 1.0, %v1398
        %v1400 = vrcp.pop %v1379
        %v1401 = vmul.f32 1.0, %v1400
        %v1402 = vrcp.pop %v1380
        %v1403 = vmul.f32 1.0, %v1402
        %v1404 = vrcp.pop %v1381
        %v1405 = vmul.f32 1.0, %v1404
        %v1406 = vrcp.pop %v1382
        %v1407 = vmul.f32 1.0, %v1406
        %v1408 = vrcp.pop %v1383
        %v1409 = vmul.f32 1.0, %v1408
        %v1410 = vmul.f32 %v1279, %v1385
        %v1411 = vmul.f32 %v1282, %v1387
        %v1412 = vmul.f32 %v1287, %v1389
        %v1413 = vmul.f32 %v1290, %v1391
        %v1414 = vmul.f32 %v1295, %v1393
        %v1415 = vmul.f32 %v1298, %v1395
        %v1416 = vmul.f32 %v1303, %v1397
        %v1417 = vmul.f32 %v1306, %v1399
        %v1418 = vmul.f32 %v1311, %v1401
        %v1419 = vmul.f32 %v1314, %v1403
        %v1420 = vmul.f32 %v1319, %v1405
        %v1421 = vmul.f32 %v1322, %v1407
        %v1422 = vmul.f32 %v1327, %v1409
        %v1423 = vpack.c.bf16 %v1411, %v1410
        %v1424 = vpack.c.bf16 %v1413, %v1412
        %v1425 = vpack.c.bf16 %v1415, %v1414
        %v1426 = vpack.c.bf16 %v1417, %v1416
        %v1427 = vpack.c.bf16 %v1419, %v1418
        %v1428 = vpack.c.bf16 %v1421, %v1420
        %v1429 = vpack.c.bf16 %v1422, %v1422
        %v1437 = vcombine.high %v1423, %v1423
        %v1439 = vunpack.c.l.s4 1966171168
        %v1440 = vunpack.c.0.s8 %v1439
        %v1441 = vlaneseq
        %v1442 = vshrl.u32 %v1441, 7
        %v1443 = vsub.s32 %v1440, %v1442
        %v1444 = vrot.slane %v1423, %v1443
        %v1446 = vunpack.c.l.s4 1966171168
        %v1447 = vunpack.c.0.s8 %v1446
        %v1448 = vlaneseq
        %v1449 = vshrl.u32 %v1448, 7
        %v1450 = vsub.s32 %v1447, %v1449
        %v1451 = vrot.slane %v1437, %v1450
        %v1452 = vcombine.high %v1444, %v1444
        %v1453 = vcombine.high %v1451, %v1451
        %v1455 = vunpack.c.l.s4 1966171168
        %v1456 = vunpack.c.0.s8 %v1455
        %v1457 = vlaneseq
        %v1458 = vshrl.u32 %v1457, 7
        %v1459 = vsub.s32 %v1456, %v1458
        %v1460 = vrot.slane %v1444, %v1459
        %v1462 = vunpack.c.l.s4 1966171168
        %v1463 = vunpack.c.0.s8 %v1462
        %v1464 = vlaneseq
        %v1465 = vshrl.u32 %v1464, 7
        %v1466 = vsub.s32 %v1463, %v1465
        %v1467 = vrot.slane %v1451, %v1466
        %v1469 = vunpack.c.l.s4 1966171168
        %v1470 = vunpack.c.0.s8 %v1469
        %v1471 = vlaneseq
        %v1472 = vshrl.u32 %v1471, 7
        %v1473 = vsub.s32 %v1470, %v1472
        %v1474 = vrot.slane %v1452, %v1473
        %v1476 = vunpack.c.l.s4 1966171168
        %v1477 = vunpack.c.0.s8 %v1476
        %v1478 = vlaneseq
        %v1479 = vshrl.u32 %v1478, 7
        %v1480 = vsub.s32 %v1477, %v1479
        %v1481 = vrot.slane %v1453, %v1480
        %v1482 = vcombine.high %v1460, %v1460
        %v1483 = vcombine.high %v1467, %v1467
        %v1484 = vcombine.high %v1474, %v1474
        %v1485 = vcombine.high %v1481, %v1481
        %v1486 = vcombine.high %v1424, %v1424
        %v1488 = vunpack.c.l.s4 1966171168
        %v1489 = vunpack.c.0.s8 %v1488
        %v1490 = vlaneseq
        %v1491 = vshrl.u32 %v1490, 7
        %v1492 = vsub.s32 %v1489, %v1491
        %v1493 = vrot.slane %v1424, %v1492
        %v1495 = vunpack.c.l.s4 1966171168
        %v1496 = vunpack.c.0.s8 %v1495
        %v1497 = vlaneseq
        %v1498 = vshrl.u32 %v1497, 7
        %v1499 = vsub.s32 %v1496, %v1498
        %v1500 = vrot.slane %v1486, %v1499
        %v1501 = vcombine.high %v1493, %v1493
        %v1502 = vcombine.high %v1500, %v1500
        %v1504 = vunpack.c.l.s4 1966171168
        %v1505 = vunpack.c.0.s8 %v1504
        %v1506 = vlaneseq
        %v1507 = vshrl.u32 %v1506, 7
        %v1508 = vsub.s32 %v1505, %v1507
        %v1509 = vrot.slane %v1493, %v1508
        %v1511 = vunpack.c.l.s4 1966171168
        %v1512 = vunpack.c.0.s8 %v1511
        %v1513 = vlaneseq
        %v1514 = vshrl.u32 %v1513, 7
        %v1515 = vsub.s32 %v1512, %v1514
        %v1516 = vrot.slane %v1500, %v1515
        %v1518 = vunpack.c.l.s4 1966171168
        %v1519 = vunpack.c.0.s8 %v1518
        %v1520 = vlaneseq
        %v1521 = vshrl.u32 %v1520, 7
        %v1522 = vsub.s32 %v1519, %v1521
        %v1523 = vrot.slane %v1501, %v1522
        %v1525 = vunpack.c.l.s4 1966171168
        %v1526 = vunpack.c.0.s8 %v1525
        %v1527 = vlaneseq
        %v1528 = vshrl.u32 %v1527, 7
        %v1529 = vsub.s32 %v1526, %v1528
        %v1530 = vrot.slane %v1502, %v1529
        %v1531 = vcombine.high %v1509, %v1509
        %v1532 = vcombine.high %v1516, %v1516
        %v1533 = vcombine.high %v1523, %v1523
        %v1534 = vcombine.high %v1530, %v1530
        %v1535 = vcombine.high %v1425, %v1425
        %v1537 = vunpack.c.l.s4 1966171168
        %v1538 = vunpack.c.0.s8 %v1537
        %v1539 = vlaneseq
        %v1540 = vshrl.u32 %v1539, 7
        %v1541 = vsub.s32 %v1538, %v1540
        %v1542 = vrot.slane %v1425, %v1541
        %v1544 = vunpack.c.l.s4 1966171168
        %v1545 = vunpack.c.0.s8 %v1544
        %v1546 = vlaneseq
        %v1547 = vshrl.u32 %v1546, 7
        %v1548 = vsub.s32 %v1545, %v1547
        %v1549 = vrot.slane %v1535, %v1548
        %v1550 = vcombine.high %v1542, %v1542
        %v1551 = vcombine.high %v1549, %v1549
        %v1553 = vunpack.c.l.s4 1966171168
        %v1554 = vunpack.c.0.s8 %v1553
        %v1555 = vlaneseq
        %v1556 = vshrl.u32 %v1555, 7
        %v1557 = vsub.s32 %v1554, %v1556
        %v1558 = vrot.slane %v1542, %v1557
        %v1560 = vunpack.c.l.s4 1966171168
        %v1561 = vunpack.c.0.s8 %v1560
        %v1562 = vlaneseq
        %v1563 = vshrl.u32 %v1562, 7
        %v1564 = vsub.s32 %v1561, %v1563
        %v1565 = vrot.slane %v1549, %v1564
        %v1567 = vunpack.c.l.s4 1966171168
        %v1568 = vunpack.c.0.s8 %v1567
        %v1569 = vlaneseq
        %v1570 = vshrl.u32 %v1569, 7
        %v1571 = vsub.s32 %v1568, %v1570
        %v1572 = vrot.slane %v1550, %v1571
        %v1574 = vunpack.c.l.s4 1966171168
        %v1575 = vunpack.c.0.s8 %v1574
        %v1576 = vlaneseq
        %v1577 = vshrl.u32 %v1576, 7
        %v1578 = vsub.s32 %v1575, %v1577
        %v1579 = vrot.slane %v1551, %v1578
        %v1580 = vcombine.high %v1558, %v1558
        %v1581 = vcombine.high %v1565, %v1565
        %v1582 = vcombine.high %v1572, %v1572
        %v1583 = vcombine.high %v1579, %v1579
        %v1584 = vcombine.high %v1426, %v1426
        %v1586 = vunpack.c.l.s4 1966171168
        %v1587 = vunpack.c.0.s8 %v1586
        %v1588 = vlaneseq
        %v1589 = vshrl.u32 %v1588, 7
        %v1590 = vsub.s32 %v1587, %v1589
        %v1591 = vrot.slane %v1426, %v1590
        %v1593 = vunpack.c.l.s4 1966171168
        %v1594 = vunpack.c.0.s8 %v1593
        %v1595 = vlaneseq
        %v1596 = vshrl.u32 %v1595, 7
        %v1597 = vsub.s32 %v1594, %v1596
        %v1598 = vrot.slane %v1584, %v1597
        %v1599 = vcombine.high %v1591, %v1591
        %v1600 = vcombine.high %v1598, %v1598
        %v1602 = vunpack.c.l.s4 1966171168
        %v1603 = vunpack.c.0.s8 %v1602
        %v1604 = vlaneseq
        %v1605 = vshrl.u32 %v1604, 7
        %v1606 = vsub.s32 %v1603, %v1605
        %v1607 = vrot.slane %v1591, %v1606
        %v1609 = vunpack.c.l.s4 1966171168
        %v1610 = vunpack.c.0.s8 %v1609
        %v1611 = vlaneseq
        %v1612 = vshrl.u32 %v1611, 7
        %v1613 = vsub.s32 %v1610, %v1612
        %v1614 = vrot.slane %v1598, %v1613
        %v1616 = vunpack.c.l.s4 1966171168
        %v1617 = vunpack.c.0.s8 %v1616
        %v1618 = vlaneseq
        %v1619 = vshrl.u32 %v1618, 7
        %v1620 = vsub.s32 %v1617, %v1619
        %v1621 = vrot.slane %v1599, %v1620
        %v1623 = vunpack.c.l.s4 1966171168
        %v1624 = vunpack.c.0.s8 %v1623
        %v1625 = vlaneseq
        %v1626 = vshrl.u32 %v1625, 7
        %v1627 = vsub.s32 %v1624, %v1626
        %v1628 = vrot.slane %v1600, %v1627
        %v1629 = vcombine.high %v1607, %v1607
        %v1630 = vcombine.high %v1614, %v1614
        %v1631 = vcombine.high %v1621, %v1621
        %v1632 = vcombine.high %v1628, %v1628
        %v1633 = vcombine.high %v1427, %v1427
        %v1635 = vunpack.c.l.s4 1966171168
        %v1636 = vunpack.c.0.s8 %v1635
        %v1637 = vlaneseq
        %v1638 = vshrl.u32 %v1637, 7
        %v1639 = vsub.s32 %v1636, %v1638
        %v1640 = vrot.slane %v1427, %v1639
        %v1642 = vunpack.c.l.s4 1966171168
        %v1643 = vunpack.c.0.s8 %v1642
        %v1644 = vlaneseq
        %v1645 = vshrl.u32 %v1644, 7
        %v1646 = vsub.s32 %v1643, %v1645
        %v1647 = vrot.slane %v1633, %v1646
        %v1648 = vcombine.high %v1640, %v1640
        %v1649 = vcombine.high %v1647, %v1647
        %v1651 = vunpack.c.l.s4 1966171168
        %v1652 = vunpack.c.0.s8 %v1651
        %v1653 = vlaneseq
        %v1654 = vshrl.u32 %v1653, 7
        %v1655 = vsub.s32 %v1652, %v1654
        %v1656 = vrot.slane %v1640, %v1655
        %v1658 = vunpack.c.l.s4 1966171168
        %v1659 = vunpack.c.0.s8 %v1658
        %v1660 = vlaneseq
        %v1661 = vshrl.u32 %v1660, 7
        %v1662 = vsub.s32 %v1659, %v1661
        %v1663 = vrot.slane %v1647, %v1662
        %v1665 = vunpack.c.l.s4 1966171168
        %v1666 = vunpack.c.0.s8 %v1665
        %v1667 = vlaneseq
        %v1668 = vshrl.u32 %v1667, 7
        %v1669 = vsub.s32 %v1666, %v1668
        %v1670 = vrot.slane %v1648, %v1669
        %v1672 = vunpack.c.l.s4 1966171168
        %v1673 = vunpack.c.0.s8 %v1672
        %v1674 = vlaneseq
        %v1675 = vshrl.u32 %v1674, 7
        %v1676 = vsub.s32 %v1673, %v1675
        %v1677 = vrot.slane %v1649, %v1676
        %v1678 = vcombine.high %v1656, %v1656
        %v1679 = vcombine.high %v1663, %v1663
        %v1680 = vcombine.high %v1670, %v1670
        %v1681 = vcombine.high %v1677, %v1677
        %v1682 = vcombine.high %v1428, %v1428
        %v1684 = vunpack.c.l.s4 1966171168
        %v1685 = vunpack.c.0.s8 %v1684
        %v1686 = vlaneseq
        %v1687 = vshrl.u32 %v1686, 7
        %v1688 = vsub.s32 %v1685, %v1687
        %v1689 = vrot.slane %v1428, %v1688
        %v1691 = vunpack.c.l.s4 1966171168
        %v1692 = vunpack.c.0.s8 %v1691
        %v1693 = vlaneseq
        %v1694 = vshrl.u32 %v1693, 7
        %v1695 = vsub.s32 %v1692, %v1694
        %v1696 = vrot.slane %v1682, %v1695
        %v1697 = vcombine.high %v1689, %v1689
        %v1698 = vcombine.high %v1696, %v1696
        %v1700 = vunpack.c.l.s4 1966171168
        %v1701 = vunpack.c.0.s8 %v1700
        %v1702 = vlaneseq
        %v1703 = vshrl.u32 %v1702, 7
        %v1704 = vsub.s32 %v1701, %v1703
        %v1705 = vrot.slane %v1689, %v1704
        %v1707 = vunpack.c.l.s4 1966171168
        %v1708 = vunpack.c.0.s8 %v1707
        %v1709 = vlaneseq
        %v1710 = vshrl.u32 %v1709, 7
        %v1711 = vsub.s32 %v1708, %v1710
        %v1712 = vrot.slane %v1696, %v1711
        %v1714 = vunpack.c.l.s4 1966171168
        %v1715 = vunpack.c.0.s8 %v1714
        %v1716 = vlaneseq
        %v1717 = vshrl.u32 %v1716, 7
        %v1718 = vsub.s32 %v1715, %v1717
        %v1719 = vrot.slane %v1697, %v1718
        %v1721 = vunpack.c.l.s4 1966171168
        %v1722 = vunpack.c.0.s8 %v1721
        %v1723 = vlaneseq
        %v1724 = vshrl.u32 %v1723, 7
        %v1725 = vsub.s32 %v1722, %v1724
        %v1726 = vrot.slane %v1698, %v1725
        %v1727 = vcombine.high %v1705, %v1705
        %v1728 = vcombine.high %v1712, %v1712
        %v1729 = vcombine.high %v1719, %v1719
        %v1730 = vcombine.high %v1726, %v1726
        %v1732 = vunpack.c.l.s4 1966171168
        %v1733 = vunpack.c.0.s8 %v1732
        %v1734 = vlaneseq
        %v1735 = vshrl.u32 %v1734, 7
        %v1736 = vsub.s32 %v1733, %v1735
        %v1737 = vrot.slane %v1429, %v1736
        %v1738 = vcombine.high %v1737, %v1737
        %v1740 = vunpack.c.l.s4 1966171168
        %v1741 = vunpack.c.0.s8 %v1740
        %v1742 = vlaneseq
        %v1743 = vshrl.u32 %v1742, 7
        %v1744 = vsub.s32 %v1741, %v1743
        %v1745 = vrot.slane %v1737, %v1744
        %v1747 = vunpack.c.l.s4 1966171168
        %v1748 = vunpack.c.0.s8 %v1747
        %v1749 = vlaneseq
        %v1750 = vshrl.u32 %v1749, 7
        %v1751 = vsub.s32 %v1748, %v1750
        %v1752 = vrot.slane %v1738, %v1751
        %v1803 = vunpack.c.l.bf16 %v1460
        %v1804 = vunpack.c.l.bf16 %v1474
        %v1805 = vunpack.c.l.bf16 %v1482
        %v1806 = vunpack.c.l.bf16 %v1484
        %v1807 = vunpack.c.l.bf16 %v1467
        %v1808 = vunpack.c.l.bf16 %v1481
        %v1809 = vunpack.c.l.bf16 %v1483
        %v1810 = vunpack.c.l.bf16 %v1485
        %v1811 = vunpack.c.l.bf16 %v1509
        %v1812 = vunpack.c.l.bf16 %v1523
        %v1813 = vunpack.c.l.bf16 %v1531
        %v1814 = vunpack.c.l.bf16 %v1533
        %v1815 = vunpack.c.l.bf16 %v1516
        %v1816 = vunpack.c.l.bf16 %v1530
        %v1817 = vunpack.c.l.bf16 %v1532
        %v1818 = vunpack.c.l.bf16 %v1534
        %v1819 = vunpack.c.l.bf16 %v1558
        %v1820 = vunpack.c.l.bf16 %v1572
        %v1821 = vunpack.c.l.bf16 %v1580
        %v1822 = vunpack.c.l.bf16 %v1582
        %v1823 = vunpack.c.l.bf16 %v1565
        %v1824 = vunpack.c.l.bf16 %v1579
        %v1825 = vunpack.c.l.bf16 %v1581
        %v1826 = vunpack.c.l.bf16 %v1583
        %v1827 = vunpack.c.l.bf16 %v1607
        %v1828 = vunpack.c.l.bf16 %v1621
        %v1829 = vunpack.c.l.bf16 %v1629
        %v1830 = vunpack.c.l.bf16 %v1631
        %v1831 = vunpack.c.l.bf16 %v1614
        %v1832 = vunpack.c.l.bf16 %v1628
        %v1833 = vunpack.c.l.bf16 %v1630
        %v1834 = vunpack.c.l.bf16 %v1632
        %v1835 = vunpack.c.l.bf16 %v1656
        %v1836 = vunpack.c.l.bf16 %v1670
        %v1837 = vunpack.c.l.bf16 %v1678
        %v1838 = vunpack.c.l.bf16 %v1680
        %v1839 = vunpack.c.l.bf16 %v1663
        %v1840 = vunpack.c.l.bf16 %v1677
        %v1841 = vunpack.c.l.bf16 %v1679
        %v1842 = vunpack.c.l.bf16 %v1681
        %v1843 = vunpack.c.l.bf16 %v1705
        %v1844 = vunpack.c.l.bf16 %v1719
        %v1845 = vunpack.c.l.bf16 %v1727
        %v1846 = vunpack.c.l.bf16 %v1729
        %v1847 = vunpack.c.l.bf16 %v1712
        %v1848 = vunpack.c.l.bf16 %v1726
        %v1849 = vunpack.c.l.bf16 %v1728
        %v1850 = vunpack.c.l.bf16 %v1730
        %v1851 = vunpack.c.l.bf16 %v1745
        %v1852 = vunpack.c.l.bf16 %v1752
        %v1853 = vmul.f32 %v1803, 0.75
        %v1854 = vmul.f32 %v1804, 0.75
        %v1855 = vmul.f32 %v1805, 0.75
        %v1856 = vmul.f32 %v1806, 0.75
        %v1857 = vmul.f32 %v1807, 0.75
        %v1858 = vmul.f32 %v1808, 0.75
        %v1859 = vmul.f32 %v1809, 0.75
        %v1860 = vmul.f32 %v1810, 0.75
        %v1861 = vmul.f32 %v1811, 0.75
        %v1862 = vmul.f32 %v1812, 0.75
        %v1863 = vmul.f32 %v1813, 0.75
        %v1864 = vmul.f32 %v1814, 0.75
        %v1865 = vmul.f32 %v1815, 0.75
        %v1866 = vmul.f32 %v1816, 0.75
        %v1867 = vmul.f32 %v1817, 0.75
        %v1868 = vmul.f32 %v1818, 0.75
        %v1869 = vmul.f32 %v1819, 0.75
        %v1870 = vmul.f32 %v1820, 0.75
        %v1871 = vmul.f32 %v1821, 0.75
        %v1872 = vmul.f32 %v1822, 0.75
        %v1873 = vmul.f32 %v1823, 0.75
        %v1874 = vmul.f32 %v1824, 0.75
        %v1875 = vmul.f32 %v1825, 0.75
        %v1876 = vmul.f32 %v1826, 0.75
        %v1877 = vmul.f32 %v1827, 0.75
        %v1878 = vmul.f32 %v1828, 0.75
        %v1879 = vmul.f32 %v1829, 0.75
        %v1880 = vmul.f32 %v1830, 0.75
        %v1881 = vmul.f32 %v1831, 0.75
        %v1882 = vmul.f32 %v1832, 0.75
        %v1883 = vmul.f32 %v1833, 0.75
        %v1884 = vmul.f32 %v1834, 0.75
        %v1885 = vmul.f32 %v1835, 0.75
        %v1886 = vmul.f32 %v1836, 0.75
        %v1887 = vmul.f32 %v1837, 0.75
        %v1888 = vmul.f32 %v1838, 0.75
        %v1889 = vmul.f32 %v1839, 0.75
        %v1890 = vmul.f32 %v1840, 0.75
        %v1891 = vmul.f32 %v1841, 0.75
        %v1892 = vmul.f32 %v1842, 0.75
        %v1893 = vmul.f32 %v1843, 0.75
        %v1894 = vmul.f32 %v1844, 0.75
        %v1895 = vmul.f32 %v1845, 0.75
        %v1896 = vmul.f32 %v1846, 0.75
        %v1897 = vmul.f32 %v1847, 0.75
        %v1898 = vmul.f32 %v1848, 0.75
        %v1899 = vmul.f32 %v1849, 0.75
        %v1900 = vmul.f32 %v1850, 0.75
        %v1901 = vmul.f32 %v1851, 0.75
        %v1902 = vmul.f32 %v1852, 0.75
        %v1903 = vmul.f32 %v1803, 0.25
        %v1904 = vmul.f32 %v1804, 0.25
        %v1905 = vmul.f32 %v1805, 0.25
        %v1906 = vmul.f32 %v1806, 0.25
        %v1907 = vmul.f32 %v1808, 0.25
        %v1908 = vmul.f32 %v1809, 0.25
        %v1909 = vmul.f32 %v1810, 0.25
        %v1910 = vmul.f32 %v1811, 0.25
        %v1911 = vmul.f32 %v1813, 0.25
        %v1912 = vmul.f32 %v1814, 0.25
        %v1913 = vmul.f32 %v1815, 0.25
        %v1914 = vmul.f32 %v1816, 0.25
        %v1915 = vmul.f32 %v1818, 0.25
        %v1916 = vmul.f32 %v1819, 0.25
        %v1917 = vmul.f32 %v1820, 0.25
        %v1918 = vmul.f32 %v1821, 0.25
        %v1919 = vmul.f32 %v1823, 0.25
        %v1920 = vmul.f32 %v1824, 0.25
        %v1921 = vmul.f32 %v1825, 0.25
        %v1922 = vmul.f32 %v1826, 0.25
        %v1923 = vmul.f32 %v1828, 0.25
        %v1924 = vmul.f32 %v1829, 0.25
        %v1925 = vmul.f32 %v1830, 0.25
        %v1926 = vmul.f32 %v1831, 0.25
        %v1927 = vmul.f32 %v1833, 0.25
        %v1928 = vmul.f32 %v1834, 0.25
        %v1929 = vmul.f32 %v1835, 0.25
        %v1930 = vmul.f32 %v1836, 0.25
        %v1931 = vmul.f32 %v1838, 0.25
        %v1932 = vmul.f32 %v1839, 0.25
        %v1933 = vmul.f32 %v1840, 0.25
        %v1934 = vmul.f32 %v1841, 0.25
        %v1935 = vmul.f32 %v1843, 0.25
        %v1936 = vmul.f32 %v1844, 0.25
        %v1937 = vmul.f32 %v1845, 0.25
        %v1938 = vmul.f32 %v1846, 0.25
        %v1939 = vmul.f32 %v1848, 0.25
        %v1940 = vmul.f32 %v1849, 0.25
        %v1941 = vmul.f32 %v1850, 0.25
        %v1942 = vmul.f32 %v1851, 0.25
        %vm1983 = vcmask 1040384
        %vm1984 = vcmask 1042434
        %vm1985 = vmor %vm1983, %vm1984
        %vm1986 = vcmask 1044484
        %vm1987 = vmor %vm1985, %vm1986
        %vm1988 = vcmask 1046534
        %vm1989 = vmor %vm1987, %vm1988
        %v1990 = vrot.slane %v1903, 7
        %v1991 = vrot.slane %v1990, 2
        %v1992 = vrot.slane %v1904, 7
        %v1993 = vsel %vm1989, %v1991, %v1992
        %v1994 = vrot.slane %v1992, 2
        %v1995 = vrot.slane %v1905, 7
        %v1996 = vsel %vm1989, %v1994, %v1995
        %v1997 = vrot.slane %v1995, 2
        %v1998 = vrot.slane %v1906, 7
        %v1999 = vsel %vm1989, %v1997, %v1998
        %v2000 = vrot.slane %v1998, 2
        %v2001 = vrot.slane %v1907, 7
        %v2002 = vrot.slane %v2001, 2
        %v2003 = vrot.slane %v1908, 7
        %v2004 = vsel %vm1989, %v2002, %v2003
        %v2005 = vrot.slane %v2003, 2
        %v2006 = vrot.slane %v1909, 7
        %v2007 = vsel %vm1989, %v2005, %v2006
        %v2008 = vrot.slane %v2006, 2
        %v2009 = vrot.slane %v1910, 7
        %v2010 = vsel %vm1989, %v2008, %v2009
        %v2011 = vrot.slane %v2009, 2
        %v2012 = vrot.slane %v1911, 7
        %v2013 = vrot.slane %v2012, 2
        %v2014 = vrot.slane %v1912, 7
        %v2015 = vsel %vm1989, %v2013, %v2014
        %v2016 = vrot.slane %v2014, 2
        %v2017 = vrot.slane %v1913, 7
        %v2018 = vsel %vm1989, %v2016, %v2017
        %v2019 = vrot.slane %v2017, 2
        %v2020 = vrot.slane %v1914, 7
        %v2021 = vsel %vm1989, %v2019, %v2020
        %v2022 = vrot.slane %v2020, 2
        %v2023 = vrot.slane %v1915, 7
        %v2024 = vrot.slane %v2023, 2
        %v2025 = vrot.slane %v1916, 7
        %v2026 = vsel %vm1989, %v2024, %v2025
        %v2027 = vrot.slane %v2025, 2
        %v2028 = vrot.slane %v1917, 7
        %v2029 = vsel %vm1989, %v2027, %v2028
        %v2030 = vrot.slane %v2028, 2
        %v2031 = vrot.slane %v1918, 7
        %v2032 = vsel %vm1989, %v2030, %v2031
        %v2033 = vrot.slane %v2031, 2
        %v2034 = vrot.slane %v1919, 7
        %v2035 = vrot.slane %v2034, 2
        %v2036 = vrot.slane %v1920, 7
        %v2037 = vsel %vm1989, %v2035, %v2036
        %v2038 = vrot.slane %v2036, 2
        %v2039 = vrot.slane %v1921, 7
        %v2040 = vsel %vm1989, %v2038, %v2039
        %v2041 = vrot.slane %v2039, 2
        %v2042 = vrot.slane %v1922, 7
        %v2043 = vsel %vm1989, %v2041, %v2042
        %v2044 = vrot.slane %v2042, 2
        %v2045 = vrot.slane %v1923, 7
        %v2046 = vrot.slane %v2045, 2
        %v2047 = vrot.slane %v1924, 7
        %v2048 = vsel %vm1989, %v2046, %v2047
        %v2049 = vrot.slane %v2047, 2
        %v2050 = vrot.slane %v1925, 7
        %v2051 = vsel %vm1989, %v2049, %v2050
        %v2052 = vrot.slane %v2050, 2
        %v2053 = vrot.slane %v1926, 7
        %v2054 = vsel %vm1989, %v2052, %v2053
        %v2055 = vrot.slane %v2053, 2
        %v2056 = vrot.slane %v1927, 7
        %v2057 = vrot.slane %v2056, 2
        %v2058 = vrot.slane %v1928, 7
        %v2059 = vsel %vm1989, %v2057, %v2058
        %v2060 = vrot.slane %v2058, 2
        %v2061 = vrot.slane %v1929, 7
        %v2062 = vsel %vm1989, %v2060, %v2061
        %v2063 = vrot.slane %v2061, 2
        %v2064 = vrot.slane %v1930, 7
        %v2065 = vsel %vm1989, %v2063, %v2064
        %v2066 = vrot.slane %v2064, 2
        %v2067 = vrot.slane %v1931, 7
        %v2068 = vrot.slane %v2067, 2
        %v2069 = vrot.slane %v1932, 7
        %v2070 = vsel %vm1989, %v2068, %v2069
        %v2071 = vrot.slane %v2069, 2
        %v2072 = vrot.slane %v1933, 7
        %v2073 = vsel %vm1989, %v2071, %v2072
        %v2074 = vrot.slane %v2072, 2
        %v2075 = vrot.slane %v1934, 7
        %v2076 = vsel %vm1989, %v2074, %v2075
        %v2077 = vrot.slane %v2075, 2
        %v2078 = vrot.slane %v1935, 7
        %v2079 = vrot.slane %v2078, 2
        %v2080 = vrot.slane %v1936, 7
        %v2081 = vsel %vm1989, %v2079, %v2080
        %v2082 = vrot.slane %v2080, 2
        %v2083 = vrot.slane %v1937, 7
        %v2084 = vsel %vm1989, %v2082, %v2083
        %v2085 = vrot.slane %v2083, 2
        %v2086 = vrot.slane %v1938, 7
        %v2087 = vsel %vm1989, %v2085, %v2086
        %v2088 = vrot.slane %v2086, 2
        %v2089 = vrot.slane %v1939, 7
        %v2090 = vrot.slane %v2089, 2
        %v2091 = vrot.slane %v1940, 7
        %v2092 = vsel %vm1989, %v2090, %v2091
        %v2093 = vrot.slane %v2091, 2
        %v2094 = vrot.slane %v1941, 7
        %v2095 = vsel %vm1989, %v2093, %v2094
        %v2096 = vrot.slane %v2094, 2
        %v2097 = vrot.slane %v1942, 7
        %v2098 = vsel %vm1989, %v2096, %v2097
        %v2099 = vrot.slane %v2097, 2
        %v2150 = vadd.f32 %v1853, %v1990
        %v2151 = vadd.f32 %v1854, %v1993
        %v2152 = vadd.f32 %v1855, %v1996
        %v2153 = vadd.f32 %v1856, %v1999
        %v2154 = vadd.f32 %v1857, %v2000
        %v2155 = vadd.f32 %v1858, %v2001
        %v2156 = vadd.f32 %v1859, %v2004
        %v2157 = vadd.f32 %v1860, %v2007
        %v2158 = vadd.f32 %v1861, %v2010
        %v2159 = vadd.f32 %v1862, %v2011
        %v2160 = vadd.f32 %v1863, %v2012
        %v2161 = vadd.f32 %v1864, %v2015
        %v2162 = vadd.f32 %v1865, %v2018
        %v2163 = vadd.f32 %v1866, %v2021
        %v2164 = vadd.f32 %v1867, %v2022
        %v2165 = vadd.f32 %v1868, %v2023
        %v2166 = vadd.f32 %v1869, %v2026
        %v2167 = vadd.f32 %v1870, %v2029
        %v2168 = vadd.f32 %v1871, %v2032
        %v2169 = vadd.f32 %v1872, %v2033
        %v2170 = vadd.f32 %v1873, %v2034
        %v2171 = vadd.f32 %v1874, %v2037
        %v2172 = vadd.f32 %v1875, %v2040
        %v2173 = vadd.f32 %v1876, %v2043
        %v2174 = vadd.f32 %v1877, %v2044
        %v2175 = vadd.f32 %v1878, %v2045
        %v2176 = vadd.f32 %v1879, %v2048
        %v2177 = vadd.f32 %v1880, %v2051
        %v2178 = vadd.f32 %v1881, %v2054
        %v2179 = vadd.f32 %v1882, %v2055
        %v2180 = vadd.f32 %v1883, %v2056
        %v2181 = vadd.f32 %v1884, %v2059
        %v2182 = vadd.f32 %v1885, %v2062
        %v2183 = vadd.f32 %v1886, %v2065
        %v2184 = vadd.f32 %v1887, %v2066
        %v2185 = vadd.f32 %v1888, %v2067
        %v2186 = vadd.f32 %v1889, %v2070
        %v2187 = vadd.f32 %v1890, %v2073
        %v2188 = vadd.f32 %v1891, %v2076
        %v2189 = vadd.f32 %v1892, %v2077
        %v2190 = vadd.f32 %v1893, %v2078
        %v2191 = vadd.f32 %v1894, %v2081
        %v2192 = vadd.f32 %v1895, %v2084
        %v2193 = vadd.f32 %v1896, %v2087
        %v2194 = vadd.f32 %v1897, %v2088
        %v2195 = vadd.f32 %v1898, %v2089
        %v2196 = vadd.f32 %v1899, %v2092
        %v2197 = vadd.f32 %v1900, %v2095
        %v2198 = vadd.f32 %v1901, %v2098
        %v2199 = vadd.f32 %v1902, %v2099
        %v2200 = vmul.f32 %v1807, 0.25
        %v2201 = vmul.f32 %v1812, 0.25
        %v2202 = vmul.f32 %v1817, 0.25
        %v2203 = vmul.f32 %v1822, 0.25
        %v2204 = vmul.f32 %v1827, 0.25
        %v2205 = vmul.f32 %v1832, 0.25
        %v2206 = vmul.f32 %v1837, 0.25
        %v2207 = vmul.f32 %v1842, 0.25
        %v2208 = vmul.f32 %v1847, 0.25
        %v2209 = vmul.f32 %v1852, 0.25
        %v2220 = vrot.slane %v2200, 7
        %v2221 = vsel %vm1989, %v2000, %v2220
        %v2222 = vrot.slane %v2220, 2
        %v2223 = vrot.slane %v2201, 7
        %v2224 = vsel %vm1989, %v2011, %v2223
        %v2225 = vrot.slane %v2223, 2
        %v2226 = vrot.slane %v2202, 7
        %v2227 = vsel %vm1989, %v2022, %v2226
        %v2228 = vrot.slane %v2226, 2
        %v2229 = vrot.slane %v2203, 7
        %v2230 = vsel %vm1989, %v2033, %v2229
        %v2231 = vrot.slane %v2229, 2
        %v2232 = vrot.slane %v2204, 7
        %v2233 = vsel %vm1989, %v2044, %v2232
        %v2234 = vrot.slane %v2232, 2
        %v2235 = vrot.slane %v2205, 7
        %v2236 = vsel %vm1989, %v2055, %v2235
        %v2237 = vrot.slane %v2235, 2
        %v2238 = vrot.slane %v2206, 7
        %v2239 = vsel %vm1989, %v2066, %v2238
        %v2240 = vrot.slane %v2238, 2
        %v2241 = vrot.slane %v2207, 7
        %v2242 = vsel %vm1989, %v2077, %v2241
        %v2243 = vrot.slane %v2241, 2
        %v2244 = vrot.slane %v2208, 7
        %v2245 = vsel %vm1989, %v2088, %v2244
        %v2246 = vrot.slane %v2244, 2
        %v2247 = vrot.slane %v2209, 7
        %v2248 = vsel %vm1989, %v2099, %v2247
        %v2249 = vrot.slane %v2247, 2
        %v2280 = vadd.f32 %v1853, %v1992
        %v2281 = vadd.f32 %v1854, %v1996
        %v2282 = vadd.f32 %v1855, %v1999
        %v2283 = vadd.f32 %v1856, %v2221
        %v2284 = vadd.f32 %v1857, %v2222
        %v2285 = vadd.f32 %v1858, %v2003
        %v2286 = vadd.f32 %v1859, %v2007
        %v2287 = vadd.f32 %v1860, %v2010
        %v2288 = vadd.f32 %v1861, %v2224
        %v2289 = vadd.f32 %v1862, %v2225
        %v2290 = vadd.f32 %v1863, %v2014
        %v2291 = vadd.f32 %v1864, %v2018
        %v2292 = vadd.f32 %v1865, %v2021
        %v2293 = vadd.f32 %v1866, %v2227
        %v2294 = vadd.f32 %v1867, %v2228
        %v2295 = vadd.f32 %v1868, %v2025
        %v2296 = vadd.f32 %v1869, %v2029
        %v2297 = vadd.f32 %v1870, %v2032
        %v2298 = vadd.f32 %v1871, %v2230
        %v2299 = vadd.f32 %v1872, %v2231
        %v2300 = vadd.f32 %v1873, %v2036
        %v2301 = vadd.f32 %v1874, %v2040
        %v2302 = vadd.f32 %v1875, %v2043
        %v2303 = vadd.f32 %v1876, %v2233
        %v2304 = vadd.f32 %v1877, %v2234
        %v2305 = vadd.f32 %v1878, %v2047
        %v2306 = vadd.f32 %v1879, %v2051
        %v2307 = vadd.f32 %v1880, %v2054
        %v2308 = vadd.f32 %v1881, %v2236
        %v2309 = vadd.f32 %v1882, %v2237
        %v2310 = vadd.f32 %v1883, %v2058
        %v2311 = vadd.f32 %v1884, %v2062
        %v2312 = vadd.f32 %v1885, %v2065
        %v2313 = vadd.f32 %v1886, %v2239
        %v2314 = vadd.f32 %v1887, %v2240
        %v2315 = vadd.f32 %v1888, %v2069
        %v2316 = vadd.f32 %v1889, %v2073
        %v2317 = vadd.f32 %v1890, %v2076
        %v2318 = vadd.f32 %v1891, %v2242
        %v2319 = vadd.f32 %v1892, %v2243
        %v2320 = vadd.f32 %v1893, %v2080
        %v2321 = vadd.f32 %v1894, %v2084
        %v2322 = vadd.f32 %v1895, %v2087
        %v2323 = vadd.f32 %v1896, %v2245
        %v2324 = vadd.f32 %v1897, %v2246
        %v2325 = vadd.f32 %v1898, %v2091
        %v2326 = vadd.f32 %v1899, %v2095
        %v2327 = vadd.f32 %v1900, %v2098
        %v2328 = vadd.f32 %v1901, %v2248
        %v2329 = vadd.f32 %v1902, %v2249
        %v2381 = vunpack.c.l.s4 1966171168
        %v2382 = vunpack.c.0.s8 %v2381
        %v2383 = vlaneseq
        %v2384 = vshrl.u32 %v2383, 7
        %v2385 = vsub.s32 %v2382, %v2384
        %v2386 = vrot.slane %v2150, %v2385
        %v2387 = vcombine.high %v2386, %v2386
        %v2389 = vunpack.c.l.s4 1966171168
        %v2390 = vunpack.c.0.s8 %v2389
        %v2391 = vlaneseq
        %v2392 = vshrl.u32 %v2391, 7
        %v2393 = vsub.s32 %v2390, %v2392
        %v2394 = vrot.slane %v2151, %v2393
        %v2395 = vcombine.high %v2394, %v2394
        %v2397 = vunpack.c.l.s4 1966171168
        %v2398 = vunpack.c.0.s8 %v2397
        %v2399 = vlaneseq
        %v2400 = vshrl.u32 %v2399, 7
        %v2401 = vsub.s32 %v2398, %v2400
        %v2402 = vrot.slane %v2152, %v2401
        %v2403 = vcombine.high %v2402, %v2402
        %v2405 = vunpack.c.l.s4 1966171168
        %v2406 = vunpack.c.0.s8 %v2405
        %v2407 = vlaneseq
        %v2408 = vshrl.u32 %v2407, 7
        %v2409 = vsub.s32 %v2406, %v2408
        %v2410 = vrot.slane %v2153, %v2409
        %v2411 = vcombine.high %v2410, %v2410
        %v2413 = vunpack.c.l.s4 1966171168
        %v2414 = vunpack.c.0.s8 %v2413
        %v2415 = vlaneseq
        %v2416 = vshrl.u32 %v2415, 7
        %v2417 = vsub.s32 %v2414, %v2416
        %v2418 = vrot.slane %v2154, %v2417
        %v2420 = vunpack.c.l.s4 1966171168
        %v2421 = vunpack.c.0.s8 %v2420
        %v2422 = vlaneseq
        %v2423 = vshrl.u32 %v2422, 7
        %v2424 = vsub.s32 %v2421, %v2423
        %v2425 = vrot.slane %v2155, %v2424
        %v2426 = vcombine.high %v2425, %v2425
        %v2428 = vunpack.c.l.s4 1966171168
        %v2429 = vunpack.c.0.s8 %v2428
        %v2430 = vlaneseq
        %v2431 = vshrl.u32 %v2430, 7
        %v2432 = vsub.s32 %v2429, %v2431
        %v2433 = vrot.slane %v2156, %v2432
        %v2434 = vcombine.high %v2433, %v2433
        %v2436 = vunpack.c.l.s4 1966171168
        %v2437 = vunpack.c.0.s8 %v2436
        %v2438 = vlaneseq
        %v2439 = vshrl.u32 %v2438, 7
        %v2440 = vsub.s32 %v2437, %v2439
        %v2441 = vrot.slane %v2157, %v2440
        %v2442 = vcombine.high %v2441, %v2441
        %v2444 = vunpack.c.l.s4 1966171168
        %v2445 = vunpack.c.0.s8 %v2444
        %v2446 = vlaneseq
        %v2447 = vshrl.u32 %v2446, 7
        %v2448 = vsub.s32 %v2445, %v2447
        %v2449 = vrot.slane %v2158, %v2448
        %v2450 = vcombine.high %v2449, %v2449
        %v2452 = vunpack.c.l.s4 1966171168
        %v2453 = vunpack.c.0.s8 %v2452
        %v2454 = vlaneseq
        %v2455 = vshrl.u32 %v2454, 7
        %v2456 = vsub.s32 %v2453, %v2455
        %v2457 = vrot.slane %v2159, %v2456
        %v2459 = vunpack.c.l.s4 1966171168
        %v2460 = vunpack.c.0.s8 %v2459
        %v2461 = vlaneseq
        %v2462 = vshrl.u32 %v2461, 7
        %v2463 = vsub.s32 %v2460, %v2462
        %v2464 = vrot.slane %v2160, %v2463
        %v2465 = vcombine.high %v2464, %v2464
        %v2467 = vunpack.c.l.s4 1966171168
        %v2468 = vunpack.c.0.s8 %v2467
        %v2469 = vlaneseq
        %v2470 = vshrl.u32 %v2469, 7
        %v2471 = vsub.s32 %v2468, %v2470
        %v2472 = vrot.slane %v2161, %v2471
        %v2473 = vcombine.high %v2472, %v2472
        %v2475 = vunpack.c.l.s4 1966171168
        %v2476 = vunpack.c.0.s8 %v2475
        %v2477 = vlaneseq
        %v2478 = vshrl.u32 %v2477, 7
        %v2479 = vsub.s32 %v2476, %v2478
        %v2480 = vrot.slane %v2162, %v2479
        %v2481 = vcombine.high %v2480, %v2480
        %v2483 = vunpack.c.l.s4 1966171168
        %v2484 = vunpack.c.0.s8 %v2483
        %v2485 = vlaneseq
        %v2486 = vshrl.u32 %v2485, 7
        %v2487 = vsub.s32 %v2484, %v2486
        %v2488 = vrot.slane %v2163, %v2487
        %v2489 = vcombine.high %v2488, %v2488
        %v2491 = vunpack.c.l.s4 1966171168
        %v2492 = vunpack.c.0.s8 %v2491
        %v2493 = vlaneseq
        %v2494 = vshrl.u32 %v2493, 7
        %v2495 = vsub.s32 %v2492, %v2494
        %v2496 = vrot.slane %v2164, %v2495
        %v2498 = vunpack.c.l.s4 1966171168
        %v2499 = vunpack.c.0.s8 %v2498
        %v2500 = vlaneseq
        %v2501 = vshrl.u32 %v2500, 7
        %v2502 = vsub.s32 %v2499, %v2501
        %v2503 = vrot.slane %v2165, %v2502
        %v2504 = vcombine.high %v2503, %v2503
        %v2506 = vunpack.c.l.s4 1966171168
        %v2507 = vunpack.c.0.s8 %v2506
        %v2508 = vlaneseq
        %v2509 = vshrl.u32 %v2508, 7
        %v2510 = vsub.s32 %v2507, %v2509
        %v2511 = vrot.slane %v2166, %v2510
        %v2512 = vcombine.high %v2511, %v2511
        %v2514 = vunpack.c.l.s4 1966171168
        %v2515 = vunpack.c.0.s8 %v2514
        %v2516 = vlaneseq
        %v2517 = vshrl.u32 %v2516, 7
        %v2518 = vsub.s32 %v2515, %v2517
        %v2519 = vrot.slane %v2167, %v2518
        %v2520 = vcombine.high %v2519, %v2519
        %v2522 = vunpack.c.l.s4 1966171168
        %v2523 = vunpack.c.0.s8 %v2522
        %v2524 = vlaneseq
        %v2525 = vshrl.u32 %v2524, 7
        %v2526 = vsub.s32 %v2523, %v2525
        %v2527 = vrot.slane %v2168, %v2526
        %v2528 = vcombine.high %v2527, %v2527
        %v2530 = vunpack.c.l.s4 1966171168
        %v2531 = vunpack.c.0.s8 %v2530
        %v2532 = vlaneseq
        %v2533 = vshrl.u32 %v2532, 7
        %v2534 = vsub.s32 %v2531, %v2533
        %v2535 = vrot.slane %v2169, %v2534
        %v2537 = vunpack.c.l.s4 1966171168
        %v2538 = vunpack.c.0.s8 %v2537
        %v2539 = vlaneseq
        %v2540 = vshrl.u32 %v2539, 7
        %v2541 = vsub.s32 %v2538, %v2540
        %v2542 = vrot.slane %v2170, %v2541
        %v2543 = vcombine.high %v2542, %v2542
        %v2545 = vunpack.c.l.s4 1966171168
        %v2546 = vunpack.c.0.s8 %v2545
        %v2547 = vlaneseq
        %v2548 = vshrl.u32 %v2547, 7
        %v2549 = vsub.s32 %v2546, %v2548
        %v2550 = vrot.slane %v2171, %v2549
        %v2551 = vcombine.high %v2550, %v2550
        %v2553 = vunpack.c.l.s4 1966171168
        %v2554 = vunpack.c.0.s8 %v2553
        %v2555 = vlaneseq
        %v2556 = vshrl.u32 %v2555, 7
        %v2557 = vsub.s32 %v2554, %v2556
        %v2558 = vrot.slane %v2172, %v2557
        %v2559 = vcombine.high %v2558, %v2558
        %v2561 = vunpack.c.l.s4 1966171168
        %v2562 = vunpack.c.0.s8 %v2561
        %v2563 = vlaneseq
        %v2564 = vshrl.u32 %v2563, 7
        %v2565 = vsub.s32 %v2562, %v2564
        %v2566 = vrot.slane %v2173, %v2565
        %v2567 = vcombine.high %v2566, %v2566
        %v2569 = vunpack.c.l.s4 1966171168
        %v2570 = vunpack.c.0.s8 %v2569
        %v2571 = vlaneseq
        %v2572 = vshrl.u32 %v2571, 7
        %v2573 = vsub.s32 %v2570, %v2572
        %v2574 = vrot.slane %v2174, %v2573
        %v2576 = vunpack.c.l.s4 1966171168
        %v2577 = vunpack.c.0.s8 %v2576
        %v2578 = vlaneseq
        %v2579 = vshrl.u32 %v2578, 7
        %v2580 = vsub.s32 %v2577, %v2579
        %v2581 = vrot.slane %v2175, %v2580
        %v2582 = vcombine.high %v2581, %v2581
        %v2584 = vunpack.c.l.s4 1966171168
        %v2585 = vunpack.c.0.s8 %v2584
        %v2586 = vlaneseq
        %v2587 = vshrl.u32 %v2586, 7
        %v2588 = vsub.s32 %v2585, %v2587
        %v2589 = vrot.slane %v2176, %v2588
        %v2590 = vcombine.high %v2589, %v2589
        %v2592 = vunpack.c.l.s4 1966171168
        %v2593 = vunpack.c.0.s8 %v2592
        %v2594 = vlaneseq
        %v2595 = vshrl.u32 %v2594, 7
        %v2596 = vsub.s32 %v2593, %v2595
        %v2597 = vrot.slane %v2177, %v2596
        %v2598 = vcombine.high %v2597, %v2597
        %v2600 = vunpack.c.l.s4 1966171168
        %v2601 = vunpack.c.0.s8 %v2600
        %v2602 = vlaneseq
        %v2603 = vshrl.u32 %v2602, 7
        %v2604 = vsub.s32 %v2601, %v2603
        %v2605 = vrot.slane %v2178, %v2604
        %v2606 = vcombine.high %v2605, %v2605
        %v2608 = vunpack.c.l.s4 1966171168
        %v2609 = vunpack.c.0.s8 %v2608
        %v2610 = vlaneseq
        %v2611 = vshrl.u32 %v2610, 7
        %v2612 = vsub.s32 %v2609, %v2611
        %v2613 = vrot.slane %v2179, %v2612
        %v2615 = vunpack.c.l.s4 1966171168
        %v2616 = vunpack.c.0.s8 %v2615
        %v2617 = vlaneseq
        %v2618 = vshrl.u32 %v2617, 7
        %v2619 = vsub.s32 %v2616, %v2618
        %v2620 = vrot.slane %v2180, %v2619
        %v2621 = vcombine.high %v2620, %v2620
        %v2623 = vunpack.c.l.s4 1966171168
        %v2624 = vunpack.c.0.s8 %v2623
        %v2625 = vlaneseq
        %v2626 = vshrl.u32 %v2625, 7
        %v2627 = vsub.s32 %v2624, %v2626
        %v2628 = vrot.slane %v2181, %v2627
        %v2629 = vcombine.high %v2628, %v2628
        %v2631 = vunpack.c.l.s4 1966171168
        %v2632 = vunpack.c.0.s8 %v2631
        %v2633 = vlaneseq
        %v2634 = vshrl.u32 %v2633, 7
        %v2635 = vsub.s32 %v2632, %v2634
        %v2636 = vrot.slane %v2182, %v2635
        %v2637 = vcombine.high %v2636, %v2636
        %v2639 = vunpack.c.l.s4 1966171168
        %v2640 = vunpack.c.0.s8 %v2639
        %v2641 = vlaneseq
        %v2642 = vshrl.u32 %v2641, 7
        %v2643 = vsub.s32 %v2640, %v2642
        %v2644 = vrot.slane %v2183, %v2643
        %v2645 = vcombine.high %v2644, %v2644
        %v2647 = vunpack.c.l.s4 1966171168
        %v2648 = vunpack.c.0.s8 %v2647
        %v2649 = vlaneseq
        %v2650 = vshrl.u32 %v2649, 7
        %v2651 = vsub.s32 %v2648, %v2650
        %v2652 = vrot.slane %v2184, %v2651
        %v2654 = vunpack.c.l.s4 1966171168
        %v2655 = vunpack.c.0.s8 %v2654
        %v2656 = vlaneseq
        %v2657 = vshrl.u32 %v2656, 7
        %v2658 = vsub.s32 %v2655, %v2657
        %v2659 = vrot.slane %v2185, %v2658
        %v2660 = vcombine.high %v2659, %v2659
        %v2662 = vunpack.c.l.s4 1966171168
        %v2663 = vunpack.c.0.s8 %v2662
        %v2664 = vlaneseq
        %v2665 = vshrl.u32 %v2664, 7
        %v2666 = vsub.s32 %v2663, %v2665
        %v2667 = vrot.slane %v2186, %v2666
        %v2668 = vcombine.high %v2667, %v2667
        %v2670 = vunpack.c.l.s4 1966171168
        %v2671 = vunpack.c.0.s8 %v2670
        %v2672 = vlaneseq
        %v2673 = vshrl.u32 %v2672, 7
        %v2674 = vsub.s32 %v2671, %v2673
        %v2675 = vrot.slane %v2187, %v2674
        %v2676 = vcombine.high %v2675, %v2675
        %v2678 = vunpack.c.l.s4 1966171168
        %v2679 = vunpack.c.0.s8 %v2678
        %v2680 = vlaneseq
        %v2681 = vshrl.u32 %v2680, 7
        %v2682 = vsub.s32 %v2679, %v2681
        %v2683 = vrot.slane %v2188, %v2682
        %v2684 = vcombine.high %v2683, %v2683
        %v2686 = vunpack.c.l.s4 1966171168
        %v2687 = vunpack.c.0.s8 %v2686
        %v2688 = vlaneseq
        %v2689 = vshrl.u32 %v2688, 7
        %v2690 = vsub.s32 %v2687, %v2689
        %v2691 = vrot.slane %v2189, %v2690
        %v2693 = vunpack.c.l.s4 1966171168
        %v2694 = vunpack.c.0.s8 %v2693
        %v2695 = vlaneseq
        %v2696 = vshrl.u32 %v2695, 7
        %v2697 = vsub.s32 %v2694, %v2696
        %v2698 = vrot.slane %v2190, %v2697
        %v2699 = vcombine.high %v2698, %v2698
        %v2701 = vunpack.c.l.s4 1966171168
        %v2702 = vunpack.c.0.s8 %v2701
        %v2703 = vlaneseq
        %v2704 = vshrl.u32 %v2703, 7
        %v2705 = vsub.s32 %v2702, %v2704
        %v2706 = vrot.slane %v2191, %v2705
        %v2707 = vcombine.high %v2706, %v2706
        %v2709 = vunpack.c.l.s4 1966171168
        %v2710 = vunpack.c.0.s8 %v2709
        %v2711 = vlaneseq
        %v2712 = vshrl.u32 %v2711, 7
        %v2713 = vsub.s32 %v2710, %v2712
        %v2714 = vrot.slane %v2192, %v2713
        %v2715 = vcombine.high %v2714, %v2714
        %v2717 = vunpack.c.l.s4 1966171168
        %v2718 = vunpack.c.0.s8 %v2717
        %v2719 = vlaneseq
        %v2720 = vshrl.u32 %v2719, 7
        %v2721 = vsub.s32 %v2718, %v2720
        %v2722 = vrot.slane %v2193, %v2721
        %v2723 = vcombine.high %v2722, %v2722
        %v2725 = vunpack.c.l.s4 1966171168
        %v2726 = vunpack.c.0.s8 %v2725
        %v2727 = vlaneseq
        %v2728 = vshrl.u32 %v2727, 7
        %v2729 = vsub.s32 %v2726, %v2728
        %v2730 = vrot.slane %v2194, %v2729
        %v2732 = vunpack.c.l.s4 1966171168
        %v2733 = vunpack.c.0.s8 %v2732
        %v2734 = vlaneseq
        %v2735 = vshrl.u32 %v2734, 7
        %v2736 = vsub.s32 %v2733, %v2735
        %v2737 = vrot.slane %v2195, %v2736
        %v2738 = vcombine.high %v2737, %v2737
        %v2740 = vunpack.c.l.s4 1966171168
        %v2741 = vunpack.c.0.s8 %v2740
        %v2742 = vlaneseq
        %v2743 = vshrl.u32 %v2742, 7
        %v2744 = vsub.s32 %v2741, %v2743
        %v2745 = vrot.slane %v2196, %v2744
        %v2746 = vcombine.high %v2745, %v2745
        %v2748 = vunpack.c.l.s4 1966171168
        %v2749 = vunpack.c.0.s8 %v2748
        %v2750 = vlaneseq
        %v2751 = vshrl.u32 %v2750, 7
        %v2752 = vsub.s32 %v2749, %v2751
        %v2753 = vrot.slane %v2197, %v2752
        %v2754 = vcombine.high %v2753, %v2753
        %v2756 = vunpack.c.l.s4 1966171168
        %v2757 = vunpack.c.0.s8 %v2756
        %v2758 = vlaneseq
        %v2759 = vshrl.u32 %v2758, 7
        %v2760 = vsub.s32 %v2757, %v2759
        %v2761 = vrot.slane %v2198, %v2760
        %v2762 = vcombine.high %v2761, %v2761
        %v2764 = vunpack.c.l.s4 1966171168
        %v2765 = vunpack.c.0.s8 %v2764
        %v2766 = vlaneseq
        %v2767 = vshrl.u32 %v2766, 7
        %v2768 = vsub.s32 %v2765, %v2767
        %v2769 = vrot.slane %v2199, %v2768
        %v2901 = vunpack.c.l.s4 1966171168
        %v2902 = vunpack.c.0.s8 %v2901
        %v2903 = vlaneseq
        %v2904 = vshrl.u32 %v2903, 7
        %v2905 = vsub.s32 %v2902, %v2904
        %v2906 = vrot.slane %v2280, %v2905
        %v2907 = vcombine.high %v2906, %v2906
        %v2909 = vunpack.c.l.s4 1966171168
        %v2910 = vunpack.c.0.s8 %v2909
        %v2911 = vlaneseq
        %v2912 = vshrl.u32 %v2911, 7
        %v2913 = vsub.s32 %v2910, %v2912
        %v2914 = vrot.slane %v2281, %v2913
        %v2915 = vcombine.high %v2914, %v2914
        %v2917 = vunpack.c.l.s4 1966171168
        %v2918 = vunpack.c.0.s8 %v2917
        %v2919 = vlaneseq
        %v2920 = vshrl.u32 %v2919, 7
        %v2921 = vsub.s32 %v2918, %v2920
        %v2922 = vrot.slane %v2282, %v2921
        %v2923 = vcombine.high %v2922, %v2922
        %v2925 = vunpack.c.l.s4 1966171168
        %v2926 = vunpack.c.0.s8 %v2925
        %v2927 = vlaneseq
        %v2928 = vshrl.u32 %v2927, 7
        %v2929 = vsub.s32 %v2926, %v2928
        %v2930 = vrot.slane %v2283, %v2929
        %v2931 = vcombine.high %v2930, %v2930
        %v2933 = vunpack.c.l.s4 1966171168
        %v2934 = vunpack.c.0.s8 %v2933
        %v2935 = vlaneseq
        %v2936 = vshrl.u32 %v2935, 7
        %v2937 = vsub.s32 %v2934, %v2936
        %v2938 = vrot.slane %v2284, %v2937
        %v2940 = vunpack.c.l.s4 1966171168
        %v2941 = vunpack.c.0.s8 %v2940
        %v2942 = vlaneseq
        %v2943 = vshrl.u32 %v2942, 7
        %v2944 = vsub.s32 %v2941, %v2943
        %v2945 = vrot.slane %v2285, %v2944
        %v2946 = vcombine.high %v2945, %v2945
        %v2948 = vunpack.c.l.s4 1966171168
        %v2949 = vunpack.c.0.s8 %v2948
        %v2950 = vlaneseq
        %v2951 = vshrl.u32 %v2950, 7
        %v2952 = vsub.s32 %v2949, %v2951
        %v2953 = vrot.slane %v2286, %v2952
        %v2954 = vcombine.high %v2953, %v2953
        %v2956 = vunpack.c.l.s4 1966171168
        %v2957 = vunpack.c.0.s8 %v2956
        %v2958 = vlaneseq
        %v2959 = vshrl.u32 %v2958, 7
        %v2960 = vsub.s32 %v2957, %v2959
        %v2961 = vrot.slane %v2287, %v2960
        %v2962 = vcombine.high %v2961, %v2961
        %v2964 = vunpack.c.l.s4 1966171168
        %v2965 = vunpack.c.0.s8 %v2964
        %v2966 = vlaneseq
        %v2967 = vshrl.u32 %v2966, 7
        %v2968 = vsub.s32 %v2965, %v2967
        %v2969 = vrot.slane %v2288, %v2968
        %v2970 = vcombine.high %v2969, %v2969
        %v2972 = vunpack.c.l.s4 1966171168
        %v2973 = vunpack.c.0.s8 %v2972
        %v2974 = vlaneseq
        %v2975 = vshrl.u32 %v2974, 7
        %v2976 = vsub.s32 %v2973, %v2975
        %v2977 = vrot.slane %v2289, %v2976
        %v2979 = vunpack.c.l.s4 1966171168
        %v2980 = vunpack.c.0.s8 %v2979
        %v2981 = vlaneseq
        %v2982 = vshrl.u32 %v2981, 7
        %v2983 = vsub.s32 %v2980, %v2982
        %v2984 = vrot.slane %v2290, %v2983
        %v2985 = vcombine.high %v2984, %v2984
        %v2987 = vunpack.c.l.s4 1966171168
        %v2988 = vunpack.c.0.s8 %v2987
        %v2989 = vlaneseq
        %v2990 = vshrl.u32 %v2989, 7
        %v2991 = vsub.s32 %v2988, %v2990
        %v2992 = vrot.slane %v2291, %v2991
        %v2993 = vcombine.high %v2992, %v2992
        %v2995 = vunpack.c.l.s4 1966171168
        %v2996 = vunpack.c.0.s8 %v2995
        %v2997 = vlaneseq
        %v2998 = vshrl.u32 %v2997, 7
        %v2999 = vsub.s32 %v2996, %v2998
        %v3000 = vrot.slane %v2292, %v2999
        %v3001 = vcombine.high %v3000, %v3000
        %v3003 = vunpack.c.l.s4 1966171168
        %v3004 = vunpack.c.0.s8 %v3003
        %v3005 = vlaneseq
        %v3006 = vshrl.u32 %v3005, 7
        %v3007 = vsub.s32 %v3004, %v3006
        %v3008 = vrot.slane %v2293, %v3007
        %v3009 = vcombine.high %v3008, %v3008
        %v3011 = vunpack.c.l.s4 1966171168
        %v3012 = vunpack.c.0.s8 %v3011
        %v3013 = vlaneseq
        %v3014 = vshrl.u32 %v3013, 7
        %v3015 = vsub.s32 %v3012, %v3014
        %v3016 = vrot.slane %v2294, %v3015
        %v3018 = vunpack.c.l.s4 1966171168
        %v3019 = vunpack.c.0.s8 %v3018
        %v3020 = vlaneseq
        %v3021 = vshrl.u32 %v3020, 7
        %v3022 = vsub.s32 %v3019, %v3021
        %v3023 = vrot.slane %v2295, %v3022
        %v3024 = vcombine.high %v3023, %v3023
        %v3026 = vunpack.c.l.s4 1966171168
        %v3027 = vunpack.c.0.s8 %v3026
        %v3028 = vlaneseq
        %v3029 = vshrl.u32 %v3028, 7
        %v3030 = vsub.s32 %v3027, %v3029
        %v3031 = vrot.slane %v2296, %v3030
        %v3032 = vcombine.high %v3031, %v3031
        %v3034 = vunpack.c.l.s4 1966171168
        %v3035 = vunpack.c.0.s8 %v3034
        %v3036 = vlaneseq
        %v3037 = vshrl.u32 %v3036, 7
        %v3038 = vsub.s32 %v3035, %v3037
        %v3039 = vrot.slane %v2297, %v3038
        %v3040 = vcombine.high %v3039, %v3039
        %v3042 = vunpack.c.l.s4 1966171168
        %v3043 = vunpack.c.0.s8 %v3042
        %v3044 = vlaneseq
        %v3045 = vshrl.u32 %v3044, 7
        %v3046 = vsub.s32 %v3043, %v3045
        %v3047 = vrot.slane %v2298, %v3046
        %v3048 = vcombine.high %v3047, %v3047
        %v3050 = vunpack.c.l.s4 1966171168
        %v3051 = vunpack.c.0.s8 %v3050
        %v3052 = vlaneseq
        %v3053 = vshrl.u32 %v3052, 7
        %v3054 = vsub.s32 %v3051, %v3053
        %v3055 = vrot.slane %v2299, %v3054
        %v3057 = vunpack.c.l.s4 1966171168
        %v3058 = vunpack.c.0.s8 %v3057
        %v3059 = vlaneseq
        %v3060 = vshrl.u32 %v3059, 7
        %v3061 = vsub.s32 %v3058, %v3060
        %v3062 = vrot.slane %v2300, %v3061
        %v3063 = vcombine.high %v3062, %v3062
        %v3065 = vunpack.c.l.s4 1966171168
        %v3066 = vunpack.c.0.s8 %v3065
        %v3067 = vlaneseq
        %v3068 = vshrl.u32 %v3067, 7
        %v3069 = vsub.s32 %v3066, %v3068
        %v3070 = vrot.slane %v2301, %v3069
        %v3071 = vcombine.high %v3070, %v3070
        %v3073 = vunpack.c.l.s4 1966171168
        %v3074 = vunpack.c.0.s8 %v3073
        %v3075 = vlaneseq
        %v3076 = vshrl.u32 %v3075, 7
        %v3077 = vsub.s32 %v3074, %v3076
        %v3078 = vrot.slane %v2302, %v3077
        %v3079 = vcombine.high %v3078, %v3078
        %v3081 = vunpack.c.l.s4 1966171168
        %v3082 = vunpack.c.0.s8 %v3081
        %v3083 = vlaneseq
        %v3084 = vshrl.u32 %v3083, 7
        %v3085 = vsub.s32 %v3082, %v3084
        %v3086 = vrot.slane %v2303, %v3085
        %v3087 = vcombine.high %v3086, %v3086
        %v3089 = vunpack.c.l.s4 1966171168
        %v3090 = vunpack.c.0.s8 %v3089
        %v3091 = vlaneseq
        %v3092 = vshrl.u32 %v3091, 7
        %v3093 = vsub.s32 %v3090, %v3092
        %v3094 = vrot.slane %v2304, %v3093
        %v3096 = vunpack.c.l.s4 1966171168
        %v3097 = vunpack.c.0.s8 %v3096
        %v3098 = vlaneseq
        %v3099 = vshrl.u32 %v3098, 7
        %v3100 = vsub.s32 %v3097, %v3099
        %v3101 = vrot.slane %v2305, %v3100
        %v3102 = vcombine.high %v3101, %v3101
        %v3104 = vunpack.c.l.s4 1966171168
        %v3105 = vunpack.c.0.s8 %v3104
        %v3106 = vlaneseq
        %v3107 = vshrl.u32 %v3106, 7
        %v3108 = vsub.s32 %v3105, %v3107
        %v3109 = vrot.slane %v2306, %v3108
        %v3110 = vcombine.high %v3109, %v3109
        %v3112 = vunpack.c.l.s4 1966171168
        %v3113 = vunpack.c.0.s8 %v3112
        %v3114 = vlaneseq
        %v3115 = vshrl.u32 %v3114, 7
        %v3116 = vsub.s32 %v3113, %v3115
        %v3117 = vrot.slane %v2307, %v3116
        %v3118 = vcombine.high %v3117, %v3117
        %v3120 = vunpack.c.l.s4 1966171168
        %v3121 = vunpack.c.0.s8 %v3120
        %v3122 = vlaneseq
        %v3123 = vshrl.u32 %v3122, 7
        %v3124 = vsub.s32 %v3121, %v3123
        %v3125 = vrot.slane %v2308, %v3124
        %v3126 = vcombine.high %v3125, %v3125
        %v3128 = vunpack.c.l.s4 1966171168
        %v3129 = vunpack.c.0.s8 %v3128
        %v3130 = vlaneseq
        %v3131 = vshrl.u32 %v3130, 7
        %v3132 = vsub.s32 %v3129, %v3131
        %v3133 = vrot.slane %v2309, %v3132
        %v3135 = vunpack.c.l.s4 1966171168
        %v3136 = vunpack.c.0.s8 %v3135
        %v3137 = vlaneseq
        %v3138 = vshrl.u32 %v3137, 7
        %v3139 = vsub.s32 %v3136, %v3138
        %v3140 = vrot.slane %v2310, %v3139
        %v3141 = vcombine.high %v3140, %v3140
        %v3143 = vunpack.c.l.s4 1966171168
        %v3144 = vunpack.c.0.s8 %v3143
        %v3145 = vlaneseq
        %v3146 = vshrl.u32 %v3145, 7
        %v3147 = vsub.s32 %v3144, %v3146
        %v3148 = vrot.slane %v2311, %v3147
        %v3149 = vcombine.high %v3148, %v3148
        %v3151 = vunpack.c.l.s4 1966171168
        %v3152 = vunpack.c.0.s8 %v3151
        %v3153 = vlaneseq
        %v3154 = vshrl.u32 %v3153, 7
        %v3155 = vsub.s32 %v3152, %v3154
        %v3156 = vrot.slane %v2312, %v3155
        %v3157 = vcombine.high %v3156, %v3156
        %v3159 = vunpack.c.l.s4 1966171168
        %v3160 = vunpack.c.0.s8 %v3159
        %v3161 = vlaneseq
        %v3162 = vshrl.u32 %v3161, 7
        %v3163 = vsub.s32 %v3160, %v3162
        %v3164 = vrot.slane %v2313, %v3163
        %v3165 = vcombine.high %v3164, %v3164
        %v3167 = vunpack.c.l.s4 1966171168
        %v3168 = vunpack.c.0.s8 %v3167
        %v3169 = vlaneseq
        %v3170 = vshrl.u32 %v3169, 7
        %v3171 = vsub.s32 %v3168, %v3170
        %v3172 = vrot.slane %v2314, %v3171
        %v3174 = vunpack.c.l.s4 1966171168
        %v3175 = vunpack.c.0.s8 %v3174
        %v3176 = vlaneseq
        %v3177 = vshrl.u32 %v3176, 7
        %v3178 = vsub.s32 %v3175, %v3177
        %v3179 = vrot.slane %v2315, %v3178
        %v3180 = vcombine.high %v3179, %v3179
        %v3182 = vunpack.c.l.s4 1966171168
        %v3183 = vunpack.c.0.s8 %v3182
        %v3184 = vlaneseq
        %v3185 = vshrl.u32 %v3184, 7
        %v3186 = vsub.s32 %v3183, %v3185
        %v3187 = vrot.slane %v2316, %v3186
        %v3188 = vcombine.high %v3187, %v3187
        %v3190 = vunpack.c.l.s4 1966171168
        %v3191 = vunpack.c.0.s8 %v3190
        %v3192 = vlaneseq
        %v3193 = vshrl.u32 %v3192, 7
        %v3194 = vsub.s32 %v3191, %v3193
        %v3195 = vrot.slane %v2317, %v3194
        %v3196 = vcombine.high %v3195, %v3195
        %v3198 = vunpack.c.l.s4 1966171168
        %v3199 = vunpack.c.0.s8 %v3198
        %v3200 = vlaneseq
        %v3201 = vshrl.u32 %v3200, 7
        %v3202 = vsub.s32 %v3199, %v3201
        %v3203 = vrot.slane %v2318, %v3202
        %v3204 = vcombine.high %v3203, %v3203
        %v3206 = vunpack.c.l.s4 1966171168
        %v3207 = vunpack.c.0.s8 %v3206
        %v3208 = vlaneseq
        %v3209 = vshrl.u32 %v3208, 7
        %v3210 = vsub.s32 %v3207, %v3209
        %v3211 = vrot.slane %v2319, %v3210
        %v3213 = vunpack.c.l.s4 1966171168
        %v3214 = vunpack.c.0.s8 %v3213
        %v3215 = vlaneseq
        %v3216 = vshrl.u32 %v3215, 7
        %v3217 = vsub.s32 %v3214, %v3216
        %v3218 = vrot.slane %v2320, %v3217
        %v3219 = vcombine.high %v3218, %v3218
        %v3221 = vunpack.c.l.s4 1966171168
        %v3222 = vunpack.c.0.s8 %v3221
        %v3223 = vlaneseq
        %v3224 = vshrl.u32 %v3223, 7
        %v3225 = vsub.s32 %v3222, %v3224
        %v3226 = vrot.slane %v2321, %v3225
        %v3227 = vcombine.high %v3226, %v3226
        %v3229 = vunpack.c.l.s4 1966171168
        %v3230 = vunpack.c.0.s8 %v3229
        %v3231 = vlaneseq
        %v3232 = vshrl.u32 %v3231, 7
        %v3233 = vsub.s32 %v3230, %v3232
        %v3234 = vrot.slane %v2322, %v3233
        %v3235 = vcombine.high %v3234, %v3234
        %v3237 = vunpack.c.l.s4 1966171168
        %v3238 = vunpack.c.0.s8 %v3237
        %v3239 = vlaneseq
        %v3240 = vshrl.u32 %v3239, 7
        %v3241 = vsub.s32 %v3238, %v3240
        %v3242 = vrot.slane %v2323, %v3241
        %v3243 = vcombine.high %v3242, %v3242
        %v3245 = vunpack.c.l.s4 1966171168
        %v3246 = vunpack.c.0.s8 %v3245
        %v3247 = vlaneseq
        %v3248 = vshrl.u32 %v3247, 7
        %v3249 = vsub.s32 %v3246, %v3248
        %v3250 = vrot.slane %v2324, %v3249
        %v3252 = vunpack.c.l.s4 1966171168
        %v3253 = vunpack.c.0.s8 %v3252
        %v3254 = vlaneseq
        %v3255 = vshrl.u32 %v3254, 7
        %v3256 = vsub.s32 %v3253, %v3255
        %v3257 = vrot.slane %v2325, %v3256
        %v3258 = vcombine.high %v3257, %v3257
        %v3260 = vunpack.c.l.s4 1966171168
        %v3261 = vunpack.c.0.s8 %v3260
        %v3262 = vlaneseq
        %v3263 = vshrl.u32 %v3262, 7
        %v3264 = vsub.s32 %v3261, %v3263
        %v3265 = vrot.slane %v2326, %v3264
        %v3266 = vcombine.high %v3265, %v3265
        %v3268 = vunpack.c.l.s4 1966171168
        %v3269 = vunpack.c.0.s8 %v3268
        %v3270 = vlaneseq
        %v3271 = vshrl.u32 %v3270, 7
        %v3272 = vsub.s32 %v3269, %v3271
        %v3273 = vrot.slane %v2327, %v3272
        %v3274 = vcombine.high %v3273, %v3273
        %v3276 = vunpack.c.l.s4 1966171168
        %v3277 = vunpack.c.0.s8 %v3276
        %v3278 = vlaneseq
        %v3279 = vshrl.u32 %v3278, 7
        %v3280 = vsub.s32 %v3277, %v3279
        %v3281 = vrot.slane %v2328, %v3280
        %v3282 = vcombine.high %v3281, %v3281
        %v3284 = vunpack.c.l.s4 1966171168
        %v3285 = vunpack.c.0.s8 %v3284
        %v3286 = vlaneseq
        %v3287 = vshrl.u32 %v3286, 7
        %v3288 = vsub.s32 %v3285, %v3287
        %v3289 = vrot.slane %v2329, %v3288
        %v3290 = vlaneseq
        %v3291 = vshrl.u32 %v3290, 7
        %v3292 = vsub.s32 0, %v3291
        %v3293 = vrot.slane %v2907, %v3292
        %v3294 = vlaneseq
        %v3295 = vshrl.u32 %v3294, 7
        %v3296 = vsub.s32 0, %v3295
        %v3297 = vrot.slane %v2914, %v3296
        %v3298 = vlaneseq
        %v3299 = vshrl.u32 %v3298, 7
        %v3300 = vsub.s32 0, %v3299
        %v3301 = vrot.slane %v2915, %v3300
        %v3302 = vlaneseq
        %v3303 = vshrl.u32 %v3302, 7
        %v3304 = vsub.s32 0, %v3303
        %v3305 = vrot.slane %v2922, %v3304
        %v3306 = vlaneseq
        %v3307 = vshrl.u32 %v3306, 7
        %v3308 = vsub.s32 0, %v3307
        %v3309 = vrot.slane %v2923, %v3308
        %v3310 = vlaneseq
        %v3311 = vshrl.u32 %v3310, 7
        %v3312 = vsub.s32 0, %v3311
        %v3313 = vrot.slane %v2930, %v3312
        %v3314 = vlaneseq
        %v3315 = vshrl.u32 %v3314, 7
        %v3316 = vsub.s32 0, %v3315
        %v3317 = vrot.slane %v2931, %v3316
        %v3318 = vlaneseq
        %v3319 = vshrl.u32 %v3318, 7
        %v3320 = vsub.s32 0, %v3319
        %v3321 = vrot.slane %v2938, %v3320
        %v3322 = vlaneseq
        %v3323 = vshrl.u32 %v3322, 7
        %v3324 = vsub.s32 0, %v3323
        %v3325 = vrot.slane %v2946, %v3324
        %v3326 = vlaneseq
        %v3327 = vshrl.u32 %v3326, 7
        %v3328 = vsub.s32 0, %v3327
        %v3329 = vrot.slane %v2953, %v3328
        %v3330 = vlaneseq
        %v3331 = vshrl.u32 %v3330, 7
        %v3332 = vsub.s32 0, %v3331
        %v3333 = vrot.slane %v2954, %v3332
        %v3334 = vlaneseq
        %v3335 = vshrl.u32 %v3334, 7
        %v3336 = vsub.s32 0, %v3335
        %v3337 = vrot.slane %v2961, %v3336
        %v3338 = vlaneseq
        %v3339 = vshrl.u32 %v3338, 7
        %v3340 = vsub.s32 0, %v3339
        %v3341 = vrot.slane %v2962, %v3340
        %v3342 = vlaneseq
        %v3343 = vshrl.u32 %v3342, 7
        %v3344 = vsub.s32 0, %v3343
        %v3345 = vrot.slane %v2969, %v3344
        %v3346 = vlaneseq
        %v3347 = vshrl.u32 %v3346, 7
        %v3348 = vsub.s32 0, %v3347
        %v3349 = vrot.slane %v2970, %v3348
        %v3350 = vlaneseq
        %v3351 = vshrl.u32 %v3350, 7
        %v3352 = vsub.s32 0, %v3351
        %v3353 = vrot.slane %v2977, %v3352
        %v3354 = vlaneseq
        %v3355 = vshrl.u32 %v3354, 7
        %v3356 = vsub.s32 0, %v3355
        %v3357 = vrot.slane %v2985, %v3356
        %v3358 = vlaneseq
        %v3359 = vshrl.u32 %v3358, 7
        %v3360 = vsub.s32 0, %v3359
        %v3361 = vrot.slane %v2992, %v3360
        %v3362 = vlaneseq
        %v3363 = vshrl.u32 %v3362, 7
        %v3364 = vsub.s32 0, %v3363
        %v3365 = vrot.slane %v2993, %v3364
        %v3366 = vlaneseq
        %v3367 = vshrl.u32 %v3366, 7
        %v3368 = vsub.s32 0, %v3367
        %v3369 = vrot.slane %v3000, %v3368
        %v3370 = vlaneseq
        %v3371 = vshrl.u32 %v3370, 7
        %v3372 = vsub.s32 0, %v3371
        %v3373 = vrot.slane %v3001, %v3372
        %v3374 = vlaneseq
        %v3375 = vshrl.u32 %v3374, 7
        %v3376 = vsub.s32 0, %v3375
        %v3377 = vrot.slane %v3008, %v3376
        %v3378 = vlaneseq
        %v3379 = vshrl.u32 %v3378, 7
        %v3380 = vsub.s32 0, %v3379
        %v3381 = vrot.slane %v3009, %v3380
        %v3382 = vlaneseq
        %v3383 = vshrl.u32 %v3382, 7
        %v3384 = vsub.s32 0, %v3383
        %v3385 = vrot.slane %v3016, %v3384
        %v3386 = vlaneseq
        %v3387 = vshrl.u32 %v3386, 7
        %v3388 = vsub.s32 0, %v3387
        %v3389 = vrot.slane %v3024, %v3388
        %v3390 = vlaneseq
        %v3391 = vshrl.u32 %v3390, 7
        %v3392 = vsub.s32 0, %v3391
        %v3393 = vrot.slane %v3031, %v3392
        %v3394 = vlaneseq
        %v3395 = vshrl.u32 %v3394, 7
        %v3396 = vsub.s32 0, %v3395
        %v3397 = vrot.slane %v3032, %v3396
        %v3398 = vlaneseq
        %v3399 = vshrl.u32 %v3398, 7
        %v3400 = vsub.s32 0, %v3399
        %v3401 = vrot.slane %v3039, %v3400
        %v3402 = vlaneseq
        %v3403 = vshrl.u32 %v3402, 7
        %v3404 = vsub.s32 0, %v3403
        %v3405 = vrot.slane %v3040, %v3404
        %v3406 = vlaneseq
        %v3407 = vshrl.u32 %v3406, 7
        %v3408 = vsub.s32 0, %v3407
        %v3409 = vrot.slane %v3047, %v3408
        %v3410 = vlaneseq
        %v3411 = vshrl.u32 %v3410, 7
        %v3412 = vsub.s32 0, %v3411
        %v3413 = vrot.slane %v3048, %v3412
        %v3414 = vlaneseq
        %v3415 = vshrl.u32 %v3414, 7
        %v3416 = vsub.s32 0, %v3415
        %v3417 = vrot.slane %v3055, %v3416
        %v3418 = vlaneseq
        %v3419 = vshrl.u32 %v3418, 7
        %v3420 = vsub.s32 0, %v3419
        %v3421 = vrot.slane %v3063, %v3420
        %v3422 = vlaneseq
        %v3423 = vshrl.u32 %v3422, 7
        %v3424 = vsub.s32 0, %v3423
        %v3425 = vrot.slane %v3070, %v3424
        %v3426 = vlaneseq
        %v3427 = vshrl.u32 %v3426, 7
        %v3428 = vsub.s32 0, %v3427
        %v3429 = vrot.slane %v3071, %v3428
        %v3430 = vlaneseq
        %v3431 = vshrl.u32 %v3430, 7
        %v3432 = vsub.s32 0, %v3431
        %v3433 = vrot.slane %v3078, %v3432
        %v3434 = vlaneseq
        %v3435 = vshrl.u32 %v3434, 7
        %v3436 = vsub.s32 0, %v3435
        %v3437 = vrot.slane %v3079, %v3436
        %v3438 = vlaneseq
        %v3439 = vshrl.u32 %v3438, 7
        %v3440 = vsub.s32 0, %v3439
        %v3441 = vrot.slane %v3086, %v3440
        %v3442 = vlaneseq
        %v3443 = vshrl.u32 %v3442, 7
        %v3444 = vsub.s32 0, %v3443
        %v3445 = vrot.slane %v3087, %v3444
        %v3446 = vlaneseq
        %v3447 = vshrl.u32 %v3446, 7
        %v3448 = vsub.s32 0, %v3447
        %v3449 = vrot.slane %v3094, %v3448
        %v3450 = vlaneseq
        %v3451 = vshrl.u32 %v3450, 7
        %v3452 = vsub.s32 0, %v3451
        %v3453 = vrot.slane %v3102, %v3452
        %v3454 = vlaneseq
        %v3455 = vshrl.u32 %v3454, 7
        %v3456 = vsub.s32 0, %v3455
        %v3457 = vrot.slane %v3109, %v3456
        %v3458 = vlaneseq
        %v3459 = vshrl.u32 %v3458, 7
        %v3460 = vsub.s32 0, %v3459
        %v3461 = vrot.slane %v3110, %v3460
        %v3462 = vlaneseq
        %v3463 = vshrl.u32 %v3462, 7
        %v3464 = vsub.s32 0, %v3463
        %v3465 = vrot.slane %v3117, %v3464
        %v3466 = vlaneseq
        %v3467 = vshrl.u32 %v3466, 7
        %v3468 = vsub.s32 0, %v3467
        %v3469 = vrot.slane %v3118, %v3468
        %v3470 = vlaneseq
        %v3471 = vshrl.u32 %v3470, 7
        %v3472 = vsub.s32 0, %v3471
        %v3473 = vrot.slane %v3125, %v3472
        %v3474 = vlaneseq
        %v3475 = vshrl.u32 %v3474, 7
        %v3476 = vsub.s32 0, %v3475
        %v3477 = vrot.slane %v3126, %v3476
        %v3478 = vlaneseq
        %v3479 = vshrl.u32 %v3478, 7
        %v3480 = vsub.s32 0, %v3479
        %v3481 = vrot.slane %v3133, %v3480
        %v3482 = vlaneseq
        %v3483 = vshrl.u32 %v3482, 7
        %v3484 = vsub.s32 0, %v3483
        %v3485 = vrot.slane %v3141, %v3484
        %v3486 = vlaneseq
        %v3487 = vshrl.u32 %v3486, 7
        %v3488 = vsub.s32 0, %v3487
        %v3489 = vrot.slane %v3148, %v3488
        %v3490 = vlaneseq
        %v3491 = vshrl.u32 %v3490, 7
        %v3492 = vsub.s32 0, %v3491
        %v3493 = vrot.slane %v3149, %v3492
        %v3494 = vlaneseq
        %v3495 = vshrl.u32 %v3494, 7
        %v3496 = vsub.s32 0, %v3495
        %v3497 = vrot.slane %v3156, %v3496
        %v3498 = vlaneseq
        %v3499 = vshrl.u32 %v3498, 7
        %v3500 = vsub.s32 0, %v3499
        %v3501 = vrot.slane %v3157, %v3500
        %v3502 = vlaneseq
        %v3503 = vshrl.u32 %v3502, 7
        %v3504 = vsub.s32 0, %v3503
        %v3505 = vrot.slane %v3164, %v3504
        %v3506 = vlaneseq
        %v3507 = vshrl.u32 %v3506, 7
        %v3508 = vsub.s32 0, %v3507
        %v3509 = vrot.slane %v3165, %v3508
        %v3510 = vlaneseq
        %v3511 = vshrl.u32 %v3510, 7
        %v3512 = vsub.s32 0, %v3511
        %v3513 = vrot.slane %v3172, %v3512
        %v3514 = vlaneseq
        %v3515 = vshrl.u32 %v3514, 7
        %v3516 = vsub.s32 0, %v3515
        %v3517 = vrot.slane %v3180, %v3516
        %v3518 = vlaneseq
        %v3519 = vshrl.u32 %v3518, 7
        %v3520 = vsub.s32 0, %v3519
        %v3521 = vrot.slane %v3187, %v3520
        %v3522 = vlaneseq
        %v3523 = vshrl.u32 %v3522, 7
        %v3524 = vsub.s32 0, %v3523
        %v3525 = vrot.slane %v3188, %v3524
        %v3526 = vlaneseq
        %v3527 = vshrl.u32 %v3526, 7
        %v3528 = vsub.s32 0, %v3527
        %v3529 = vrot.slane %v3195, %v3528
        %v3530 = vlaneseq
        %v3531 = vshrl.u32 %v3530, 7
        %v3532 = vsub.s32 0, %v3531
        %v3533 = vrot.slane %v3196, %v3532
        %v3534 = vlaneseq
        %v3535 = vshrl.u32 %v3534, 7
        %v3536 = vsub.s32 0, %v3535
        %v3537 = vrot.slane %v3203, %v3536
        %v3538 = vlaneseq
        %v3539 = vshrl.u32 %v3538, 7
        %v3540 = vsub.s32 0, %v3539
        %v3541 = vrot.slane %v3204, %v3540
        %v3542 = vlaneseq
        %v3543 = vshrl.u32 %v3542, 7
        %v3544 = vsub.s32 0, %v3543
        %v3545 = vrot.slane %v3211, %v3544
        %v3546 = vlaneseq
        %v3547 = vshrl.u32 %v3546, 7
        %v3548 = vsub.s32 0, %v3547
        %v3549 = vrot.slane %v3219, %v3548
        %v3550 = vlaneseq
        %v3551 = vshrl.u32 %v3550, 7
        %v3552 = vsub.s32 0, %v3551
        %v3553 = vrot.slane %v3226, %v3552
        %v3554 = vlaneseq
        %v3555 = vshrl.u32 %v3554, 7
        %v3556 = vsub.s32 0, %v3555
        %v3557 = vrot.slane %v3227, %v3556
        %v3558 = vlaneseq
        %v3559 = vshrl.u32 %v3558, 7
        %v3560 = vsub.s32 0, %v3559
        %v3561 = vrot.slane %v3234, %v3560
        %v3562 = vlaneseq
        %v3563 = vshrl.u32 %v3562, 7
        %v3564 = vsub.s32 0, %v3563
        %v3565 = vrot.slane %v3235, %v3564
        %v3566 = vlaneseq
        %v3567 = vshrl.u32 %v3566, 7
        %v3568 = vsub.s32 0, %v3567
        %v3569 = vrot.slane %v3242, %v3568
        %v3570 = vlaneseq
        %v3571 = vshrl.u32 %v3570, 7
        %v3572 = vsub.s32 0, %v3571
        %v3573 = vrot.slane %v3243, %v3572
        %v3574 = vlaneseq
        %v3575 = vshrl.u32 %v3574, 7
        %v3576 = vsub.s32 0, %v3575
        %v3577 = vrot.slane %v3250, %v3576
        %v3578 = vlaneseq
        %v3579 = vshrl.u32 %v3578, 7
        %v3580 = vsub.s32 0, %v3579
        %v3581 = vrot.slane %v3258, %v3580
        %v3582 = vlaneseq
        %v3583 = vshrl.u32 %v3582, 7
        %v3584 = vsub.s32 0, %v3583
        %v3585 = vrot.slane %v3265, %v3584
        %v3586 = vlaneseq
        %v3587 = vshrl.u32 %v3586, 7
        %v3588 = vsub.s32 0, %v3587
        %v3589 = vrot.slane %v3266, %v3588
        %v3590 = vlaneseq
        %v3591 = vshrl.u32 %v3590, 7
        %v3592 = vsub.s32 0, %v3591
        %v3593 = vrot.slane %v3273, %v3592
        %v3594 = vlaneseq
        %v3595 = vshrl.u32 %v3594, 7
        %v3596 = vsub.s32 0, %v3595
        %v3597 = vrot.slane %v3274, %v3596
        %v3598 = vlaneseq
        %v3599 = vshrl.u32 %v3598, 7
        %v3600 = vsub.s32 0, %v3599
        %v3601 = vrot.slane %v3281, %v3600
        %v3602 = vlaneseq
        %v3603 = vshrl.u32 %v3602, 7
        %v3604 = vsub.s32 0, %v3603
        %v3605 = vrot.slane %v3282, %v3604
        %v3606 = vlaneseq
        %v3607 = vshrl.u32 %v3606, 7
        %v3608 = vsub.s32 0, %v3607
        %v3609 = vrot.slane %v3289, %v3608
        %v3690 = vsel %vm1983, %v2387, %v3293
        %v3691 = vsel %vm1983, %v2394, %v3297
        %v3692 = vsel %vm1983, %v2395, %v3301
        %v3693 = vsel %vm1983, %v2402, %v3305
        %v3694 = vsel %vm1983, %v2403, %v3309
        %v3695 = vsel %vm1983, %v2410, %v3313
        %v3696 = vsel %vm1983, %v2411, %v3317
        %v3697 = vsel %vm1983, %v2418, %v3321
        %v3698 = vsel %vm1983, %v2426, %v3325
        %v3699 = vsel %vm1983, %v2433, %v3329
        %v3700 = vsel %vm1983, %v2434, %v3333
        %v3701 = vsel %vm1983, %v2441, %v3337
        %v3702 = vsel %vm1983, %v2442, %v3341
        %v3703 = vsel %vm1983, %v2449, %v3345
        %v3704 = vsel %vm1983, %v2450, %v3349
        %v3705 = vsel %vm1983, %v2457, %v3353
        %v3706 = vsel %vm1983, %v2465, %v3357
        %v3707 = vsel %vm1983, %v2472, %v3361
        %v3708 = vsel %vm1983, %v2473, %v3365
        %v3709 = vsel %vm1983, %v2480, %v3369
        %v3710 = vsel %vm1983, %v2481, %v3373
        %v3711 = vsel %vm1983, %v2488, %v3377
        %v3712 = vsel %vm1983, %v2489, %v3381
        %v3713 = vsel %vm1983, %v2496, %v3385
        %v3714 = vsel %vm1983, %v2504, %v3389
        %v3715 = vsel %vm1983, %v2511, %v3393
        %v3716 = vsel %vm1983, %v2512, %v3397
        %v3717 = vsel %vm1983, %v2519, %v3401
        %v3718 = vsel %vm1983, %v2520, %v3405
        %v3719 = vsel %vm1983, %v2527, %v3409
        %v3720 = vsel %vm1983, %v2528, %v3413
        %v3721 = vsel %vm1983, %v2535, %v3417
        %v3722 = vsel %vm1983, %v2543, %v3421
        %v3723 = vsel %vm1983, %v2550, %v3425
        %v3724 = vsel %vm1983, %v2551, %v3429
        %v3725 = vsel %vm1983, %v2558, %v3433
        %v3726 = vsel %vm1983, %v2559, %v3437
        %v3727 = vsel %vm1983, %v2566, %v3441
        %v3728 = vsel %vm1983, %v2567, %v3445
        %v3729 = vsel %vm1983, %v2574, %v3449
        %v3730 = vsel %vm1983, %v2582, %v3453
        %v3731 = vsel %vm1983, %v2589, %v3457
        %v3732 = vsel %vm1983, %v2590, %v3461
        %v3733 = vsel %vm1983, %v2597, %v3465
        %v3734 = vsel %vm1983, %v2598, %v3469
        %v3735 = vsel %vm1983, %v2605, %v3473
        %v3736 = vsel %vm1983, %v2606, %v3477
        %v3737 = vsel %vm1983, %v2613, %v3481
        %v3738 = vsel %vm1983, %v2621, %v3485
        %v3739 = vsel %vm1983, %v2628, %v3489
        %v3740 = vsel %vm1983, %v2629, %v3493
        %v3741 = vsel %vm1983, %v2636, %v3497
        %v3742 = vsel %vm1983, %v2637, %v3501
        %v3743 = vsel %vm1983, %v2644, %v3505
        %v3744 = vsel %vm1983, %v2645, %v3509
        %v3745 = vsel %vm1983, %v2652, %v3513
        %v3746 = vsel %vm1983, %v2660, %v3517
        %v3747 = vsel %vm1983, %v2667, %v3521
        %v3748 = vsel %vm1983, %v2668, %v3525
        %v3749 = vsel %vm1983, %v2675, %v3529
        %v3750 = vsel %vm1983, %v2676, %v3533
        %v3751 = vsel %vm1983, %v2683, %v3537
        %v3752 = vsel %vm1983, %v2684, %v3541
        %v3753 = vsel %vm1983, %v2691, %v3545
        %v3754 = vsel %vm1983, %v2699, %v3549
        %v3755 = vsel %vm1983, %v2706, %v3553
        %v3756 = vsel %vm1983, %v2707, %v3557
        %v3757 = vsel %vm1983, %v2714, %v3561
        %v3758 = vsel %vm1983, %v2715, %v3565
        %v3759 = vsel %vm1983, %v2722, %v3569
        %v3760 = vsel %vm1983, %v2723, %v3573
        %v3761 = vsel %vm1983, %v2730, %v3577
        %v3762 = vsel %vm1983, %v2738, %v3581
        %v3763 = vsel %vm1983, %v2745, %v3585
        %v3764 = vsel %vm1983, %v2746, %v3589
        %v3765 = vsel %vm1983, %v2753, %v3593
        %v3766 = vsel %vm1983, %v2754, %v3597
        %v3767 = vsel %vm1983, %v2761, %v3601
        %v3768 = vsel %vm1983, %v2762, %v3605
        %v3769 = vsel %vm1983, %v2769, %v3609
        %v3770 = vmul.f32 %v3698, 0.75
        %v3771 = vmul.f32 %v3699, 0.75
        %v3772 = vmul.f32 %v3700, 0.75
        %v3773 = vmul.f32 %v3701, 0.75
        %v3774 = vmul.f32 %v3702, 0.75
        %v3775 = vmul.f32 %v3703, 0.75
        %v3776 = vmul.f32 %v3704, 0.75
        %v3777 = vmul.f32 %v3705, 0.75
        %v3778 = vmul.f32 %v3706, 0.75
        %v3779 = vmul.f32 %v3707, 0.75
        %v3780 = vmul.f32 %v3708, 0.75
        %v3781 = vmul.f32 %v3709, 0.75
        %v3782 = vmul.f32 %v3710, 0.75
        %v3783 = vmul.f32 %v3711, 0.75
        %v3784 = vmul.f32 %v3712, 0.75
        %v3785 = vmul.f32 %v3713, 0.75
        %v3786 = vmul.f32 %v3714, 0.75
        %v3787 = vmul.f32 %v3715, 0.75
        %v3788 = vmul.f32 %v3716, 0.75
        %v3789 = vmul.f32 %v3717, 0.75
        %v3790 = vmul.f32 %v3718, 0.75
        %v3791 = vmul.f32 %v3719, 0.75
        %v3792 = vmul.f32 %v3720, 0.75
        %v3793 = vmul.f32 %v3721, 0.75
        %v3794 = vmul.f32 %v3722, 0.75
        %v3795 = vmul.f32 %v3723, 0.75
        %v3796 = vmul.f32 %v3724, 0.75
        %v3797 = vmul.f32 %v3725, 0.75
        %v3798 = vmul.f32 %v3726, 0.75
        %v3799 = vmul.f32 %v3727, 0.75
        %v3800 = vmul.f32 %v3728, 0.75
        %v3801 = vmul.f32 %v3729, 0.75
        %v3802 = vmul.f32 %v3730, 0.75
        %v3803 = vmul.f32 %v3731, 0.75
        %v3804 = vmul.f32 %v3732, 0.75
        %v3805 = vmul.f32 %v3733, 0.75
        %v3806 = vmul.f32 %v3734, 0.75
        %v3807 = vmul.f32 %v3735, 0.75
        %v3808 = vmul.f32 %v3736, 0.75
        %v3809 = vmul.f32 %v3737, 0.75
        %v3810 = vmul.f32 %v3738, 0.75
        %v3811 = vmul.f32 %v3739, 0.75
        %v3812 = vmul.f32 %v3740, 0.75
        %v3813 = vmul.f32 %v3741, 0.75
        %v3814 = vmul.f32 %v3742, 0.75
        %v3815 = vmul.f32 %v3743, 0.75
        %v3816 = vmul.f32 %v3744, 0.75
        %v3817 = vmul.f32 %v3745, 0.75
        %v3818 = vmul.f32 %v3746, 0.75
        %v3819 = vmul.f32 %v3747, 0.75
        %v3820 = vmul.f32 %v3748, 0.75
        %v3821 = vmul.f32 %v3749, 0.75
        %v3822 = vmul.f32 %v3750, 0.75
        %v3823 = vmul.f32 %v3751, 0.75
        %v3824 = vmul.f32 %v3752, 0.75
        %v3825 = vmul.f32 %v3753, 0.75
        %v3826 = vmul.f32 %v3754, 0.75
        %v3827 = vmul.f32 %v3755, 0.75
        %v3828 = vmul.f32 %v3756, 0.75
        %v3829 = vmul.f32 %v3757, 0.75
        %v3830 = vmul.f32 %v3758, 0.75
        %v3831 = vmul.f32 %v3759, 0.75
        %v3832 = vmul.f32 %v3760, 0.75
        %v3833 = vmul.f32 %v3761, 0.75
        %v3834 = vmul.f32 %v3690, 0.25
        %v3835 = vmul.f32 %v3691, 0.25
        %v3836 = vmul.f32 %v3692, 0.25
        %v3837 = vmul.f32 %v3693, 0.25
        %v3838 = vmul.f32 %v3694, 0.25
        %v3839 = vmul.f32 %v3695, 0.25
        %v3840 = vmul.f32 %v3696, 0.25
        %v3841 = vmul.f32 %v3697, 0.25
        %v3842 = vmul.f32 %v3698, 0.25
        %v3843 = vmul.f32 %v3699, 0.25
        %v3844 = vmul.f32 %v3700, 0.25
        %v3845 = vmul.f32 %v3701, 0.25
        %v3846 = vmul.f32 %v3702, 0.25
        %v3847 = vmul.f32 %v3703, 0.25
        %v3848 = vmul.f32 %v3704, 0.25
        %v3849 = vmul.f32 %v3705, 0.25
        %v3850 = vmul.f32 %v3706, 0.25
        %v3851 = vmul.f32 %v3707, 0.25
        %v3852 = vmul.f32 %v3708, 0.25
        %v3853 = vmul.f32 %v3709, 0.25
        %v3854 = vmul.f32 %v3710, 0.25
        %v3855 = vmul.f32 %v3711, 0.25
        %v3856 = vmul.f32 %v3712, 0.25
        %v3857 = vmul.f32 %v3713, 0.25
        %v3858 = vmul.f32 %v3714, 0.25
        %v3859 = vmul.f32 %v3715, 0.25
        %v3860 = vmul.f32 %v3716, 0.25
        %v3861 = vmul.f32 %v3717, 0.25
        %v3862 = vmul.f32 %v3718, 0.25
        %v3863 = vmul.f32 %v3719, 0.25
        %v3864 = vmul.f32 %v3720, 0.25
        %v3865 = vmul.f32 %v3721, 0.25
        %v3866 = vmul.f32 %v3722, 0.25
        %v3867 = vmul.f32 %v3723, 0.25
        %v3868 = vmul.f32 %v3724, 0.25
        %v3869 = vmul.f32 %v3725, 0.25
        %v3870 = vmul.f32 %v3726, 0.25
        %v3871 = vmul.f32 %v3727, 0.25
        %v3872 = vmul.f32 %v3728, 0.25
        %v3873 = vmul.f32 %v3729, 0.25
        %v3874 = vmul.f32 %v3730, 0.25
        %v3875 = vmul.f32 %v3731, 0.25
        %v3876 = vmul.f32 %v3732, 0.25
        %v3877 = vmul.f32 %v3733, 0.25
        %v3878 = vmul.f32 %v3734, 0.25
        %v3879 = vmul.f32 %v3735, 0.25
        %v3880 = vmul.f32 %v3736, 0.25
        %v3881 = vmul.f32 %v3737, 0.25
        %v3882 = vmul.f32 %v3738, 0.25
        %v3883 = vmul.f32 %v3739, 0.25
        %v3884 = vmul.f32 %v3740, 0.25
        %v3885 = vmul.f32 %v3741, 0.25
        %v3886 = vmul.f32 %v3742, 0.25
        %v3887 = vmul.f32 %v3743, 0.25
        %v3888 = vmul.f32 %v3744, 0.25
        %v3889 = vmul.f32 %v3745, 0.25
        %v3890 = vmul.f32 %v3746, 0.25
        %v3891 = vmul.f32 %v3747, 0.25
        %v3892 = vmul.f32 %v3748, 0.25
        %v3893 = vmul.f32 %v3749, 0.25
        %v3894 = vmul.f32 %v3750, 0.25
        %v3895 = vmul.f32 %v3751, 0.25
        %v3896 = vmul.f32 %v3752, 0.25
        %v3897 = vmul.f32 %v3753, 0.25
        %v3898 = vadd.f32 %v3770, %v3834
        %v3899 = vadd.f32 %v3771, %v3835
        %v3900 = vadd.f32 %v3772, %v3836
        %v3901 = vadd.f32 %v3773, %v3837
        %v3902 = vadd.f32 %v3774, %v3838
        %v3903 = vadd.f32 %v3775, %v3839
        %v3904 = vadd.f32 %v3776, %v3840
        %v3905 = vadd.f32 %v3777, %v3841
        %v3906 = vadd.f32 %v3778, %v3842
        %v3907 = vadd.f32 %v3779, %v3843
        %v3908 = vadd.f32 %v3780, %v3844
        %v3909 = vadd.f32 %v3781, %v3845
        %v3910 = vadd.f32 %v3782, %v3846
        %v3911 = vadd.f32 %v3783, %v3847
        %v3912 = vadd.f32 %v3784, %v3848
        %v3913 = vadd.f32 %v3785, %v3849
        %v3914 = vadd.f32 %v3786, %v3850
        %v3915 = vadd.f32 %v3787, %v3851
        %v3916 = vadd.f32 %v3788, %v3852
        %v3917 = vadd.f32 %v3789, %v3853
        %v3918 = vadd.f32 %v3790, %v3854
        %v3919 = vadd.f32 %v3791, %v3855
        %v3920 = vadd.f32 %v3792, %v3856
        %v3921 = vadd.f32 %v3793, %v3857
        %v3922 = vadd.f32 %v3794, %v3858
        %v3923 = vadd.f32 %v3795, %v3859
        %v3924 = vadd.f32 %v3796, %v3860
        %v3925 = vadd.f32 %v3797, %v3861
        %v3926 = vadd.f32 %v3798, %v3862
        %v3927 = vadd.f32 %v3799, %v3863
        %v3928 = vadd.f32 %v3800, %v3864
        %v3929 = vadd.f32 %v3801, %v3865
        %v3930 = vadd.f32 %v3802, %v3866
        %v3931 = vadd.f32 %v3803, %v3867
        %v3932 = vadd.f32 %v3804, %v3868
        %v3933 = vadd.f32 %v3805, %v3869
        %v3934 = vadd.f32 %v3806, %v3870
        %v3935 = vadd.f32 %v3807, %v3871
        %v3936 = vadd.f32 %v3808, %v3872
        %v3937 = vadd.f32 %v3809, %v3873
        %v3938 = vadd.f32 %v3810, %v3874
        %v3939 = vadd.f32 %v3811, %v3875
        %v3940 = vadd.f32 %v3812, %v3876
        %v3941 = vadd.f32 %v3813, %v3877
        %v3942 = vadd.f32 %v3814, %v3878
        %v3943 = vadd.f32 %v3815, %v3879
        %v3944 = vadd.f32 %v3816, %v3880
        %v3945 = vadd.f32 %v3817, %v3881
        %v3946 = vadd.f32 %v3818, %v3882
        %v3947 = vadd.f32 %v3819, %v3883
        %v3948 = vadd.f32 %v3820, %v3884
        %v3949 = vadd.f32 %v3821, %v3885
        %v3950 = vadd.f32 %v3822, %v3886
        %v3951 = vadd.f32 %v3823, %v3887
        %v3952 = vadd.f32 %v3824, %v3888
        %v3953 = vadd.f32 %v3825, %v3889
        %v3954 = vadd.f32 %v3826, %v3890
        %v3955 = vadd.f32 %v3827, %v3891
        %v3956 = vadd.f32 %v3828, %v3892
        %v3957 = vadd.f32 %v3829, %v3893
        %v3958 = vadd.f32 %v3830, %v3894
        %v3959 = vadd.f32 %v3831, %v3895
        %v3960 = vadd.f32 %v3832, %v3896
        %v3961 = vadd.f32 %v3833, %v3897
        %v3962 = vmul.f32 %v3754, 0.25
        %v3963 = vmul.f32 %v3755, 0.25
        %v3964 = vmul.f32 %v3756, 0.25
        %v3965 = vmul.f32 %v3757, 0.25
        %v3966 = vmul.f32 %v3758, 0.25
        %v3967 = vmul.f32 %v3759, 0.25
        %v3968 = vmul.f32 %v3760, 0.25
        %v3969 = vmul.f32 %v3761, 0.25
        %v3970 = vmul.f32 %v3762, 0.25
        %v3971 = vmul.f32 %v3763, 0.25
        %v3972 = vmul.f32 %v3764, 0.25
        %v3973 = vmul.f32 %v3765, 0.25
        %v3974 = vmul.f32 %v3766, 0.25
        %v3975 = vmul.f32 %v3767, 0.25
        %v3976 = vmul.f32 %v3768, 0.25
        %v3977 = vmul.f32 %v3769, 0.25
        %v3978 = vadd.f32 %v3770, %v3850
        %v3979 = vadd.f32 %v3771, %v3851
        %v3980 = vadd.f32 %v3772, %v3852
        %v3981 = vadd.f32 %v3773, %v3853
        %v3982 = vadd.f32 %v3774, %v3854
        %v3983 = vadd.f32 %v3775, %v3855
        %v3984 = vadd.f32 %v3776, %v3856
        %v3985 = vadd.f32 %v3777, %v3857
        %v3986 = vadd.f32 %v3778, %v3858
        %v3987 = vadd.f32 %v3779, %v3859
        %v3988 = vadd.f32 %v3780, %v3860
        %v3989 = vadd.f32 %v3781, %v3861
        %v3990 = vadd.f32 %v3782, %v3862
        %v3991 = vadd.f32 %v3783, %v3863
        %v3992 = vadd.f32 %v3784, %v3864
        %v3993 = vadd.f32 %v3785, %v3865
        %v3994 = vadd.f32 %v3786, %v3866
        %v3995 = vadd.f32 %v3787, %v3867
        %v3996 = vadd.f32 %v3788, %v3868
        %v3997 = vadd.f32 %v3789, %v3869
        %v3998 = vadd.f32 %v3790, %v3870
        %v3999 = vadd.f32 %v3791, %v3871
        %v4000 = vadd.f32 %v3792, %v3872
        %v4001 = vadd.f32 %v3793, %v3873
        %v4002 = vadd.f32 %v3794, %v3874
        %v4003 = vadd.f32 %v3795, %v3875
        %v4004 = vadd.f32 %v3796, %v3876
        %v4005 = vadd.f32 %v3797, %v3877
        %v4006 = vadd.f32 %v3798, %v3878
        %v4007 = vadd.f32 %v3799, %v3879
        %v4008 = vadd.f32 %v3800, %v3880
        %v4009 = vadd.f32 %v3801, %v3881
        %v4010 = vadd.f32 %v3802, %v3882
        %v4011 = vadd.f32 %v3803, %v3883
        %v4012 = vadd.f32 %v3804, %v3884
        %v4013 = vadd.f32 %v3805, %v3885
        %v4014 = vadd.f32 %v3806, %v3886
        %v4015 = vadd.f32 %v3807, %v3887
        %v4016 = vadd.f32 %v3808, %v3888
        %v4017 = vadd.f32 %v3809, %v3889
        %v4018 = vadd.f32 %v3810, %v3890
        %v4019 = vadd.f32 %v3811, %v3891
        %v4020 = vadd.f32 %v3812, %v3892
        %v4021 = vadd.f32 %v3813, %v3893
        %v4022 = vadd.f32 %v3814, %v3894
        %v4023 = vadd.f32 %v3815, %v3895
        %v4024 = vadd.f32 %v3816, %v3896
        %v4025 = vadd.f32 %v3817, %v3897
        %v4026 = vadd.f32 %v3818, %v3962
        %v4027 = vadd.f32 %v3819, %v3963
        %v4028 = vadd.f32 %v3820, %v3964
        %v4029 = vadd.f32 %v3821, %v3965
        %v4030 = vadd.f32 %v3822, %v3966
        %v4031 = vadd.f32 %v3823, %v3967
        %v4032 = vadd.f32 %v3824, %v3968
        %v4033 = vadd.f32 %v3825, %v3969
        %v4034 = vadd.f32 %v3826, %v3970
        %v4035 = vadd.f32 %v3827, %v3971
        %v4036 = vadd.f32 %v3828, %v3972
        %v4037 = vadd.f32 %v3829, %v3973
        %v4038 = vadd.f32 %v3830, %v3974
        %v4039 = vadd.f32 %v3831, %v3975
        %v4040 = vadd.f32 %v3832, %v3976
        %v4041 = vadd.f32 %v3833, %v3977
        %v4170 = vcombine.low %v3898, %v3899
        %v4171 = vcombine.low %v3900, %v3901
        %v4173 = vunpack.c.l.s4 1983009808
        %v4174 = vunpack.c.0.s8 %v4173
        %v4175 = vlaneseq
        %v4176 = vshrl.u32 %v4175, 7
        %v4177 = vsub.s32 %v4174, %v4176
        %v4178 = vrot.slane %v4170, %v4177
        %v4180 = vunpack.c.l.s4 1983009808
        %v4181 = vunpack.c.0.s8 %v4180
        %v4182 = vlaneseq
        %v4183 = vshrl.u32 %v4182, 7
        %v4184 = vsub.s32 %v4181, %v4183
        %v4185 = vrot.slane %v4171, %v4184
        %v4186 = vcombine.low %v4178, %v4185
        %v4187 = vcombine.low %v3902, %v3903
        %v4188 = vcombine.low %v3904, %v3905
        %v4190 = vunpack.c.l.s4 1983009808
        %v4191 = vunpack.c.0.s8 %v4190
        %v4192 = vlaneseq
        %v4193 = vshrl.u32 %v4192, 7
        %v4194 = vsub.s32 %v4191, %v4193
        %v4195 = vrot.slane %v4187, %v4194
        %v4197 = vunpack.c.l.s4 1983009808
        %v4198 = vunpack.c.0.s8 %v4197
        %v4199 = vlaneseq
        %v4200 = vshrl.u32 %v4199, 7
        %v4201 = vsub.s32 %v4198, %v4200
        %v4202 = vrot.slane %v4188, %v4201
        %v4203 = vcombine.low %v4195, %v4202
        %v4204 = vcombine.low %v3978, %v3979
        %v4205 = vcombine.low %v3980, %v3981
        %v4207 = vunpack.c.l.s4 1983009808
        %v4208 = vunpack.c.0.s8 %v4207
        %v4209 = vlaneseq
        %v4210 = vshrl.u32 %v4209, 7
        %v4211 = vsub.s32 %v4208, %v4210
        %v4212 = vrot.slane %v4204, %v4211
        %v4214 = vunpack.c.l.s4 1983009808
        %v4215 = vunpack.c.0.s8 %v4214
        %v4216 = vlaneseq
        %v4217 = vshrl.u32 %v4216, 7
        %v4218 = vsub.s32 %v4215, %v4217
        %v4219 = vrot.slane %v4205, %v4218
        %v4220 = vcombine.low %v4212, %v4219
        %v4221 = vcombine.low %v3982, %v3983
        %v4222 = vcombine.low %v3984, %v3985
        %v4224 = vunpack.c.l.s4 1983009808
        %v4225 = vunpack.c.0.s8 %v4224
        %v4226 = vlaneseq
        %v4227 = vshrl.u32 %v4226, 7
        %v4228 = vsub.s32 %v4225, %v4227
        %v4229 = vrot.slane %v4221, %v4228
        %v4231 = vunpack.c.l.s4 1983009808
        %v4232 = vunpack.c.0.s8 %v4231
        %v4233 = vlaneseq
        %v4234 = vshrl.u32 %v4233, 7
        %v4235 = vsub.s32 %v4232, %v4234
        %v4236 = vrot.slane %v4222, %v4235
        %v4237 = vcombine.low %v4229, %v4236
        %v4238 = vcombine.low %v3906, %v3907
        %v4239 = vcombine.low %v3908, %v3909
        %v4241 = vunpack.c.l.s4 1983009808
        %v4242 = vunpack.c.0.s8 %v4241
        %v4243 = vlaneseq
        %v4244 = vshrl.u32 %v4243, 7
        %v4245 = vsub.s32 %v4242, %v4244
        %v4246 = vrot.slane %v4238, %v4245
        %v4248 = vunpack.c.l.s4 1983009808
        %v4249 = vunpack.c.0.s8 %v4248
        %v4250 = vlaneseq
        %v4251 = vshrl.u32 %v4250, 7
        %v4252 = vsub.s32 %v4249, %v4251
        %v4253 = vrot.slane %v4239, %v4252
        %v4254 = vcombine.low %v4246, %v4253
        %v4255 = vcombine.low %v3910, %v3911
        %v4256 = vcombine.low %v3912, %v3913
        %v4258 = vunpack.c.l.s4 1983009808
        %v4259 = vunpack.c.0.s8 %v4258
        %v4260 = vlaneseq
        %v4261 = vshrl.u32 %v4260, 7
        %v4262 = vsub.s32 %v4259, %v4261
        %v4263 = vrot.slane %v4255, %v4262
        %v4265 = vunpack.c.l.s4 1983009808
        %v4266 = vunpack.c.0.s8 %v4265
        %v4267 = vlaneseq
        %v4268 = vshrl.u32 %v4267, 7
        %v4269 = vsub.s32 %v4266, %v4268
        %v4270 = vrot.slane %v4256, %v4269
        %v4271 = vcombine.low %v4263, %v4270
        %v4272 = vcombine.low %v3986, %v3987
        %v4273 = vcombine.low %v3988, %v3989
        %v4275 = vunpack.c.l.s4 1983009808
        %v4276 = vunpack.c.0.s8 %v4275
        %v4277 = vlaneseq
        %v4278 = vshrl.u32 %v4277, 7
        %v4279 = vsub.s32 %v4276, %v4278
        %v4280 = vrot.slane %v4272, %v4279
        %v4282 = vunpack.c.l.s4 1983009808
        %v4283 = vunpack.c.0.s8 %v4282
        %v4284 = vlaneseq
        %v4285 = vshrl.u32 %v4284, 7
        %v4286 = vsub.s32 %v4283, %v4285
        %v4287 = vrot.slane %v4273, %v4286
        %v4288 = vcombine.low %v4280, %v4287
        %v4289 = vcombine.low %v3990, %v3991
        %v4290 = vcombine.low %v3992, %v3993
        %v4292 = vunpack.c.l.s4 1983009808
        %v4293 = vunpack.c.0.s8 %v4292
        %v4294 = vlaneseq
        %v4295 = vshrl.u32 %v4294, 7
        %v4296 = vsub.s32 %v4293, %v4295
        %v4297 = vrot.slane %v4289, %v4296
        %v4299 = vunpack.c.l.s4 1983009808
        %v4300 = vunpack.c.0.s8 %v4299
        %v4301 = vlaneseq
        %v4302 = vshrl.u32 %v4301, 7
        %v4303 = vsub.s32 %v4300, %v4302
        %v4304 = vrot.slane %v4290, %v4303
        %v4305 = vcombine.low %v4297, %v4304
        %v4306 = vcombine.low %v3914, %v3915
        %v4307 = vcombine.low %v3916, %v3917
        %v4309 = vunpack.c.l.s4 1983009808
        %v4310 = vunpack.c.0.s8 %v4309
        %v4311 = vlaneseq
        %v4312 = vshrl.u32 %v4311, 7
        %v4313 = vsub.s32 %v4310, %v4312
        %v4314 = vrot.slane %v4306, %v4313
        %v4316 = vunpack.c.l.s4 1983009808
        %v4317 = vunpack.c.0.s8 %v4316
        %v4318 = vlaneseq
        %v4319 = vshrl.u32 %v4318, 7
        %v4320 = vsub.s32 %v4317, %v4319
        %v4321 = vrot.slane %v4307, %v4320
        %v4322 = vcombine.low %v4314, %v4321
        %v4323 = vcombine.low %v3918, %v3919
        %v4324 = vcombine.low %v3920, %v3921
        %v4326 = vunpack.c.l.s4 1983009808
        %v4327 = vunpack.c.0.s8 %v4326
        %v4328 = vlaneseq
        %v4329 = vshrl.u32 %v4328, 7
        %v4330 = vsub.s32 %v4327, %v4329
        %v4331 = vrot.slane %v4323, %v4330
        %v4333 = vunpack.c.l.s4 1983009808
        %v4334 = vunpack.c.0.s8 %v4333
        %v4335 = vlaneseq
        %v4336 = vshrl.u32 %v4335, 7
        %v4337 = vsub.s32 %v4334, %v4336
        %v4338 = vrot.slane %v4324, %v4337
        %v4339 = vcombine.low %v4331, %v4338
        %v4340 = vcombine.low %v3994, %v3995
        %v4341 = vcombine.low %v3996, %v3997
        %v4343 = vunpack.c.l.s4 1983009808
        %v4344 = vunpack.c.0.s8 %v4343
        %v4345 = vlaneseq
        %v4346 = vshrl.u32 %v4345, 7
        %v4347 = vsub.s32 %v4344, %v4346
        %v4348 = vrot.slane %v4340, %v4347
        %v4350 = vunpack.c.l.s4 1983009808
        %v4351 = vunpack.c.0.s8 %v4350
        %v4352 = vlaneseq
        %v4353 = vshrl.u32 %v4352, 7
        %v4354 = vsub.s32 %v4351, %v4353
        %v4355 = vrot.slane %v4341, %v4354
        %v4356 = vcombine.low %v4348, %v4355
        %v4357 = vcombine.low %v3998, %v3999
        %v4358 = vcombine.low %v4000, %v4001
        %v4360 = vunpack.c.l.s4 1983009808
        %v4361 = vunpack.c.0.s8 %v4360
        %v4362 = vlaneseq
        %v4363 = vshrl.u32 %v4362, 7
        %v4364 = vsub.s32 %v4361, %v4363
        %v4365 = vrot.slane %v4357, %v4364
        %v4367 = vunpack.c.l.s4 1983009808
        %v4368 = vunpack.c.0.s8 %v4367
        %v4369 = vlaneseq
        %v4370 = vshrl.u32 %v4369, 7
        %v4371 = vsub.s32 %v4368, %v4370
        %v4372 = vrot.slane %v4358, %v4371
        %v4373 = vcombine.low %v4365, %v4372
        %v4374 = vcombine.low %v3922, %v3923
        %v4375 = vcombine.low %v3924, %v3925
        %v4377 = vunpack.c.l.s4 1983009808
        %v4378 = vunpack.c.0.s8 %v4377
        %v4379 = vlaneseq
        %v4380 = vshrl.u32 %v4379, 7
        %v4381 = vsub.s32 %v4378, %v4380
        %v4382 = vrot.slane %v4374, %v4381
        %v4384 = vunpack.c.l.s4 1983009808
        %v4385 = vunpack.c.0.s8 %v4384
        %v4386 = vlaneseq
        %v4387 = vshrl.u32 %v4386, 7
        %v4388 = vsub.s32 %v4385, %v4387
        %v4389 = vrot.slane %v4375, %v4388
        %v4390 = vcombine.low %v4382, %v4389
        %v4391 = vcombine.low %v3926, %v3927
        %v4392 = vcombine.low %v3928, %v3929
        %v4394 = vunpack.c.l.s4 1983009808
        %v4395 = vunpack.c.0.s8 %v4394
        %v4396 = vlaneseq
        %v4397 = vshrl.u32 %v4396, 7
        %v4398 = vsub.s32 %v4395, %v4397
        %v4399 = vrot.slane %v4391, %v4398
        %v4401 = vunpack.c.l.s4 1983009808
        %v4402 = vunpack.c.0.s8 %v4401
        %v4403 = vlaneseq
        %v4404 = vshrl.u32 %v4403, 7
        %v4405 = vsub.s32 %v4402, %v4404
        %v4406 = vrot.slane %v4392, %v4405
        %v4407 = vcombine.low %v4399, %v4406
        %v4408 = vcombine.low %v4002, %v4003
        %v4409 = vcombine.low %v4004, %v4005
        %v4411 = vunpack.c.l.s4 1983009808
        %v4412 = vunpack.c.0.s8 %v4411
        %v4413 = vlaneseq
        %v4414 = vshrl.u32 %v4413, 7
        %v4415 = vsub.s32 %v4412, %v4414
        %v4416 = vrot.slane %v4408, %v4415
        %v4418 = vunpack.c.l.s4 1983009808
        %v4419 = vunpack.c.0.s8 %v4418
        %v4420 = vlaneseq
        %v4421 = vshrl.u32 %v4420, 7
        %v4422 = vsub.s32 %v4419, %v4421
        %v4423 = vrot.slane %v4409, %v4422
        %v4424 = vcombine.low %v4416, %v4423
        %v4425 = vcombine.low %v4006, %v4007
        %v4426 = vcombine.low %v4008, %v4009
        %v4428 = vunpack.c.l.s4 1983009808
        %v4429 = vunpack.c.0.s8 %v4428
        %v4430 = vlaneseq
        %v4431 = vshrl.u32 %v4430, 7
        %v4432 = vsub.s32 %v4429, %v4431
        %v4433 = vrot.slane %v4425, %v4432
        %v4435 = vunpack.c.l.s4 1983009808
        %v4436 = vunpack.c.0.s8 %v4435
        %v4437 = vlaneseq
        %v4438 = vshrl.u32 %v4437, 7
        %v4439 = vsub.s32 %v4436, %v4438
        %v4440 = vrot.slane %v4426, %v4439
        %v4441 = vcombine.low %v4433, %v4440
        %v4442 = vcombine.low %v3930, %v3931
        %v4443 = vcombine.low %v3932, %v3933
        %v4445 = vunpack.c.l.s4 1983009808
        %v4446 = vunpack.c.0.s8 %v4445
        %v4447 = vlaneseq
        %v4448 = vshrl.u32 %v4447, 7
        %v4449 = vsub.s32 %v4446, %v4448
        %v4450 = vrot.slane %v4442, %v4449
        %v4452 = vunpack.c.l.s4 1983009808
        %v4453 = vunpack.c.0.s8 %v4452
        %v4454 = vlaneseq
        %v4455 = vshrl.u32 %v4454, 7
        %v4456 = vsub.s32 %v4453, %v4455
        %v4457 = vrot.slane %v4443, %v4456
        %v4458 = vcombine.low %v4450, %v4457
        %v4459 = vcombine.low %v3934, %v3935
        %v4460 = vcombine.low %v3936, %v3937
        %v4462 = vunpack.c.l.s4 1983009808
        %v4463 = vunpack.c.0.s8 %v4462
        %v4464 = vlaneseq
        %v4465 = vshrl.u32 %v4464, 7
        %v4466 = vsub.s32 %v4463, %v4465
        %v4467 = vrot.slane %v4459, %v4466
        %v4469 = vunpack.c.l.s4 1983009808
        %v4470 = vunpack.c.0.s8 %v4469
        %v4471 = vlaneseq
        %v4472 = vshrl.u32 %v4471, 7
        %v4473 = vsub.s32 %v4470, %v4472
        %v4474 = vrot.slane %v4460, %v4473
        %v4475 = vcombine.low %v4467, %v4474
        %v4476 = vcombine.low %v4010, %v4011
        %v4477 = vcombine.low %v4012, %v4013
        %v4479 = vunpack.c.l.s4 1983009808
        %v4480 = vunpack.c.0.s8 %v4479
        %v4481 = vlaneseq
        %v4482 = vshrl.u32 %v4481, 7
        %v4483 = vsub.s32 %v4480, %v4482
        %v4484 = vrot.slane %v4476, %v4483
        %v4486 = vunpack.c.l.s4 1983009808
        %v4487 = vunpack.c.0.s8 %v4486
        %v4488 = vlaneseq
        %v4489 = vshrl.u32 %v4488, 7
        %v4490 = vsub.s32 %v4487, %v4489
        %v4491 = vrot.slane %v4477, %v4490
        %v4492 = vcombine.low %v4484, %v4491
        %v4493 = vcombine.low %v4014, %v4015
        %v4494 = vcombine.low %v4016, %v4017
        %v4496 = vunpack.c.l.s4 1983009808
        %v4497 = vunpack.c.0.s8 %v4496
        %v4498 = vlaneseq
        %v4499 = vshrl.u32 %v4498, 7
        %v4500 = vsub.s32 %v4497, %v4499
        %v4501 = vrot.slane %v4493, %v4500
        %v4503 = vunpack.c.l.s4 1983009808
        %v4504 = vunpack.c.0.s8 %v4503
        %v4505 = vlaneseq
        %v4506 = vshrl.u32 %v4505, 7
        %v4507 = vsub.s32 %v4504, %v4506
        %v4508 = vrot.slane %v4494, %v4507
        %v4509 = vcombine.low %v4501, %v4508
        %v4510 = vcombine.low %v3938, %v3939
        %v4511 = vcombine.low %v3940, %v3941
        %v4513 = vunpack.c.l.s4 1983009808
        %v4514 = vunpack.c.0.s8 %v4513
        %v4515 = vlaneseq
        %v4516 = vshrl.u32 %v4515, 7
        %v4517 = vsub.s32 %v4514, %v4516
        %v4518 = vrot.slane %v4510, %v4517
        %v4520 = vunpack.c.l.s4 1983009808
        %v4521 = vunpack.c.0.s8 %v4520
        %v4522 = vlaneseq
        %v4523 = vshrl.u32 %v4522, 7
        %v4524 = vsub.s32 %v4521, %v4523
        %v4525 = vrot.slane %v4511, %v4524
        %v4526 = vcombine.low %v4518, %v4525
        %v4527 = vcombine.low %v3942, %v3943
        %v4528 = vcombine.low %v3944, %v3945
        %v4530 = vunpack.c.l.s4 1983009808
        %v4531 = vunpack.c.0.s8 %v4530
        %v4532 = vlaneseq
        %v4533 = vshrl.u32 %v4532, 7
        %v4534 = vsub.s32 %v4531, %v4533
        %v4535 = vrot.slane %v4527, %v4534
        %v4537 = vunpack.c.l.s4 1983009808
        %v4538 = vunpack.c.0.s8 %v4537
        %v4539 = vlaneseq
        %v4540 = vshrl.u32 %v4539, 7
        %v4541 = vsub.s32 %v4538, %v4540
        %v4542 = vrot.slane %v4528, %v4541
        %v4543 = vcombine.low %v4535, %v4542
        %v4544 = vcombine.low %v4018, %v4019
        %v4545 = vcombine.low %v4020, %v4021
        %v4547 = vunpack.c.l.s4 1983009808
        %v4548 = vunpack.c.0.s8 %v4547
        %v4549 = vlaneseq
        %v4550 = vshrl.u32 %v4549, 7
        %v4551 = vsub.s32 %v4548, %v4550
        %v4552 = vrot.slane %v4544, %v4551
        %v4554 = vunpack.c.l.s4 1983009808
        %v4555 = vunpack.c.0.s8 %v4554
        %v4556 = vlaneseq
        %v4557 = vshrl.u32 %v4556, 7
        %v4558 = vsub.s32 %v4555, %v4557
        %v4559 = vrot.slane %v4545, %v4558
        %v4560 = vcombine.low %v4552, %v4559
        %v4561 = vcombine.low %v4022, %v4023
        %v4562 = vcombine.low %v4024, %v4025
        %v4564 = vunpack.c.l.s4 1983009808
        %v4565 = vunpack.c.0.s8 %v4564
        %v4566 = vlaneseq
        %v4567 = vshrl.u32 %v4566, 7
        %v4568 = vsub.s32 %v4565, %v4567
        %v4569 = vrot.slane %v4561, %v4568
        %v4571 = vunpack.c.l.s4 1983009808
        %v4572 = vunpack.c.0.s8 %v4571
        %v4573 = vlaneseq
        %v4574 = vshrl.u32 %v4573, 7
        %v4575 = vsub.s32 %v4572, %v4574
        %v4576 = vrot.slane %v4562, %v4575
        %v4577 = vcombine.low %v4569, %v4576
        %v4578 = vcombine.low %v3946, %v3947
        %v4579 = vcombine.low %v3948, %v3949
        %v4581 = vunpack.c.l.s4 1983009808
        %v4582 = vunpack.c.0.s8 %v4581
        %v4583 = vlaneseq
        %v4584 = vshrl.u32 %v4583, 7
        %v4585 = vsub.s32 %v4582, %v4584
        %v4586 = vrot.slane %v4578, %v4585
        %v4588 = vunpack.c.l.s4 1983009808
        %v4589 = vunpack.c.0.s8 %v4588
        %v4590 = vlaneseq
        %v4591 = vshrl.u32 %v4590, 7
        %v4592 = vsub.s32 %v4589, %v4591
        %v4593 = vrot.slane %v4579, %v4592
        %v4594 = vcombine.low %v4586, %v4593
        %v4595 = vcombine.low %v3950, %v3951
        %v4596 = vcombine.low %v3952, %v3953
        %v4598 = vunpack.c.l.s4 1983009808
        %v4599 = vunpack.c.0.s8 %v4598
        %v4600 = vlaneseq
        %v4601 = vshrl.u32 %v4600, 7
        %v4602 = vsub.s32 %v4599, %v4601
        %v4603 = vrot.slane %v4595, %v4602
        %v4605 = vunpack.c.l.s4 1983009808
        %v4606 = vunpack.c.0.s8 %v4605
        %v4607 = vlaneseq
        %v4608 = vshrl.u32 %v4607, 7
        %v4609 = vsub.s32 %v4606, %v4608
        %v4610 = vrot.slane %v4596, %v4609
        %v4611 = vcombine.low %v4603, %v4610
        %v4612 = vcombine.low %v4026, %v4027
        %v4613 = vcombine.low %v4028, %v4029
        %v4615 = vunpack.c.l.s4 1983009808
        %v4616 = vunpack.c.0.s8 %v4615
        %v4617 = vlaneseq
        %v4618 = vshrl.u32 %v4617, 7
        %v4619 = vsub.s32 %v4616, %v4618
        %v4620 = vrot.slane %v4612, %v4619
        %v4622 = vunpack.c.l.s4 1983009808
        %v4623 = vunpack.c.0.s8 %v4622
        %v4624 = vlaneseq
        %v4625 = vshrl.u32 %v4624, 7
        %v4626 = vsub.s32 %v4623, %v4625
        %v4627 = vrot.slane %v4613, %v4626
        %v4628 = vcombine.low %v4620, %v4627
        %v4629 = vcombine.low %v4030, %v4031
        %v4630 = vcombine.low %v4032, %v4033
        %v4632 = vunpack.c.l.s4 1983009808
        %v4633 = vunpack.c.0.s8 %v4632
        %v4634 = vlaneseq
        %v4635 = vshrl.u32 %v4634, 7
        %v4636 = vsub.s32 %v4633, %v4635
        %v4637 = vrot.slane %v4629, %v4636
        %v4639 = vunpack.c.l.s4 1983009808
        %v4640 = vunpack.c.0.s8 %v4639
        %v4641 = vlaneseq
        %v4642 = vshrl.u32 %v4641, 7
        %v4643 = vsub.s32 %v4640, %v4642
        %v4644 = vrot.slane %v4630, %v4643
        %v4645 = vcombine.low %v4637, %v4644
        %v4646 = vcombine.low %v3954, %v3955
        %v4647 = vcombine.low %v3956, %v3957
        %v4649 = vunpack.c.l.s4 1983009808
        %v4650 = vunpack.c.0.s8 %v4649
        %v4651 = vlaneseq
        %v4652 = vshrl.u32 %v4651, 7
        %v4653 = vsub.s32 %v4650, %v4652
        %v4654 = vrot.slane %v4646, %v4653
        %v4656 = vunpack.c.l.s4 1983009808
        %v4657 = vunpack.c.0.s8 %v4656
        %v4658 = vlaneseq
        %v4659 = vshrl.u32 %v4658, 7
        %v4660 = vsub.s32 %v4657, %v4659
        %v4661 = vrot.slane %v4647, %v4660
        %v4662 = vcombine.low %v4654, %v4661
        %v4663 = vcombine.low %v3958, %v3959
        %v4664 = vcombine.low %v3960, %v3961
        %v4666 = vunpack.c.l.s4 1983009808
        %v4667 = vunpack.c.0.s8 %v4666
        %v4668 = vlaneseq
        %v4669 = vshrl.u32 %v4668, 7
        %v4670 = vsub.s32 %v4667, %v4669
        %v4671 = vrot.slane %v4663, %v4670
        %v4673 = vunpack.c.l.s4 1983009808
        %v4674 = vunpack.c.0.s8 %v4673
        %v4675 = vlaneseq
        %v4676 = vshrl.u32 %v4675, 7
        %v4677 = vsub.s32 %v4674, %v4676
        %v4678 = vrot.slane %v4664, %v4677
        %v4679 = vcombine.low %v4671, %v4678
        %v4680 = vcombine.low %v4034, %v4035
        %v4681 = vcombine.low %v4036, %v4037
        %v4683 = vunpack.c.l.s4 1983009808
        %v4684 = vunpack.c.0.s8 %v4683
        %v4685 = vlaneseq
        %v4686 = vshrl.u32 %v4685, 7
        %v4687 = vsub.s32 %v4684, %v4686
        %v4688 = vrot.slane %v4680, %v4687
        %v4690 = vunpack.c.l.s4 1983009808
        %v4691 = vunpack.c.0.s8 %v4690
        %v4692 = vlaneseq
        %v4693 = vshrl.u32 %v4692, 7
        %v4694 = vsub.s32 %v4691, %v4693
        %v4695 = vrot.slane %v4681, %v4694
        %v4696 = vcombine.low %v4688, %v4695
        %v4697 = vcombine.low %v4038, %v4039
        %v4698 = vcombine.low %v4040, %v4041
        %v4700 = vunpack.c.l.s4 1983009808
        %v4701 = vunpack.c.0.s8 %v4700
        %v4702 = vlaneseq
        %v4703 = vshrl.u32 %v4702, 7
        %v4704 = vsub.s32 %v4701, %v4703
        %v4705 = vrot.slane %v4697, %v4704
        %v4707 = vunpack.c.l.s4 1983009808
        %v4708 = vunpack.c.0.s8 %v4707
        %v4709 = vlaneseq
        %v4710 = vshrl.u32 %v4709, 7
        %v4711 = vsub.s32 %v4708, %v4710
        %v4712 = vrot.slane %v4698, %v4711
        %v4713 = vcombine.low %v4705, %v4712
        %v4746 = vpack.c.bf16 %v4203, %v4186
        %v4747 = vpack.c.bf16 %v4237, %v4220
        %v4748 = vpack.c.bf16 %v4271, %v4254
        %v4749 = vpack.c.bf16 %v4305, %v4288
        %v4750 = vpack.c.bf16 %v4339, %v4322
        %v4751 = vpack.c.bf16 %v4373, %v4356
        %v4752 = vpack.c.bf16 %v4407, %v4390
        %v4753 = vpack.c.bf16 %v4441, %v4424
        %v4754 = vpack.c.bf16 %v4475, %v4458
        %v4755 = vpack.c.bf16 %v4509, %v4492
        %v4756 = vpack.c.bf16 %v4543, %v4526
        %v4757 = vpack.c.bf16 %v4577, %v4560
        %v4758 = vpack.c.bf16 %v4611, %v4594
        %v4759 = vpack.c.bf16 %v4645, %v4628
        %v4760 = vpack.c.bf16 %v4679, %v4662
        %v4761 = vpack.c.bf16 %v4713, %v4696
        %v4762 = vld [vmem:[%s450] sm:$0xf]
        %v4763 = vld [vmem:[%s450 + $0x4] sm:$0xf]
        %v4764 = vld [vmem:[%s450 + $0x8] sm:$0xf]
        %v4765 = vld [vmem:[%s450 + $0xc] sm:$0xf]
        %v4766 = vld [vmem:[%s450 + $0x10] sm:$0xf]
        %v4767 = vld [vmem:[%s450 + $0x14] sm:$0xf]
        %v4768 = vld [vmem:[%s450 + $0x18] sm:$0xf]
        %v4769 = vld [vmem:[%s450 + $0x1c] sm:$0xf]
        %v4770 = vld [vmem:[%s450 + $0x20] sm:$0xf]
        %v4771 = vld [vmem:[%s450 + $0x24] sm:$0xf]
        %v4772 = vld [vmem:[%s450 + $0x28] sm:$0xf]
        %v4773 = vld [vmem:[%s450 + $0x2c] sm:$0xf]
        %v4774 = vld [vmem:[%s450 + $0x30] sm:$0xf]
        %v4775 = vld [vmem:[%s450 + $0x34] sm:$0xf]
        %v4776 = vld [vmem:[%s450 + $0x38] sm:$0xf]
        %v4777 = vld [vmem:[%s450 + $0x3c] sm:$0xf]
        %v4778 = vld [vmem:[%s450 + $0x40] sm:$0xf]
        %v4779 = vld [vmem:[%s450 + $0x44] sm:$0xf]
        %v4780 = vld [vmem:[%s450 + $0x48] sm:$0xf]
        %v4781 = vld [vmem:[%s450 + $0x4c] sm:$0xf]
        %v4782 = vld [vmem:[%s450 + $0x50] sm:$0xf]
        %v4783 = vld [vmem:[%s450 + $0x54] sm:$0xf]
        %v4784 = vld [vmem:[%s450 + $0x58] sm:$0xf]
        %v4785 = vld [vmem:[%s450 + $0x5c] sm:$0xf]
        %v4786 = vld [vmem:[%s450 + $0x60] sm:$0xf]
        %v4787 = vld [vmem:[%s450 + $0x64] sm:$0xf]
        %v4788 = vld [vmem:[%s450 + $0x68] sm:$0xf]
        %v4789 = vld [vmem:[%s450 + $0x6c] sm:$0xf]
        %v4790 = vld [vmem:[%s450 + $0x70] sm:$0xf]
        %v4791 = vld [vmem:[%s450 + $0x74] sm:$0xf]
        %v4792 = vld [vmem:[%s450 + $0x78] sm:$0xf]
        %v4793 = vld [vmem:[%s450 + $0x7c] sm:$0xf]
        %v4794 = vld [vmem:[%s4] sm:$0xf]
        %v4795 = vld [vmem:[%s4 + $0x4] sm:$0xf]
        %v4796 = vld [vmem:[%s4 + $0x8] sm:$0xf]
        %v4797 = vld [vmem:[%s4 + $0xc] sm:$0xf]
        %v4798 = vld [vmem:[%s5] sm:$0x1]
        %v4800 = vlaneseq
        %v4801 = vshrl.u32 %v4800, 7
        %v4802 = vsub.s32 0, %v4801
        %v4803 = vrot.slane %v4798, %v4802
        %v4837 = vunpack.c.l.b16 %v4762
        %v4838 = vunpack.c.l.b16 %v4763
        %v4839 = vunpack.c.l.b16 %v4764
        %v4840 = vunpack.c.l.b16 %v4765
        %v4841 = vunpack.c.l.b16 %v4766
        %v4842 = vunpack.c.l.b16 %v4767
        %v4843 = vunpack.c.l.b16 %v4768
        %v4844 = vunpack.c.l.b16 %v4769
        %v4845 = vunpack.c.l.b16 %v4770
        %v4846 = vunpack.c.l.b16 %v4771
        %v4847 = vunpack.c.l.b16 %v4772
        %v4848 = vunpack.c.l.b16 %v4773
        %v4849 = vunpack.c.l.b16 %v4774
        %v4850 = vunpack.c.l.b16 %v4775
        %v4851 = vunpack.c.l.b16 %v4776
        %v4852 = vunpack.c.l.b16 %v4777
        %v4853 = vunpack.c.l.b16 %v4778
        %v4854 = vunpack.c.l.b16 %v4779
        %v4855 = vunpack.c.l.b16 %v4780
        %v4856 = vunpack.c.l.b16 %v4781
        %v4857 = vunpack.c.l.b16 %v4782
        %v4858 = vunpack.c.l.b16 %v4783
        %v4859 = vunpack.c.l.b16 %v4784
        %v4860 = vunpack.c.l.b16 %v4785
        %v4861 = vunpack.c.l.b16 %v4786
        %v4862 = vunpack.c.l.b16 %v4787
        %v4863 = vunpack.c.l.b16 %v4788
        %v4864 = vunpack.c.l.b16 %v4789
        %v4865 = vunpack.c.l.b16 %v4790
        %v4866 = vunpack.c.l.b16 %v4791
        %v4867 = vunpack.c.l.b16 %v4792
        %v4868 = vunpack.c.l.b16 %v4793
        %v4869 = vpack.c.b16 %v4838, %v4837
        %v4870 = vpack.c.b16 %v4840, %v4839
        %v4871 = vpack.c.b16 %v4842, %v4841
        %v4872 = vpack.c.b16 %v4844, %v4843
        %v4873 = vpack.c.b16 %v4846, %v4845
        %v4874 = vpack.c.b16 %v4848, %v4847
        %v4875 = vpack.c.b16 %v4850, %v4849
        %v4876 = vpack.c.b16 %v4852, %v4851
        %v4877 = vpack.c.b16 %v4854, %v4853
        %v4878 = vpack.c.b16 %v4856, %v4855
        %v4879 = vpack.c.b16 %v4858, %v4857
        %v4880 = vpack.c.b16 %v4860, %v4859
        %v4881 = vpack.c.b16 %v4862, %v4861
        %v4882 = vpack.c.b16 %v4864, %v4863
        %v4883 = vpack.c.b16 %v4866, %v4865
        %v4884 = vpack.c.b16 %v4868, %v4867
        %v4889 = vunpack.c.l.b16 %v4794
        %v4890 = vunpack.c.l.b16 %v4795
        %v4891 = vunpack.c.l.b16 %v4796
        %v4892 = vunpack.c.l.b16 %v4797
        %v4893 = vpack.c.b16 %v4890, %v4889
        %v4894 = vpack.c.b16 %v4892, %v4891
        %vm4897 = vcmask 261120
        %v4899 = vsel %vm4897, %v4869, 0
        %v4902 = vsel %vm4897, %v4870, 0
        %v4905 = vsel %vm4897, %v4871, 0
        %v4908 = vsel %vm4897, %v4872, 0
        %v4911 = vsel %vm4897, %v4873, 0
        %v4914 = vsel %vm4897, %v4874, 0
        %v4917 = vsel %vm4897, %v4875, 0
        %v4920 = vsel %vm4897, %v4876, 0
        %v4923 = vsel %vm4897, %v4877, 0
        %v4926 = vsel %vm4897, %v4878, 0
        %v4929 = vsel %vm4897, %v4879, 0
        %v4932 = vsel %vm4897, %v4880, 0
        %v4935 = vsel %vm4897, %v4881, 0
        %v4938 = vsel %vm4897, %v4882, 0
        %v4941 = vsel %vm4897, %v4883, 0
        %v4944 = vsel %vm4897, %v4884, 0
        %4946 = vmatprep.subr.bf16.mxu0 0
        %4947 = vmatpush1.bf16.msra.mxu0 %v4893
        %4948 = vmatprep.subr.bf16.mxu0 0
        %4949 = vmatpush1.bf16.msra.mxu0 %v4894
        %4950 = vmatprep.subr.bf16.mxu0 0
        %4951 = vmatpush1.bf16.msra.mxu0 0
        %4952 = vmatprep.subr.bf16.mxu0 0
        %4953 = vmatpush1.bf16.msra.mxu0 0
        %4954 = vmatprep.subr.bf16.mxu0 0
        %4955 = vmatpush1.bf16.msra.mxu0 0
        %4956 = vmatprep.subr.bf16.mxu0 0
        %4957 = vmatpush1.bf16.msra.mxu0 0
        %4958 = vmatprep.subr.bf16.mxu0 0
        %4959 = vmatpush1.bf16.msra.mxu0 0
        %4960 = vmatprep.subr.bf16.mxu0 0
        %4961 = vmatpush1.bf16.msra.mxu0 0
        %4962 = vmatprep.subr.bf16.mxu0 0
        %4963 = vmatpush1.bf16.msra.mxu0 0
        %4964 = vmatprep.subr.bf16.mxu0 0
        %4965 = vmatpush1.bf16.msra.mxu0 0
        %4966 = vmatprep.subr.bf16.mxu0 0
        %4967 = vmatpush1.bf16.msra.mxu0 0
        %4968 = vmatprep.subr.bf16.mxu0 0
        %4969 = vmatpush1.bf16.msra.mxu0 0
        %4970 = vmatprep.subr.bf16.mxu0 0
        %4971 = vmatpush1.bf16.msra.mxu0 0
        %4972 = vmatprep.subr.bf16.mxu0 0
        %4973 = vmatpush1.bf16.msra.mxu0 0
        %4974 = vmatprep.subr.bf16.mxu0 0
        %4975 = vmatpush1.bf16.msra.mxu0 0
        %4976 = vmatprep.subr.bf16.mxu0 0
        %4977 = vmatpush1.bf16.msra.mxu0 0
        %4978 = vmatprep.mubr.bf16.mxu0 0
        %4979 = vmatmul.mubr.bf16.gmra.mrb[0].mxu0 %v4899
        %v4980 = vpop.f32.mrb[0].mxu0
        %v4981 = vadd.f32 %v4803, %v4980
        %v4982 = vpop.f32.mrb[0].mxu0
        %v4983 = vpop.f32.mrb[0].mxu0
        %v4984 = vadd.f32 %v4803, %v4983
        %v4985 = vpop.f32.mrb[0].mxu0
        %4986 = vmatprep.mubr.bf16.mxu0 0
        %4987 = vmatmul.mubr.bf16.gmra.mrb[0].mxu0 %v4902
        %v4988 = vpop.f32.mrb[0].mxu0
        %v4989 = vadd.f32 %v4803, %v4988
        %v4990 = vpop.f32.mrb[0].mxu0
        %v4991 = vpop.f32.mrb[0].mxu0
        %v4992 = vadd.f32 %v4803, %v4991
        %v4993 = vpop.f32.mrb[0].mxu0
        %4994 = vmatprep.mubr.bf16.mxu0 0
        %4995 = vmatmul.mubr.bf16.gmra.mrb[0].mxu0 %v4905
        %v4996 = vpop.f32.mrb[0].mxu0
        %v4997 = vadd.f32 %v4803, %v4996
        %v4998 = vpop.f32.mrb[0].mxu0
        %v4999 = vpop.f32.mrb[0].mxu0
        %v5000 = vadd.f32 %v4803, %v4999
        %v5001 = vpop.f32.mrb[0].mxu0
        %5002 = vmatprep.mubr.bf16.mxu0 0
        %5003 = vmatmul.mubr.bf16.gmra.mrb[0].mxu0 %v4908
        %v5004 = vpop.f32.mrb[0].mxu0
        %v5005 = vadd.f32 %v4803, %v5004
        %v5006 = vpop.f32.mrb[0].mxu0
        %v5007 = vpop.f32.mrb[0].mxu0
        %v5008 = vadd.f32 %v4803, %v5007
        %v5009 = vpop.f32.mrb[0].mxu0
        %5010 = vmatprep.mubr.bf16.mxu0 0
        %5011 = vmatmul.mubr.bf16.gmra.mrb[0].mxu0 %v4911
        %v5012 = vpop.f32.mrb[0].mxu0
        %v5013 = vadd.f32 %v4803, %v5012
        %v5014 = vpop.f32.mrb[0].mxu0
        %v5015 = vpop.f32.mrb[0].mxu0
        %v5016 = vadd.f32 %v4803, %v5015
        %v5017 = vpop.f32.mrb[0].mxu0
        %5018 = vmatprep.mubr.bf16.mxu0 0
        %5019 = vmatmul.mubr.bf16.gmra.mrb[0].mxu0 %v4914
        %v5020 = vpop.f32.mrb[0].mxu0
        %v5021 = vadd.f32 %v4803, %v5020
        %v5022 = vpop.f32.mrb[0].mxu0
        %v5023 = vpop.f32.mrb[0].mxu0
        %v5024 = vadd.f32 %v4803, %v5023
        %v5025 = vpop.f32.mrb[0].mxu0
        %5026 = vmatprep.mubr.bf16.mxu0 0
        %5027 = vmatmul.mubr.bf16.gmra.mrb[0].mxu0 %v4917
        %v5028 = vpop.f32.mrb[0].mxu0
        %v5029 = vadd.f32 %v4803, %v5028
        %v5030 = vpop.f32.mrb[0].mxu0
        %v5031 = vpop.f32.mrb[0].mxu0
        %v5032 = vadd.f32 %v4803, %v5031
        %v5033 = vpop.f32.mrb[0].mxu0
        %5034 = vmatprep.mubr.bf16.mxu0 0
        %5035 = vmatmul.mubr.bf16.gmra.mrb[0].mxu0 %v4920
        %v5036 = vpop.f32.mrb[0].mxu0
        %v5037 = vadd.f32 %v4803, %v5036
        %v5038 = vpop.f32.mrb[0].mxu0
        %v5039 = vpop.f32.mrb[0].mxu0
        %v5040 = vadd.f32 %v4803, %v5039
        %v5041 = vpop.f32.mrb[0].mxu0
        %5042 = vmatprep.mubr.bf16.mxu0 0
        %5043 = vmatmul.mubr.bf16.gmra.mrb[0].mxu0 %v4923
        %v5044 = vpop.f32.mrb[0].mxu0
        %v5045 = vadd.f32 %v4803, %v5044
        %v5046 = vpop.f32.mrb[0].mxu0
        %v5047 = vpop.f32.mrb[0].mxu0
        %v5048 = vadd.f32 %v4803, %v5047
        %v5049 = vpop.f32.mrb[0].mxu0
        %5050 = vmatprep.mubr.bf16.mxu0 0
        %5051 = vmatmul.mubr.bf16.gmra.mrb[0].mxu0 %v4926
        %v5052 = vpop.f32.mrb[0].mxu0
        %v5053 = vadd.f32 %v4803, %v5052
        %v5054 = vpop.f32.mrb[0].mxu0
        %v5055 = vpop.f32.mrb[0].mxu0
        %v5056 = vadd.f32 %v4803, %v5055
        %v5057 = vpop.f32.mrb[0].mxu0
        %5058 = vmatprep.mubr.bf16.mxu0 0
        %5059 = vmatmul.mubr.bf16.gmra.mrb[0].mxu0 %v4929
        %v5060 = vpop.f32.mrb[0].mxu0
        %v5061 = vadd.f32 %v4803, %v5060
        %v5062 = vpop.f32.mrb[0].mxu0
        %v5063 = vpop.f32.mrb[0].mxu0
        %v5064 = vadd.f32 %v4803, %v5063
        %v5065 = vpop.f32.mrb[0].mxu0
        %5066 = vmatprep.mubr.bf16.mxu0 0
        %5067 = vmatmul.mubr.bf16.gmra.mrb[0].mxu0 %v4932
        %v5068 = vpop.f32.mrb[0].mxu0
        %v5069 = vadd.f32 %v4803, %v5068
        %v5070 = vpop.f32.mrb[0].mxu0
        %v5071 = vpop.f32.mrb[0].mxu0
        %v5072 = vadd.f32 %v4803, %v5071
        %v5073 = vpop.f32.mrb[0].mxu0
        %5074 = vmatprep.mubr.bf16.mxu0 0
        %5075 = vmatmul.mubr.bf16.gmra.mrb[0].mxu0 %v4935
        %v5076 = vpop.f32.mrb[0].mxu0
        %v5077 = vadd.f32 %v4803, %v5076
        %v5078 = vpop.f32.mrb[0].mxu0
        %v5079 = vpop.f32.mrb[0].mxu0
        %v5080 = vadd.f32 %v4803, %v5079
        %v5081 = vpop.f32.mrb[0].mxu0
        %5082 = vmatprep.mubr.bf16.mxu0 0
        %5083 = vmatmul.mubr.bf16.gmra.mrb[0].mxu0 %v4938
        %v5084 = vpop.f32.mrb[0].mxu0
        %v5085 = vadd.f32 %v4803, %v5084
        %v5086 = vpop.f32.mrb[0].mxu0
        %v5087 = vpop.f32.mrb[0].mxu0
        %v5088 = vadd.f32 %v4803, %v5087
        %v5089 = vpop.f32.mrb[0].mxu0
        %5090 = vmatprep.mubr.bf16.mxu0 0
        %5091 = vmatmul.mubr.bf16.gmra.mrb[0].mxu0 %v4941
        %v5092 = vpop.f32.mrb[0].mxu0
        %v5093 = vadd.f32 %v4803, %v5092
        %v5094 = vpop.f32.mrb[0].mxu0
        %v5095 = vpop.f32.mrb[0].mxu0
        %v5096 = vadd.f32 %v4803, %v5095
        %v5097 = vpop.f32.mrb[0].mxu0
        %5098 = vmatprep.mubr.bf16.mxu0 0
        %5099 = vmatmul.mubr.bf16.gmra.mrb[0].mxu0 %v4944
        %v5100 = vpop.f32.mrb[0].mxu0
        %v5101 = vadd.f32 %v4803, %v5100
        %v5102 = vpop.f32.mrb[0].mxu0
        %v5103 = vpop.f32.mrb[0].mxu0
        %v5104 = vadd.f32 %v4803, %v5103
        %v5105 = vpop.f32.mrb[0].mxu0
        %5106 = vdwg.mxu0
        %v5107 = vsub.f32 0.0, %v4981
        %v5108 = vsub.f32 0.0, %v4984
        %v5109 = vsub.f32 0.0, %v4989
        %v5110 = vsub.f32 0.0, %v4992
        %v5111 = vsub.f32 0.0, %v4997
        %v5112 = vsub.f32 0.0, %v5000
        %v5113 = vsub.f32 0.0, %v5005
        %v5114 = vsub.f32 0.0, %v5008
        %v5115 = vsub.f32 0.0, %v5013
        %v5116 = vsub.f32 0.0, %v5016
        %v5117 = vsub.f32 0.0, %v5021
        %v5118 = vsub.f32 0.0, %v5024
        %v5119 = vsub.f32 0.0, %v5029
        %v5120 = vsub.f32 0.0, %v5032
        %v5121 = vsub.f32 0.0, %v5037
        %v5122 = vsub.f32 0.0, %v5040
        %v5123 = vsub.f32 0.0, %v5045
        %v5124 = vsub.f32 0.0, %v5048
        %v5125 = vsub.f32 0.0, %v5053
        %v5126 = vsub.f32 0.0, %v5056
        %v5127 = vsub.f32 0.0, %v5061
        %v5128 = vsub.f32 0.0, %v5064
        %v5129 = vsub.f32 0.0, %v5069
        %v5130 = vsub.f32 0.0, %v5072
        %v5131 = vsub.f32 0.0, %v5077
        %v5132 = vsub.f32 0.0, %v5080
        %v5133 = vsub.f32 0.0, %v5085
        %v5134 = vsub.f32 0.0, %v5088
        %v5135 = vsub.f32 0.0, %v5093
        %v5136 = vsub.f32 0.0, %v5096
        %v5137 = vsub.f32 0.0, %v5101
        %v5138 = vsub.f32 0.0, %v5104
        %v5139 = vmul.f32 %v5107, 1.442695
        %v5140 = vpow.pop %v5139
        %v5141 = vmul.f32 %v5108, 1.442695
        %v5142 = vpow.pop %v5141
        %v5143 = vmul.f32 %v5109, 1.442695
        %v5144 = vpow.pop %v5143
        %v5145 = vmul.f32 %v5110, 1.442695
        %v5146 = vpow.pop %v5145
        %v5147 = vmul.f32 %v5111, 1.442695
        %v5148 = vpow.pop %v5147
        %v5149 = vmul.f32 %v5112, 1.442695
        %v5150 = vpow.pop %v5149
        %v5151 = vmul.f32 %v5113, 1.442695
        %v5152 = vpow.pop %v5151
        %v5153 = vmul.f32 %v5114, 1.442695
        %v5154 = vpow.pop %v5153
        %v5155 = vmul.f32 %v5115, 1.442695
        %v5156 = vpow.pop %v5155
        %v5157 = vmul.f32 %v5116, 1.442695
        %v5158 = vpow.pop %v5157
        %v5159 = vmul.f32 %v5117, 1.442695
        %v5160 = vpow.pop %v5159
        %v5161 = vmul.f32 %v5118, 1.442695
        %v5162 = vpow.pop %v5161
        %v5163 = vmul.f32 %v5119, 1.442695
        %v5164 = vpow.pop %v5163
        %v5165 = vmul.f32 %v5120, 1.442695
        %v5166 = vpow.pop %v5165
        %v5167 = vmul.f32 %v5121, 1.442695
        %v5168 = vpow.pop %v5167
        %v5169 = vmul.f32 %v5122, 1.442695
        %v5170 = vpow.pop %v5169
        %v5171 = vmul.f32 %v5123, 1.442695
        %v5172 = vpow.pop %v5171
        %v5173 = vmul.f32 %v5124, 1.442695
        %v5174 = vpow.pop %v5173
        %v5175 = vmul.f32 %v5125, 1.442695
        %v5176 = vpow.pop %v5175
        %v5177 = vmul.f32 %v5126, 1.442695
        %v5178 = vpow.pop %v5177
        %v5179 = vmul.f32 %v5127, 1.442695
        %v5180 = vpow.pop %v5179
        %v5181 = vmul.f32 %v5128, 1.442695
        %v5182 = vpow.pop %v5181
        %v5183 = vmul.f32 %v5129, 1.442695
        %v5184 = vpow.pop %v5183
        %v5185 = vmul.f32 %v5130, 1.442695
        %v5186 = vpow.pop %v5185
        %v5187 = vmul.f32 %v5131, 1.442695
        %v5188 = vpow.pop %v5187
        %v5189 = vmul.f32 %v5132, 1.442695
        %v5190 = vpow.pop %v5189
        %v5191 = vmul.f32 %v5133, 1.442695
        %v5192 = vpow.pop %v5191
        %v5193 = vmul.f32 %v5134, 1.442695
        %v5194 = vpow.pop %v5193
        %v5195 = vmul.f32 %v5135, 1.442695
        %v5196 = vpow.pop %v5195
        %v5197 = vmul.f32 %v5136, 1.442695
        %v5198 = vpow.pop %v5197
        %v5199 = vmul.f32 %v5137, 1.442695
        %v5200 = vpow.pop %v5199
        %v5201 = vmul.f32 %v5138, 1.442695
        %v5202 = vpow.pop %v5201
        %v5203 = vadd.f32 %v5140, 1.0
        %v5204 = vadd.f32 %v5142, 1.0
        %v5205 = vadd.f32 %v5144, 1.0
        %v5206 = vadd.f32 %v5146, 1.0
        %v5207 = vadd.f32 %v5148, 1.0
        %v5208 = vadd.f32 %v5150, 1.0
        %v5209 = vadd.f32 %v5152, 1.0
        %v5210 = vadd.f32 %v5154, 1.0
        %v5211 = vadd.f32 %v5156, 1.0
        %v5212 = vadd.f32 %v5158, 1.0
        %v5213 = vadd.f32 %v5160, 1.0
        %v5214 = vadd.f32 %v5162, 1.0
        %v5215 = vadd.f32 %v5164, 1.0
        %v5216 = vadd.f32 %v5166, 1.0
        %v5217 = vadd.f32 %v5168, 1.0
        %v5218 = vadd.f32 %v5170, 1.0
        %v5219 = vadd.f32 %v5172, 1.0
        %v5220 = vadd.f32 %v5174, 1.0
        %v5221 = vadd.f32 %v5176, 1.0
        %v5222 = vadd.f32 %v5178, 1.0
        %v5223 = vadd.f32 %v5180, 1.0
        %v5224 = vadd.f32 %v5182, 1.0
        %v5225 = vadd.f32 %v5184, 1.0
        %v5226 = vadd.f32 %v5186, 1.0
        %v5227 = vadd.f32 %v5188, 1.0
        %v5228 = vadd.f32 %v5190, 1.0
        %v5229 = vadd.f32 %v5192, 1.0
        %v5230 = vadd.f32 %v5194, 1.0
        %v5231 = vadd.f32 %v5196, 1.0
        %v5232 = vadd.f32 %v5198, 1.0
        %v5233 = vadd.f32 %v5200, 1.0
        %v5234 = vadd.f32 %v5202, 1.0
        %v5235 = vrcp.pop %v5203
        %v5236 = vmul.f32 1.0, %v5235
        %v5237 = vrcp.pop %v5204
        %v5238 = vmul.f32 1.0, %v5237
        %v5239 = vrcp.pop %v5205
        %v5240 = vmul.f32 1.0, %v5239
        %v5241 = vrcp.pop %v5206
        %v5242 = vmul.f32 1.0, %v5241
        %v5243 = vrcp.pop %v5207
        %v5244 = vmul.f32 1.0, %v5243
        %v5245 = vrcp.pop %v5208
        %v5246 = vmul.f32 1.0, %v5245
        %v5247 = vrcp.pop %v5209
        %v5248 = vmul.f32 1.0, %v5247
        %v5249 = vrcp.pop %v5210
        %v5250 = vmul.f32 1.0, %v5249
        %v5251 = vrcp.pop %v5211
        %v5252 = vmul.f32 1.0, %v5251
        %v5253 = vrcp.pop %v5212
        %v5254 = vmul.f32 1.0, %v5253
        %v5255 = vrcp.pop %v5213
        %v5256 = vmul.f32 1.0, %v5255
        %v5257 = vrcp.pop %v5214
        %v5258 = vmul.f32 1.0, %v5257
        %v5259 = vrcp.pop %v5215
        %v5260 = vmul.f32 1.0, %v5259
        %v5261 = vrcp.pop %v5216
        %v5262 = vmul.f32 1.0, %v5261
        %v5263 = vrcp.pop %v5217
        %v5264 = vmul.f32 1.0, %v5263
        %v5265 = vrcp.pop %v5218
        %v5266 = vmul.f32 1.0, %v5265
        %v5267 = vrcp.pop %v5219
        %v5268 = vmul.f32 1.0, %v5267
        %v5269 = vrcp.pop %v5220
        %v5270 = vmul.f32 1.0, %v5269
        %v5271 = vrcp.pop %v5221
        %v5272 = vmul.f32 1.0, %v5271
        %v5273 = vrcp.pop %v5222
        %v5274 = vmul.f32 1.0, %v5273
        %v5275 = vrcp.pop %v5223
        %v5276 = vmul.f32 1.0, %v5275
        %v5277 = vrcp.pop %v5224
        %v5278 = vmul.f32 1.0, %v5277
        %v5279 = vrcp.pop %v5225
        %v5280 = vmul.f32 1.0, %v5279
        %v5281 = vrcp.pop %v5226
        %v5282 = vmul.f32 1.0, %v5281
        %v5283 = vrcp.pop %v5227
        %v5284 = vmul.f32 1.0, %v5283
        %v5285 = vrcp.pop %v5228
        %v5286 = vmul.f32 1.0, %v5285
        %v5287 = vrcp.pop %v5229
        %v5288 = vmul.f32 1.0, %v5287
        %v5289 = vrcp.pop %v5230
        %v5290 = vmul.f32 1.0, %v5289
        %v5291 = vrcp.pop %v5231
        %v5292 = vmul.f32 1.0, %v5291
        %v5293 = vrcp.pop %v5232
        %v5294 = vmul.f32 1.0, %v5293
        %v5295 = vrcp.pop %v5233
        %v5296 = vmul.f32 1.0, %v5295
        %v5297 = vrcp.pop %v5234
        %v5298 = vmul.f32 1.0, %v5297
        %v5299 = vmul.f32 %v4981, %v5236
        %v5300 = vmul.f32 %v4984, %v5238
        %v5301 = vmul.f32 %v4989, %v5240
        %v5302 = vmul.f32 %v4992, %v5242
        %v5303 = vmul.f32 %v4997, %v5244
        %v5304 = vmul.f32 %v5000, %v5246
        %v5305 = vmul.f32 %v5005, %v5248
        %v5306 = vmul.f32 %v5008, %v5250
        %v5307 = vmul.f32 %v5013, %v5252
        %v5308 = vmul.f32 %v5016, %v5254
        %v5309 = vmul.f32 %v5021, %v5256
        %v5310 = vmul.f32 %v5024, %v5258
        %v5311 = vmul.f32 %v5029, %v5260
        %v5312 = vmul.f32 %v5032, %v5262
        %v5313 = vmul.f32 %v5037, %v5264
        %v5314 = vmul.f32 %v5040, %v5266
        %v5315 = vmul.f32 %v5045, %v5268
        %v5316 = vmul.f32 %v5048, %v5270
        %v5317 = vmul.f32 %v5053, %v5272
        %v5318 = vmul.f32 %v5056, %v5274
        %v5319 = vmul.f32 %v5061, %v5276
        %v5320 = vmul.f32 %v5064, %v5278
        %v5321 = vmul.f32 %v5069, %v5280
        %v5322 = vmul.f32 %v5072, %v5282
        %v5323 = vmul.f32 %v5077, %v5284
        %v5324 = vmul.f32 %v5080, %v5286
        %v5325 = vmul.f32 %v5085, %v5288
        %v5326 = vmul.f32 %v5088, %v5290
        %v5327 = vmul.f32 %v5093, %v5292
        %v5328 = vmul.f32 %v5096, %v5294
        %v5329 = vmul.f32 %v5101, %v5296
        %v5330 = vmul.f32 %v5104, %v5298
        %v5331 = vpack.c.bf16 %v5300, %v5299
        %v5332 = vpack.c.bf16 %v5302, %v5301
        %v5333 = vpack.c.bf16 %v5304, %v5303
        %v5334 = vpack.c.bf16 %v5306, %v5305
        %v5335 = vpack.c.bf16 %v5308, %v5307
        %v5336 = vpack.c.bf16 %v5310, %v5309
        %v5337 = vpack.c.bf16 %v5312, %v5311
        %v5338 = vpack.c.bf16 %v5314, %v5313
        %v5339 = vpack.c.bf16 %v5316, %v5315
        %v5340 = vpack.c.bf16 %v5318, %v5317
        %v5341 = vpack.c.bf16 %v5320, %v5319
        %v5342 = vpack.c.bf16 %v5322, %v5321
        %v5343 = vpack.c.bf16 %v5324, %v5323
        %v5344 = vpack.c.bf16 %v5326, %v5325
        %v5345 = vpack.c.bf16 %v5328, %v5327
        %v5346 = vpack.c.bf16 %v5330, %v5329
        %v5347 = vld [vmem:[%s6] sm:$0xf]
        %v5348 = vld [vmem:[%s6 + $0x4] sm:$0xf]
        %v5349 = vld [vmem:[%s6 + $0x8] sm:$0xf]
        %v5350 = vld [vmem:[%s6 + $0xc] sm:$0xf]
        %v5351 = vld [vmem:[%s7] sm:$0x1]
        %v5353 = vlaneseq
        %v5354 = vshrl.u32 %v5353, 7
        %v5355 = vsub.s32 0, %v5354
        %v5356 = vrot.slane %v5351, %v5355
        %v5362 = vunpack.c.l.b16 %v5347
        %v5363 = vunpack.c.l.b16 %v5348
        %v5364 = vunpack.c.l.b16 %v5349
        %v5365 = vunpack.c.l.b16 %v5350
        %v5366 = vpack.c.b16 %v5363, %v5362
        %v5367 = vpack.c.b16 %v5365, %v5364
        %v5371 = vsel %vm4897, %v4746, 0
        %v5374 = vsel %vm4897, %v4747, 0
        %v5377 = vsel %vm4897, %v4748, 0
        %v5380 = vsel %vm4897, %v4749, 0
        %v5383 = vsel %vm4897, %v4750, 0
        %v5386 = vsel %vm4897, %v4751, 0
        %v5389 = vsel %vm4897, %v4752, 0
        %v5392 = vsel %vm4897, %v4753, 0
        %v5395 = vsel %vm4897, %v4754, 0
        %v5398 = vsel %vm4897, %v4755, 0
        %v5401 = vsel %vm4897, %v4756, 0
        %v5404 = vsel %vm4897, %v4757, 0
        %v5407 = vsel %vm4897, %v4758, 0
        %v5410 = vsel %vm4897, %v4759, 0
        %v5413 = vsel %vm4897, %v4760, 0
        %v5416 = vsel %vm4897, %v4761, 0
        %5418 = vmatprep.subr.bf16.mxu0 0
        %5419 = vmatpush1.bf16.msra.mxu0 %v5366
        %5420 = vmatprep.subr.bf16.mxu0 0
        %5421 = vmatpush1.bf16.msra.mxu0 %v5367
        %5422 = vmatprep.subr.bf16.mxu0 0
        %5423 = vmatpush1.bf16.msra.mxu0 0
        %5424 = vmatprep.subr.bf16.mxu0 0
        %5425 = vmatpush1.bf16.msra.mxu0 0
        %5426 = vmatprep.subr.bf16.mxu0 0
        %5427 = vmatpush1.bf16.msra.mxu0 0
        %5428 = vmatprep.subr.bf16.mxu0 0
        %5429 = vmatpush1.bf16.msra.mxu0 0
        %5430 = vmatprep.subr.bf16.mxu0 0
        %5431 = vmatpush1.bf16.msra.mxu0 0
        %5432 = vmatprep.subr.bf16.mxu0 0
        %5433 = vmatpush1.bf16.msra.mxu0 0
        %5434 = vmatprep.subr.bf16.mxu0 0
        %5435 = vmatpush1.bf16.msra.mxu0 0
        %5436 = vmatprep.subr.bf16.mxu0 0
        %5437 = vmatpush1.bf16.msra.mxu0 0
        %5438 = vmatprep.subr.bf16.mxu0 0
        %5439 = vmatpush1.bf16.msra.mxu0 0
        %5440 = vmatprep.subr.bf16.mxu0 0
        %5441 = vmatpush1.bf16.msra.mxu0 0
        %5442 = vmatprep.subr.bf16.mxu0 0
        %5443 = vmatpush1.bf16.msra.mxu0 0
        %5444 = vmatprep.subr.bf16.mxu0 0
        %5445 = vmatpush1.bf16.msra.mxu0 0
        %5446 = vmatprep.subr.bf16.mxu0 0
        %5447 = vmatpush1.bf16.msra.mxu0 0
        %5448 = vmatprep.subr.bf16.mxu0 0
        %5449 = vmatpush1.bf16.msra.mxu0 0
        %5450 = vmatprep.mubr.bf16.mxu0 0
        %5451 = vmatmul.mubr.bf16.gmra.mrb[0].mxu0 %v5371
        %v5452 = vpop.f32.mrb[0].mxu0
        %v5453 = vadd.f32 %v5356, %v5452
        %v5454 = vpop.f32.mrb[0].mxu0
        %v5455 = vpop.f32.mrb[0].mxu0
        %v5456 = vadd.f32 %v5356, %v5455
        %v5457 = vpop.f32.mrb[0].mxu0
        %5458 = vmatprep.mubr.bf16.mxu0 0
        %5459 = vmatmul.mubr.bf16.gmra.mrb[0].mxu0 %v5374
        %v5460 = vpop.f32.mrb[0].mxu0
        %v5461 = vadd.f32 %v5356, %v5460
        %v5462 = vpop.f32.mrb[0].mxu0
        %v5463 = vpop.f32.mrb[0].mxu0
        %v5464 = vadd.f32 %v5356, %v5463
        %v5465 = vpop.f32.mrb[0].mxu0
        %5466 = vmatprep.mubr.bf16.mxu0 0
        %5467 = vmatmul.mubr.bf16.gmra.mrb[0].mxu0 %v5377
        %v5468 = vpop.f32.mrb[0].mxu0
        %v5469 = vadd.f32 %v5356, %v5468
        %v5470 = vpop.f32.mrb[0].mxu0
        %v5471 = vpop.f32.mrb[0].mxu0
        %v5472 = vadd.f32 %v5356, %v5471
        %v5473 = vpop.f32.mrb[0].mxu0
        %5474 = vmatprep.mubr.bf16.mxu0 0
        %5475 = vmatmul.mubr.bf16.gmra.mrb[0].mxu0 %v5380
        %v5476 = vpop.f32.mrb[0].mxu0
        %v5477 = vadd.f32 %v5356, %v5476
        %v5478 = vpop.f32.mrb[0].mxu0
        %v5479 = vpop.f32.mrb[0].mxu0
        %v5480 = vadd.f32 %v5356, %v5479
        %v5481 = vpop.f32.mrb[0].mxu0
        %5482 = vmatprep.mubr.bf16.mxu0 0
        %5483 = vmatmul.mubr.bf16.gmra.mrb[0].mxu0 %v5383
        %v5484 = vpop.f32.mrb[0].mxu0
        %v5485 = vadd.f32 %v5356, %v5484
        %v5486 = vpop.f32.mrb[0].mxu0
        %v5487 = vpop.f32.mrb[0].mxu0
        %v5488 = vadd.f32 %v5356, %v5487
        %v5489 = vpop.f32.mrb[0].mxu0
        %5490 = vmatprep.mubr.bf16.mxu0 0
        %5491 = vmatmul.mubr.bf16.gmra.mrb[0].mxu0 %v5386
        %v5492 = vpop.f32.mrb[0].mxu0
        %v5493 = vadd.f32 %v5356, %v5492
        %v5494 = vpop.f32.mrb[0].mxu0
        %v5495 = vpop.f32.mrb[0].mxu0
        %v5496 = vadd.f32 %v5356, %v5495
        %v5497 = vpop.f32.mrb[0].mxu0
        %5498 = vmatprep.mubr.bf16.mxu0 0
        %5499 = vmatmul.mubr.bf16.gmra.mrb[0].mxu0 %v5389
        %v5500 = vpop.f32.mrb[0].mxu0
        %v5501 = vadd.f32 %v5356, %v5500
        %v5502 = vpop.f32.mrb[0].mxu0
        %v5503 = vpop.f32.mrb[0].mxu0
        %v5504 = vadd.f32 %v5356, %v5503
        %v5505 = vpop.f32.mrb[0].mxu0
        %5506 = vmatprep.mubr.bf16.mxu0 0
        %5507 = vmatmul.mubr.bf16.gmra.mrb[0].mxu0 %v5392
        %v5508 = vpop.f32.mrb[0].mxu0
        %v5509 = vadd.f32 %v5356, %v5508
        %v5510 = vpop.f32.mrb[0].mxu0
        %v5511 = vpop.f32.mrb[0].mxu0
        %v5512 = vadd.f32 %v5356, %v5511
        %v5513 = vpop.f32.mrb[0].mxu0
        %5514 = vmatprep.mubr.bf16.mxu0 0
        %5515 = vmatmul.mubr.bf16.gmra.mrb[0].mxu0 %v5395
        %v5516 = vpop.f32.mrb[0].mxu0
        %v5517 = vadd.f32 %v5356, %v5516
        %v5518 = vpop.f32.mrb[0].mxu0
        %v5519 = vpop.f32.mrb[0].mxu0
        %v5520 = vadd.f32 %v5356, %v5519
        %v5521 = vpop.f32.mrb[0].mxu0
        %5522 = vmatprep.mubr.bf16.mxu0 0
        %5523 = vmatmul.mubr.bf16.gmra.mrb[0].mxu0 %v5398
        %v5524 = vpop.f32.mrb[0].mxu0
        %v5525 = vadd.f32 %v5356, %v5524
        %v5526 = vpop.f32.mrb[0].mxu0
        %v5527 = vpop.f32.mrb[0].mxu0
        %v5528 = vadd.f32 %v5356, %v5527
        %v5529 = vpop.f32.mrb[0].mxu0
        %5530 = vmatprep.mubr.bf16.mxu0 0
        %5531 = vmatmul.mubr.bf16.gmra.mrb[0].mxu0 %v5401
        %v5532 = vpop.f32.mrb[0].mxu0
        %v5533 = vadd.f32 %v5356, %v5532
        %v5534 = vpop.f32.mrb[0].mxu0
        %v5535 = vpop.f32.mrb[0].mxu0
        %v5536 = vadd.f32 %v5356, %v5535
        %v5537 = vpop.f32.mrb[0].mxu0
        %5538 = vmatprep.mubr.bf16.mxu0 0
        %5539 = vmatmul.mubr.bf16.gmra.mrb[0].mxu0 %v5404
        %v5540 = vpop.f32.mrb[0].mxu0
        %v5541 = vadd.f32 %v5356, %v5540
        %v5542 = vpop.f32.mrb[0].mxu0
        %v5543 = vpop.f32.mrb[0].mxu0
        %v5544 = vadd.f32 %v5356, %v5543
        %v5545 = vpop.f32.mrb[0].mxu0
        %5546 = vmatprep.mubr.bf16.mxu0 0
        %5547 = vmatmul.mubr.bf16.gmra.mrb[0].mxu0 %v5407
        %v5548 = vpop.f32.mrb[0].mxu0
        %v5549 = vadd.f32 %v5356, %v5548
        %v5550 = vpop.f32.mrb[0].mxu0
        %v5551 = vpop.f32.mrb[0].mxu0
        %v5552 = vadd.f32 %v5356, %v5551
        %v5553 = vpop.f32.mrb[0].mxu0
        %5554 = vmatprep.mubr.bf16.mxu0 0
        %5555 = vmatmul.mubr.bf16.gmra.mrb[0].mxu0 %v5410
        %v5556 = vpop.f32.mrb[0].mxu0
        %v5557 = vadd.f32 %v5356, %v5556
        %v5558 = vpop.f32.mrb[0].mxu0
        %v5559 = vpop.f32.mrb[0].mxu0
        %v5560 = vadd.f32 %v5356, %v5559
        %v5561 = vpop.f32.mrb[0].mxu0
        %5562 = vmatprep.mubr.bf16.mxu0 0
        %5563 = vmatmul.mubr.bf16.gmra.mrb[0].mxu0 %v5413
        %v5564 = vpop.f32.mrb[0].mxu0
        %v5565 = vadd.f32 %v5356, %v5564
        %v5566 = vpop.f32.mrb[0].mxu0
        %v5567 = vpop.f32.mrb[0].mxu0
        %v5568 = vadd.f32 %v5356, %v5567
        %v5569 = vpop.f32.mrb[0].mxu0
        %5570 = vmatprep.mubr.bf16.mxu0 0
        %5571 = vmatmul.mubr.bf16.gmra.mrb[0].mxu0 %v5416
        %v5572 = vpop.f32.mrb[0].mxu0
        %v5573 = vadd.f32 %v5356, %v5572
        %v5574 = vpop.f32.mrb[0].mxu0
        %v5575 = vpop.f32.mrb[0].mxu0
        %v5576 = vadd.f32 %v5356, %v5575
        %v5577 = vpop.f32.mrb[0].mxu0
        %5578 = vdwg.mxu0
        %v5579 = vsub.f32 0.0, %v5453
        %v5580 = vsub.f32 0.0, %v5456
        %v5581 = vsub.f32 0.0, %v5461
        %v5582 = vsub.f32 0.0, %v5464
        %v5583 = vsub.f32 0.0, %v5469
        %v5584 = vsub.f32 0.0, %v5472
        %v5585 = vsub.f32 0.0, %v5477
        %v5586 = vsub.f32 0.0, %v5480
        %v5587 = vsub.f32 0.0, %v5485
        %v5588 = vsub.f32 0.0, %v5488
        %v5589 = vsub.f32 0.0, %v5493
        %v5590 = vsub.f32 0.0, %v5496
        %v5591 = vsub.f32 0.0, %v5501
        %v5592 = vsub.f32 0.0, %v5504
        %v5593 = vsub.f32 0.0, %v5509
        %v5594 = vsub.f32 0.0, %v5512
        %v5595 = vsub.f32 0.0, %v5517
        %v5596 = vsub.f32 0.0, %v5520
        %v5597 = vsub.f32 0.0, %v5525
        %v5598 = vsub.f32 0.0, %v5528
        %v5599 = vsub.f32 0.0, %v5533
        %v5600 = vsub.f32 0.0, %v5536
        %v5601 = vsub.f32 0.0, %v5541
        %v5602 = vsub.f32 0.0, %v5544
        %v5603 = vsub.f32 0.0, %v5549
        %v5604 = vsub.f32 0.0, %v5552
        %v5605 = vsub.f32 0.0, %v5557
        %v5606 = vsub.f32 0.0, %v5560
        %v5607 = vsub.f32 0.0, %v5565
        %v5608 = vsub.f32 0.0, %v5568
        %v5609 = vsub.f32 0.0, %v5573
        %v5610 = vsub.f32 0.0, %v5576
        %v5611 = vmul.f32 %v5579, 1.442695
        %v5612 = vpow.pop %v5611
        %v5613 = vmul.f32 %v5580, 1.442695
        %v5614 = vpow.pop %v5613
        %v5615 = vmul.f32 %v5581, 1.442695
        %v5616 = vpow.pop %v5615
        %v5617 = vmul.f32 %v5582, 1.442695
        %v5618 = vpow.pop %v5617
        %v5619 = vmul.f32 %v5583, 1.442695
        %v5620 = vpow.pop %v5619
        %v5621 = vmul.f32 %v5584, 1.442695
        %v5622 = vpow.pop %v5621
        %v5623 = vmul.f32 %v5585, 1.442695
        %v5624 = vpow.pop %v5623
        %v5625 = vmul.f32 %v5586, 1.442695
        %v5626 = vpow.pop %v5625
        %v5627 = vmul.f32 %v5587, 1.442695
        %v5628 = vpow.pop %v5627
        %v5629 = vmul.f32 %v5588, 1.442695
        %v5630 = vpow.pop %v5629
        %v5631 = vmul.f32 %v5589, 1.442695
        %v5632 = vpow.pop %v5631
        %v5633 = vmul.f32 %v5590, 1.442695
        %v5634 = vpow.pop %v5633
        %v5635 = vmul.f32 %v5591, 1.442695
        %v5636 = vpow.pop %v5635
        %v5637 = vmul.f32 %v5592, 1.442695
        %v5638 = vpow.pop %v5637
        %v5639 = vmul.f32 %v5593, 1.442695
        %v5640 = vpow.pop %v5639
        %v5641 = vmul.f32 %v5594, 1.442695
        %v5642 = vpow.pop %v5641
        %v5643 = vmul.f32 %v5595, 1.442695
        %v5644 = vpow.pop %v5643
        %v5645 = vmul.f32 %v5596, 1.442695
        %v5646 = vpow.pop %v5645
        %v5647 = vmul.f32 %v5597, 1.442695
        %v5648 = vpow.pop %v5647
        %v5649 = vmul.f32 %v5598, 1.442695
        %v5650 = vpow.pop %v5649
        %v5651 = vmul.f32 %v5599, 1.442695
        %v5652 = vpow.pop %v5651
        %v5653 = vmul.f32 %v5600, 1.442695
        %v5654 = vpow.pop %v5653
        %v5655 = vmul.f32 %v5601, 1.442695
        %v5656 = vpow.pop %v5655
        %v5657 = vmul.f32 %v5602, 1.442695
        %v5658 = vpow.pop %v5657
        %v5659 = vmul.f32 %v5603, 1.442695
        %v5660 = vpow.pop %v5659
        %v5661 = vmul.f32 %v5604, 1.442695
        %v5662 = vpow.pop %v5661
        %v5663 = vmul.f32 %v5605, 1.442695
        %v5664 = vpow.pop %v5663
        %v5665 = vmul.f32 %v5606, 1.442695
        %v5666 = vpow.pop %v5665
        %v5667 = vmul.f32 %v5607, 1.442695
        %v5668 = vpow.pop %v5667
        %v5669 = vmul.f32 %v5608, 1.442695
        %v5670 = vpow.pop %v5669
        %v5671 = vmul.f32 %v5609, 1.442695
        %v5672 = vpow.pop %v5671
        %v5673 = vmul.f32 %v5610, 1.442695
        %v5674 = vpow.pop %v5673
        %v5675 = vadd.f32 %v5612, 1.0
        %v5676 = vadd.f32 %v5614, 1.0
        %v5677 = vadd.f32 %v5616, 1.0
        %v5678 = vadd.f32 %v5618, 1.0
        %v5679 = vadd.f32 %v5620, 1.0
        %v5680 = vadd.f32 %v5622, 1.0
        %v5681 = vadd.f32 %v5624, 1.0
        %v5682 = vadd.f32 %v5626, 1.0
        %v5683 = vadd.f32 %v5628, 1.0
        %v5684 = vadd.f32 %v5630, 1.0
        %v5685 = vadd.f32 %v5632, 1.0
        %v5686 = vadd.f32 %v5634, 1.0
        %v5687 = vadd.f32 %v5636, 1.0
        %v5688 = vadd.f32 %v5638, 1.0
        %v5689 = vadd.f32 %v5640, 1.0
        %v5690 = vadd.f32 %v5642, 1.0
        %v5691 = vadd.f32 %v5644, 1.0
        %v5692 = vadd.f32 %v5646, 1.0
        %v5693 = vadd.f32 %v5648, 1.0
        %v5694 = vadd.f32 %v5650, 1.0
        %v5695 = vadd.f32 %v5652, 1.0
        %v5696 = vadd.f32 %v5654, 1.0
        %v5697 = vadd.f32 %v5656, 1.0
        %v5698 = vadd.f32 %v5658, 1.0
        %v5699 = vadd.f32 %v5660, 1.0
        %v5700 = vadd.f32 %v5662, 1.0
        %v5701 = vadd.f32 %v5664, 1.0
        %v5702 = vadd.f32 %v5666, 1.0
        %v5703 = vadd.f32 %v5668, 1.0
        %v5704 = vadd.f32 %v5670, 1.0
        %v5705 = vadd.f32 %v5672, 1.0
        %v5706 = vadd.f32 %v5674, 1.0
        %v5707 = vrcp.pop %v5675
        %v5708 = vmul.f32 1.0, %v5707
        %v5709 = vrcp.pop %v5676
        %v5710 = vmul.f32 1.0, %v5709
        %v5711 = vrcp.pop %v5677
        %v5712 = vmul.f32 1.0, %v5711
        %v5713 = vrcp.pop %v5678
        %v5714 = vmul.f32 1.0, %v5713
        %v5715 = vrcp.pop %v5679
        %v5716 = vmul.f32 1.0, %v5715
        %v5717 = vrcp.pop %v5680
        %v5718 = vmul.f32 1.0, %v5717
        %v5719 = vrcp.pop %v5681
        %v5720 = vmul.f32 1.0, %v5719
        %v5721 = vrcp.pop %v5682
        %v5722 = vmul.f32 1.0, %v5721
        %v5723 = vrcp.pop %v5683
        %v5724 = vmul.f32 1.0, %v5723
        %v5725 = vrcp.pop %v5684
        %v5726 = vmul.f32 1.0, %v5725
        %v5727 = vrcp.pop %v5685
        %v5728 = vmul.f32 1.0, %v5727
        %v5729 = vrcp.pop %v5686
        %v5730 = vmul.f32 1.0, %v5729
        %v5731 = vrcp.pop %v5687
        %v5732 = vmul.f32 1.0, %v5731
        %v5733 = vrcp.pop %v5688
        %v5734 = vmul.f32 1.0, %v5733
        %v5735 = vrcp.pop %v5689
        %v5736 = vmul.f32 1.0, %v5735
        %v5737 = vrcp.pop %v5690
        %v5738 = vmul.f32 1.0, %v5737
        %v5739 = vrcp.pop %v5691
        %v5740 = vmul.f32 1.0, %v5739
        %v5741 = vrcp.pop %v5692
        %v5742 = vmul.f32 1.0, %v5741
        %v5743 = vrcp.pop %v5693
        %v5744 = vmul.f32 1.0, %v5743
        %v5745 = vrcp.pop %v5694
        %v5746 = vmul.f32 1.0, %v5745
        %v5747 = vrcp.pop %v5695
        %v5748 = vmul.f32 1.0, %v5747
        %v5749 = vrcp.pop %v5696
        %v5750 = vmul.f32 1.0, %v5749
        %v5751 = vrcp.pop %v5697
        %v5752 = vmul.f32 1.0, %v5751
        %v5753 = vrcp.pop %v5698
        %v5754 = vmul.f32 1.0, %v5753
        %v5755 = vrcp.pop %v5699
        %v5756 = vmul.f32 1.0, %v5755
        %v5757 = vrcp.pop %v5700
        %v5758 = vmul.f32 1.0, %v5757
        %v5759 = vrcp.pop %v5701
        %v5760 = vmul.f32 1.0, %v5759
        %v5761 = vrcp.pop %v5702
        %v5762 = vmul.f32 1.0, %v5761
        %v5763 = vrcp.pop %v5703
        %v5764 = vmul.f32 1.0, %v5763
        %v5765 = vrcp.pop %v5704
        %v5766 = vmul.f32 1.0, %v5765
        %v5767 = vrcp.pop %v5705
        %v5768 = vmul.f32 1.0, %v5767
        %v5769 = vrcp.pop %v5706
        %v5770 = vmul.f32 1.0, %v5769
        %v5771 = vmul.f32 %v5453, %v5708
        %v5772 = vmul.f32 %v5456, %v5710
        %v5773 = vmul.f32 %v5461, %v5712
        %v5774 = vmul.f32 %v5464, %v5714
        %v5775 = vmul.f32 %v5469, %v5716
        %v5776 = vmul.f32 %v5472, %v5718
        %v5777 = vmul.f32 %v5477, %v5720
        %v5778 = vmul.f32 %v5480, %v5722
        %v5779 = vmul.f32 %v5485, %v5724
        %v5780 = vmul.f32 %v5488, %v5726
        %v5781 = vmul.f32 %v5493, %v5728
        %v5782 = vmul.f32 %v5496, %v5730
        %v5783 = vmul.f32 %v5501, %v5732
        %v5784 = vmul.f32 %v5504, %v5734
        %v5785 = vmul.f32 %v5509, %v5736
        %v5786 = vmul.f32 %v5512, %v5738
        %v5787 = vmul.f32 %v5517, %v5740
        %v5788 = vmul.f32 %v5520, %v5742
        %v5789 = vmul.f32 %v5525, %v5744
        %v5790 = vmul.f32 %v5528, %v5746
        %v5791 = vmul.f32 %v5533, %v5748
        %v5792 = vmul.f32 %v5536, %v5750
        %v5793 = vmul.f32 %v5541, %v5752
        %v5794 = vmul.f32 %v5544, %v5754
        %v5795 = vmul.f32 %v5549, %v5756
        %v5796 = vmul.f32 %v5552, %v5758
        %v5797 = vmul.f32 %v5557, %v5760
        %v5798 = vmul.f32 %v5560, %v5762
        %v5799 = vmul.f32 %v5565, %v5764
        %v5800 = vmul.f32 %v5568, %v5766
        %v5801 = vmul.f32 %v5573, %v5768
        %v5802 = vmul.f32 %v5576, %v5770
        %v5803 = vpack.c.bf16 %v5772, %v5771
        %v5804 = vpack.c.bf16 %v5774, %v5773
        %v5805 = vpack.c.bf16 %v5776, %v5775
        %v5806 = vpack.c.bf16 %v5778, %v5777
        %v5807 = vpack.c.bf16 %v5780, %v5779
        %v5808 = vpack.c.bf16 %v5782, %v5781
        %v5809 = vpack.c.bf16 %v5784, %v5783
        %v5810 = vpack.c.bf16 %v5786, %v5785
        %v5811 = vpack.c.bf16 %v5788, %v5787
        %v5812 = vpack.c.bf16 %v5790, %v5789
        %v5813 = vpack.c.bf16 %v5792, %v5791
        %v5814 = vpack.c.bf16 %v5794, %v5793
        %v5815 = vpack.c.bf16 %v5796, %v5795
        %v5816 = vpack.c.bf16 %v5798, %v5797
        %v5817 = vpack.c.bf16 %v5800, %v5799
        %v5818 = vpack.c.bf16 %v5802, %v5801
        %v5819 = vld [vmem:[%s8] sm:$0xf]
        %v5820 = vld [vmem:[%s9] sm:$0xf]
        %vm5821 = vcmask 64512
        %v5823 = vsel %vm5821, %v5803, 0
        %v5826 = vsel %vm5821, %v5804, 0
        %v5829 = vsel %vm5821, %v5805, 0
        %v5832 = vsel %vm5821, %v5806, 0
        %v5835 = vsel %vm5821, %v5807, 0
        %v5838 = vsel %vm5821, %v5808, 0
        %v5841 = vsel %vm5821, %v5809, 0
        %v5844 = vsel %vm5821, %v5810, 0
        %v5847 = vsel %vm5821, %v5811, 0
        %v5850 = vsel %vm5821, %v5812, 0
        %v5853 = vsel %vm5821, %v5813, 0
        %v5856 = vsel %vm5821, %v5814, 0
        %v5859 = vsel %vm5821, %v5815, 0
        %v5862 = vsel %vm5821, %v5816, 0
        %v5865 = vsel %vm5821, %v5817, 0
        %v5868 = vsel %vm5821, %v5818, 0
        %vm5870 = vcmask 1043456
        %v5872 = vsel %vm5870, %v5820, 0
        %5874 = vmatprep.subr.bf16.mxu0 0
        %5875 = vmatpush1.bf16.msra.mxu0 %v5872
        %5876 = vmatprep.subr.bf16.mxu0 0
        %5877 = vmatpush1.bf16.msra.mxu0 0
        %5878 = vmatprep.subr.bf16.mxu0 0
        %5879 = vmatpush1.bf16.msra.mxu0 0
        %5880 = vmatprep.subr.bf16.mxu0 0
        %5881 = vmatpush1.bf16.msra.mxu0 0
        %5882 = vmatprep.subr.bf16.mxu0 0
        %5883 = vmatpush1.bf16.msra.mxu0 0
        %5884 = vmatprep.subr.bf16.mxu0 0
        %5885 = vmatpush1.bf16.msra.mxu0 0
        %5886 = vmatprep.subr.bf16.mxu0 0
        %5887 = vmatpush1.bf16.msra.mxu0 0
        %5888 = vmatprep.subr.bf16.mxu0 0
        %5889 = vmatpush1.bf16.msra.mxu0 0
        %5890 = vmatprep.subr.bf16.mxu0 0
        %5891 = vmatpush1.bf16.msra.mxu0 0
        %5892 = vmatprep.subr.bf16.mxu0 0
        %5893 = vmatpush1.bf16.msra.mxu0 0
        %5894 = vmatprep.subr.bf16.mxu0 0
        %5895 = vmatpush1.bf16.msra.mxu0 0
        %5896 = vmatprep.subr.bf16.mxu0 0
        %5897 = vmatpush1.bf16.msra.mxu0 0
        %5898 = vmatprep.subr.bf16.mxu0 0
        %5899 = vmatpush1.bf16.msra.mxu0 0
        %5900 = vmatprep.subr.bf16.mxu0 0
        %5901 = vmatpush1.bf16.msra.mxu0 0
        %5902 = vmatprep.subr.bf16.mxu0 0
        %5903 = vmatpush1.bf16.msra.mxu0 0
        %5904 = vmatprep.subr.bf16.mxu0 0
        %5905 = vmatpush1.bf16.msra.mxu0 0
        %5906 = vmatprep.mubr.bf16.mxu0 0
        %5907 = vmatmul.mubr.bf16.gmra.mrb[0].mxu0 %v5823
        %v5908 = vpop.f32.mrb[0].mxu0
        %v5909 = vadd.f32 0.0, %v5908
        %v5910 = vpop.f32.mrb[0].mxu0
        %v5911 = vpop.f32.mrb[0].mxu0
        %v5912 = vadd.f32 0.0, %v5911
        %v5913 = vpop.f32.mrb[0].mxu0
        %5914 = vmatprep.mubr.bf16.mxu0 0
        %5915 = vmatmul.mubr.bf16.gmra.mrb[0].mxu0 %v5826
        %v5916 = vpop.f32.mrb[0].mxu0
        %v5917 = vadd.f32 0.0, %v5916
        %v5918 = vpop.f32.mrb[0].mxu0
        %v5919 = vpop.f32.mrb[0].mxu0
        %v5920 = vadd.f32 0.0, %v5919
        %v5921 = vpop.f32.mrb[0].mxu0
        %5922 = vmatprep.mubr.bf16.mxu0 0
        %5923 = vmatmul.mubr.bf16.gmra.mrb[0].mxu0 %v5829
        %v5924 = vpop.f32.mrb[0].mxu0
        %v5925 = vadd.f32 0.0, %v5924
        %v5926 = vpop.f32.mrb[0].mxu0
        %v5927 = vpop.f32.mrb[0].mxu0
        %v5928 = vadd.f32 0.0, %v5927
        %v5929 = vpop.f32.mrb[0].mxu0
        %5930 = vmatprep.mubr.bf16.mxu0 0
        %5931 = vmatmul.mubr.bf16.gmra.mrb[0].mxu0 %v5832
        %v5932 = vpop.f32.mrb[0].mxu0
        %v5933 = vadd.f32 0.0, %v5932
        %v5934 = vpop.f32.mrb[0].mxu0
        %v5935 = vpop.f32.mrb[0].mxu0
        %v5936 = vadd.f32 0.0, %v5935
        %v5937 = vpop.f32.mrb[0].mxu0
        %5938 = vmatprep.mubr.bf16.mxu0 0
        %5939 = vmatmul.mubr.bf16.gmra.mrb[0].mxu0 %v5835
        %v5940 = vpop.f32.mrb[0].mxu0
        %v5941 = vadd.f32 0.0, %v5940
        %v5942 = vpop.f32.mrb[0].mxu0
        %v5943 = vpop.f32.mrb[0].mxu0
        %v5944 = vadd.f32 0.0, %v5943
        %v5945 = vpop.f32.mrb[0].mxu0
        %5946 = vmatprep.mubr.bf16.mxu0 0
        %5947 = vmatmul.mubr.bf16.gmra.mrb[0].mxu0 %v5838
        %v5948 = vpop.f32.mrb[0].mxu0
        %v5949 = vadd.f32 0.0, %v5948
        %v5950 = vpop.f32.mrb[0].mxu0
        %v5951 = vpop.f32.mrb[0].mxu0
        %v5952 = vadd.f32 0.0, %v5951
        %v5953 = vpop.f32.mrb[0].mxu0
        %5954 = vmatprep.mubr.bf16.mxu0 0
        %5955 = vmatmul.mubr.bf16.gmra.mrb[0].mxu0 %v5841
        %v5956 = vpop.f32.mrb[0].mxu0
        %v5957 = vadd.f32 0.0, %v5956
        %v5958 = vpop.f32.mrb[0].mxu0
        %v5959 = vpop.f32.mrb[0].mxu0
        %v5960 = vadd.f32 0.0, %v5959
        %v5961 = vpop.f32.mrb[0].mxu0
        %5962 = vmatprep.mubr.bf16.mxu0 0
        %5963 = vmatmul.mubr.bf16.gmra.mrb[0].mxu0 %v5844
        %v5964 = vpop.f32.mrb[0].mxu0
        %v5965 = vadd.f32 0.0, %v5964
        %v5966 = vpop.f32.mrb[0].mxu0
        %v5967 = vpop.f32.mrb[0].mxu0
        %v5968 = vadd.f32 0.0, %v5967
        %v5969 = vpop.f32.mrb[0].mxu0
        %5970 = vmatprep.mubr.bf16.mxu0 0
        %5971 = vmatmul.mubr.bf16.gmra.mrb[0].mxu0 %v5847
        %v5972 = vpop.f32.mrb[0].mxu0
        %v5973 = vadd.f32 0.0, %v5972
        %v5974 = vpop.f32.mrb[0].mxu0
        %v5975 = vpop.f32.mrb[0].mxu0
        %v5976 = vadd.f32 0.0, %v5975
        %v5977 = vpop.f32.mrb[0].mxu0
        %5978 = vmatprep.mubr.bf16.mxu0 0
        %5979 = vmatmul.mubr.bf16.gmra.mrb[0].mxu0 %v5850
        %v5980 = vpop.f32.mrb[0].mxu0
        %v5981 = vadd.f32 0.0, %v5980
        %v5982 = vpop.f32.mrb[0].mxu0
        %v5983 = vpop.f32.mrb[0].mxu0
        %v5984 = vadd.f32 0.0, %v5983
        %v5985 = vpop.f32.mrb[0].mxu0
        %5986 = vmatprep.mubr.bf16.mxu0 0
        %5987 = vmatmul.mubr.bf16.gmra.mrb[0].mxu0 %v5853
        %v5988 = vpop.f32.mrb[0].mxu0
        %v5989 = vadd.f32 0.0, %v5988
        %v5990 = vpop.f32.mrb[0].mxu0
        %v5991 = vpop.f32.mrb[0].mxu0
        %v5992 = vadd.f32 0.0, %v5991
        %v5993 = vpop.f32.mrb[0].mxu0
        %5994 = vmatprep.mubr.bf16.mxu0 0
        %5995 = vmatmul.mubr.bf16.gmra.mrb[0].mxu0 %v5856
        %v5996 = vpop.f32.mrb[0].mxu0
        %v5997 = vadd.f32 0.0, %v5996
        %v5998 = vpop.f32.mrb[0].mxu0
        %v5999 = vpop.f32.mrb[0].mxu0
        %v6000 = vadd.f32 0.0, %v5999
        %v6001 = vpop.f32.mrb[0].mxu0
        %6002 = vmatprep.mubr.bf16.mxu0 0
        %6003 = vmatmul.mubr.bf16.gmra.mrb[0].mxu0 %v5859
        %v6004 = vpop.f32.mrb[0].mxu0
        %v6005 = vadd.f32 0.0, %v6004
        %v6006 = vpop.f32.mrb[0].mxu0
        %v6007 = vpop.f32.mrb[0].mxu0
        %v6008 = vadd.f32 0.0, %v6007
        %v6009 = vpop.f32.mrb[0].mxu0
        %6010 = vmatprep.mubr.bf16.mxu0 0
        %6011 = vmatmul.mubr.bf16.gmra.mrb[0].mxu0 %v5862
        %v6012 = vpop.f32.mrb[0].mxu0
        %v6013 = vadd.f32 0.0, %v6012
        %v6014 = vpop.f32.mrb[0].mxu0
        %v6015 = vpop.f32.mrb[0].mxu0
        %v6016 = vadd.f32 0.0, %v6015
        %v6017 = vpop.f32.mrb[0].mxu0
        %6018 = vmatprep.mubr.bf16.mxu0 0
        %6019 = vmatmul.mubr.bf16.gmra.mrb[0].mxu0 %v5865
        %v6020 = vpop.f32.mrb[0].mxu0
        %v6021 = vadd.f32 0.0, %v6020
        %v6022 = vpop.f32.mrb[0].mxu0
        %v6023 = vpop.f32.mrb[0].mxu0
        %v6024 = vadd.f32 0.0, %v6023
        %v6025 = vpop.f32.mrb[0].mxu0
        %6026 = vmatprep.mubr.bf16.mxu0 0
        %6027 = vmatmul.mubr.bf16.gmra.mrb[0].mxu0 %v5868
        %v6028 = vpop.f32.mrb[0].mxu0
        %v6029 = vadd.f32 0.0, %v6028
        %v6030 = vpop.f32.mrb[0].mxu0
        %v6031 = vpop.f32.mrb[0].mxu0
        %v6032 = vadd.f32 0.0, %v6031
        %v6033 = vpop.f32.mrb[0].mxu0
        %6034 = vdwg.mxu0
        %v6036 = vsel %vm5821, %v5331, 0
        %v6039 = vsel %vm5821, %v5332, 0
        %v6042 = vsel %vm5821, %v5333, 0
        %v6045 = vsel %vm5821, %v5334, 0
        %v6048 = vsel %vm5821, %v5335, 0
        %v6051 = vsel %vm5821, %v5336, 0
        %v6054 = vsel %vm5821, %v5337, 0
        %v6057 = vsel %vm5821, %v5338, 0
        %v6060 = vsel %vm5821, %v5339, 0
        %v6063 = vsel %vm5821, %v5340, 0
        %v6066 = vsel %vm5821, %v5341, 0
        %v6069 = vsel %vm5821, %v5342, 0
        %v6072 = vsel %vm5821, %v5343, 0
        %v6075 = vsel %vm5821, %v5344, 0
        %v6078 = vsel %vm5821, %v5345, 0
        %v6081 = vsel %vm5821, %v5346, 0
        %v6084 = vsel %vm5870, %v5819, 0
        %6086 = vmatprep.subr.bf16.mxu0 0
        %6087 = vmatpush1.bf16.msra.mxu0 %v6084
        %6088 = vmatprep.subr.bf16.mxu0 0
        %6089 = vmatpush1.bf16.msra.mxu0 0
        %6090 = vmatprep.subr.bf16.mxu0 0
        %6091 = vmatpush1.bf16.msra.mxu0 0
        %6092 = vmatprep.subr.bf16.mxu0 0
        %6093 = vmatpush1.bf16.msra.mxu0 0
        %6094 = vmatprep.subr.bf16.mxu0 0
        %6095 = vmatpush1.bf16.msra.mxu0 0
        %6096 = vmatprep.subr.bf16.mxu0 0
        %6097 = vmatpush1.bf16.msra.mxu0 0
        %6098 = vmatprep.subr.bf16.mxu0 0
        %6099 = vmatpush1.bf16.msra.mxu0 0
        %6100 = vmatprep.subr.bf16.mxu0 0
        %6101 = vmatpush1.bf16.msra.mxu0 0
        %6102 = vmatprep.subr.bf16.mxu0 0
        %6103 = vmatpush1.bf16.msra.mxu0 0
        %6104 = vmatprep.subr.bf16.mxu0 0
        %6105 = vmatpush1.bf16.msra.mxu0 0
        %6106 = vmatprep.subr.bf16.mxu0 0
        %6107 = vmatpush1.bf16.msra.mxu0 0
        %6108 = vmatprep.subr.bf16.mxu0 0
        %6109 = vmatpush1.bf16.msra.mxu0 0
        %6110 = vmatprep.subr.bf16.mxu0 0
        %6111 = vmatpush1.bf16.msra.mxu0 0
        %6112 = vmatprep.subr.bf16.mxu0 0
        %6113 = vmatpush1.bf16.msra.mxu0 0
        %6114 = vmatprep.subr.bf16.mxu0 0
        %6115 = vmatpush1.bf16.msra.mxu0 0
        %6116 = vmatprep.subr.bf16.mxu0 0
        %6117 = vmatpush1.bf16.msra.mxu0 0
        %6118 = vmatprep.mubr.bf16.mxu0 0
        %6119 = vmatmul.mubr.bf16.gmra.mrb[0].mxu0 %v6036
        %v6120 = vpop.f32.mrb[0].mxu0
        %v6121 = vadd.f32 %v5909, %v6120
        %v6122 = vpop.f32.mrb[0].mxu0
        %v6123 = vpop.f32.mrb[0].mxu0
        %v6124 = vadd.f32 %v5912, %v6123
        %v6125 = vpop.f32.mrb[0].mxu0
        %6126 = vmatprep.mubr.bf16.mxu0 0
        %6127 = vmatmul.mubr.bf16.gmra.mrb[0].mxu0 %v6039
        %v6128 = vpop.f32.mrb[0].mxu0
        %v6129 = vadd.f32 %v5917, %v6128
        %v6130 = vpop.f32.mrb[0].mxu0
        %v6131 = vpop.f32.mrb[0].mxu0
        %v6132 = vadd.f32 %v5920, %v6131
        %v6133 = vpop.f32.mrb[0].mxu0
        %6134 = vmatprep.mubr.bf16.mxu0 0
        %6135 = vmatmul.mubr.bf16.gmra.mrb[0].mxu0 %v6042
        %v6136 = vpop.f32.mrb[0].mxu0
        %v6137 = vadd.f32 %v5925, %v6136
        %v6138 = vpop.f32.mrb[0].mxu0
        %v6139 = vpop.f32.mrb[0].mxu0
        %v6140 = vadd.f32 %v5928, %v6139
        %v6141 = vpop.f32.mrb[0].mxu0
        %6142 = vmatprep.mubr.bf16.mxu0 0
        %6143 = vmatmul.mubr.bf16.gmra.mrb[0].mxu0 %v6045
        %v6144 = vpop.f32.mrb[0].mxu0
        %v6145 = vadd.f32 %v5933, %v6144
        %v6146 = vpop.f32.mrb[0].mxu0
        %v6147 = vpop.f32.mrb[0].mxu0
        %v6148 = vadd.f32 %v5936, %v6147
        %v6149 = vpop.f32.mrb[0].mxu0
        %6150 = vmatprep.mubr.bf16.mxu0 0
        %6151 = vmatmul.mubr.bf16.gmra.mrb[0].mxu0 %v6048
        %v6152 = vpop.f32.mrb[0].mxu0
        %v6153 = vadd.f32 %v5941, %v6152
        %v6154 = vpop.f32.mrb[0].mxu0
        %v6155 = vpop.f32.mrb[0].mxu0
        %v6156 = vadd.f32 %v5944, %v6155
        %v6157 = vpop.f32.mrb[0].mxu0
        %6158 = vmatprep.mubr.bf16.mxu0 0
        %6159 = vmatmul.mubr.bf16.gmra.mrb[0].mxu0 %v6051
        %v6160 = vpop.f32.mrb[0].mxu0
        %v6161 = vadd.f32 %v5949, %v6160
        %v6162 = vpop.f32.mrb[0].mxu0
        %v6163 = vpop.f32.mrb[0].mxu0
        %v6164 = vadd.f32 %v5952, %v6163
        %v6165 = vpop.f32.mrb[0].mxu0
        %6166 = vmatprep.mubr.bf16.mxu0 0
        %6167 = vmatmul.mubr.bf16.gmra.mrb[0].mxu0 %v6054
        %v6168 = vpop.f32.mrb[0].mxu0
        %v6169 = vadd.f32 %v5957, %v6168
        %v6170 = vpop.f32.mrb[0].mxu0
        %v6171 = vpop.f32.mrb[0].mxu0
        %v6172 = vadd.f32 %v5960, %v6171
        %v6173 = vpop.f32.mrb[0].mxu0
        %6174 = vmatprep.mubr.bf16.mxu0 0
        %6175 = vmatmul.mubr.bf16.gmra.mrb[0].mxu0 %v6057
        %v6176 = vpop.f32.mrb[0].mxu0
        %v6177 = vadd.f32 %v5965, %v6176
        %v6178 = vpop.f32.mrb[0].mxu0
        %v6179 = vpop.f32.mrb[0].mxu0
        %v6180 = vadd.f32 %v5968, %v6179
        %v6181 = vpop.f32.mrb[0].mxu0
        %6182 = vmatprep.mubr.bf16.mxu0 0
        %6183 = vmatmul.mubr.bf16.gmra.mrb[0].mxu0 %v6060
        %v6184 = vpop.f32.mrb[0].mxu0
        %v6185 = vadd.f32 %v5973, %v6184
        %v6186 = vpop.f32.mrb[0].mxu0
        %v6187 = vpop.f32.mrb[0].mxu0
        %v6188 = vadd.f32 %v5976, %v6187
        %v6189 = vpop.f32.mrb[0].mxu0
        %6190 = vmatprep.mubr.bf16.mxu0 0
        %6191 = vmatmul.mubr.bf16.gmra.mrb[0].mxu0 %v6063
        %v6192 = vpop.f32.mrb[0].mxu0
        %v6193 = vadd.f32 %v5981, %v6192
        %v6194 = vpop.f32.mrb[0].mxu0
        %v6195 = vpop.f32.mrb[0].mxu0
        %v6196 = vadd.f32 %v5984, %v6195
        %v6197 = vpop.f32.mrb[0].mxu0
        %6198 = vmatprep.mubr.bf16.mxu0 0
        %6199 = vmatmul.mubr.bf16.gmra.mrb[0].mxu0 %v6066
        %v6200 = vpop.f32.mrb[0].mxu0
        %v6201 = vadd.f32 %v5989, %v6200
        %v6202 = vpop.f32.mrb[0].mxu0
        %v6203 = vpop.f32.mrb[0].mxu0
        %v6204 = vadd.f32 %v5992, %v6203
        %v6205 = vpop.f32.mrb[0].mxu0
        %6206 = vmatprep.mubr.bf16.mxu0 0
        %6207 = vmatmul.mubr.bf16.gmra.mrb[0].mxu0 %v6069
        %v6208 = vpop.f32.mrb[0].mxu0
        %v6209 = vadd.f32 %v5997, %v6208
        %v6210 = vpop.f32.mrb[0].mxu0
        %v6211 = vpop.f32.mrb[0].mxu0
        %v6212 = vadd.f32 %v6000, %v6211
        %v6213 = vpop.f32.mrb[0].mxu0
        %6214 = vmatprep.mubr.bf16.mxu0 0
        %6215 = vmatmul.mubr.bf16.gmra.mrb[0].mxu0 %v6072
        %v6216 = vpop.f32.mrb[0].mxu0
        %v6217 = vadd.f32 %v6005, %v6216
        %v6218 = vpop.f32.mrb[0].mxu0
        %v6219 = vpop.f32.mrb[0].mxu0
        %v6220 = vadd.f32 %v6008, %v6219
        %v6221 = vpop.f32.mrb[0].mxu0
        %6222 = vmatprep.mubr.bf16.mxu0 0
        %6223 = vmatmul.mubr.bf16.gmra.mrb[0].mxu0 %v6075
        %v6224 = vpop.f32.mrb[0].mxu0
        %v6225 = vadd.f32 %v6013, %v6224
        %v6226 = vpop.f32.mrb[0].mxu0
        %v6227 = vpop.f32.mrb[0].mxu0
        %v6228 = vadd.f32 %v6016, %v6227
        %v6229 = vpop.f32.mrb[0].mxu0
        %6230 = vmatprep.mubr.bf16.mxu0 0
        %6231 = vmatmul.mubr.bf16.gmra.mrb[0].mxu0 %v6078
        %v6232 = vpop.f32.mrb[0].mxu0
        %v6233 = vadd.f32 %v6021, %v6232
        %v6234 = vpop.f32.mrb[0].mxu0
        %v6235 = vpop.f32.mrb[0].mxu0
        %v6236 = vadd.f32 %v6024, %v6235
        %v6237 = vpop.f32.mrb[0].mxu0
        %6238 = vmatprep.mubr.bf16.mxu0 0
        %6239 = vmatmul.mubr.bf16.gmra.mrb[0].mxu0 %v6081
        %v6240 = vpop.f32.mrb[0].mxu0
        %v6241 = vadd.f32 %v6029, %v6240
        %v6242 = vpop.f32.mrb[0].mxu0
        %v6243 = vpop.f32.mrb[0].mxu0
        %v6244 = vadd.f32 %v6032, %v6243
        %v6245 = vpop.f32.mrb[0].mxu0
        %6246 = vdwg.mxu0
        %v6247 = vld [vmem:[%s10] sm:$0x1]
        %v6249 = vlaneseq
        %v6250 = vshrl.u32 %v6249, 7
        %v6251 = vsub.s32 0, %v6250
        %v6252 = vrot.slane %v6247, %v6251
        %v6254 = vadd.f32 %v6121, %v6252
        %v6255 = vadd.f32 %v6124, %v6252
        %v6256 = vadd.f32 %v6129, %v6252
        %v6257 = vadd.f32 %v6132, %v6252
        %v6258 = vadd.f32 %v6137, %v6252
        %v6259 = vadd.f32 %v6140, %v6252
        %v6260 = vadd.f32 %v6145, %v6252
        %v6261 = vadd.f32 %v6148, %v6252
        %v6262 = vadd.f32 %v6153, %v6252
        %v6263 = vadd.f32 %v6156, %v6252
        %v6264 = vadd.f32 %v6161, %v6252
        %v6265 = vadd.f32 %v6164, %v6252
        %v6266 = vadd.f32 %v6169, %v6252
        %v6267 = vadd.f32 %v6172, %v6252
        %v6268 = vadd.f32 %v6177, %v6252
        %v6269 = vadd.f32 %v6180, %v6252
        %v6270 = vadd.f32 %v6185, %v6252
        %v6271 = vadd.f32 %v6188, %v6252
        %v6272 = vadd.f32 %v6193, %v6252
        %v6273 = vadd.f32 %v6196, %v6252
        %v6274 = vadd.f32 %v6201, %v6252
        %v6275 = vadd.f32 %v6204, %v6252
        %v6276 = vadd.f32 %v6209, %v6252
        %v6277 = vadd.f32 %v6212, %v6252
        %v6278 = vadd.f32 %v6217, %v6252
        %v6279 = vadd.f32 %v6220, %v6252
        %v6280 = vadd.f32 %v6225, %v6252
        %v6281 = vadd.f32 %v6228, %v6252
        %v6282 = vadd.f32 %v6233, %v6252
        %v6283 = vadd.f32 %v6236, %v6252
        %v6284 = vadd.f32 %v6241, %v6252
        %v6285 = vadd.f32 %v6244, %v6252
        %6318 = vrot.lane.b32.xlu0 %v6254, 1
        %v6319 = vpop.permute.xlu0 %6318
        %6320 = vrot.lane.b32.xlu0 %v6255, 1
        %v6321 = vpop.permute.xlu0 %6320
        %6322 = vrot.lane.b32.xlu0 %v6256, 1
        %v6323 = vpop.permute.xlu0 %6322
        %6324 = vrot.lane.b32.xlu0 %v6257, 1
        %v6325 = vpop.permute.xlu0 %6324
        %6326 = vrot.lane.b32.xlu0 %v6258, 1
        %v6327 = vpop.permute.xlu0 %6326
        %6328 = vrot.lane.b32.xlu0 %v6259, 1
        %v6329 = vpop.permute.xlu0 %6328
        %6330 = vrot.lane.b32.xlu0 %v6260, 1
        %v6331 = vpop.permute.xlu0 %6330
        %6332 = vrot.lane.b32.xlu0 %v6261, 1
        %v6333 = vpop.permute.xlu0 %6332
        %6334 = vrot.lane.b32.xlu0 %v6262, 1
        %v6335 = vpop.permute.xlu0 %6334
        %6336 = vrot.lane.b32.xlu0 %v6263, 1
        %v6337 = vpop.permute.xlu0 %6336
        %6338 = vrot.lane.b32.xlu0 %v6264, 1
        %v6339 = vpop.permute.xlu0 %6338
        %6340 = vrot.lane.b32.xlu0 %v6265, 1
        %v6341 = vpop.permute.xlu0 %6340
        %6342 = vrot.lane.b32.xlu0 %v6266, 1
        %v6343 = vpop.permute.xlu0 %6342
        %6344 = vrot.lane.b32.xlu0 %v6267, 1
        %v6345 = vpop.permute.xlu0 %6344
        %6346 = vrot.lane.b32.xlu0 %v6268, 1
        %v6347 = vpop.permute.xlu0 %6346
        %6348 = vrot.lane.b32.xlu0 %v6269, 1
        %v6349 = vpop.permute.xlu0 %6348
        %6350 = vrot.lane.b32.xlu0 %v6270, 1
        %v6351 = vpop.permute.xlu0 %6350
        %6352 = vrot.lane.b32.xlu0 %v6271, 1
        %v6353 = vpop.permute.xlu0 %6352
        %6354 = vrot.lane.b32.xlu0 %v6272, 1
        %v6355 = vpop.permute.xlu0 %6354
        %6356 = vrot.lane.b32.xlu0 %v6273, 1
        %v6357 = vpop.permute.xlu0 %6356
        %6358 = vrot.lane.b32.xlu0 %v6274, 1
        %v6359 = vpop.permute.xlu0 %6358
        %6360 = vrot.lane.b32.xlu0 %v6275, 1
        %v6361 = vpop.permute.xlu0 %6360
        %6362 = vrot.lane.b32.xlu0 %v6276, 1
        %v6363 = vpop.permute.xlu0 %6362
        %6364 = vrot.lane.b32.xlu0 %v6277, 1
        %v6365 = vpop.permute.xlu0 %6364
        %6366 = vrot.lane.b32.xlu0 %v6278, 1
        %v6367 = vpop.permute.xlu0 %6366
        %6368 = vrot.lane.b32.xlu0 %v6279, 1
        %v6369 = vpop.permute.xlu0 %6368
        %6370 = vrot.lane.b32.xlu0 %v6280, 1
        %v6371 = vpop.permute.xlu0 %6370
        %6372 = vrot.lane.b32.xlu0 %v6281, 1
        %v6373 = vpop.permute.xlu0 %6372
        %6374 = vrot.lane.b32.xlu0 %v6282, 1
        %v6375 = vpop.permute.xlu0 %6374
        %6376 = vrot.lane.b32.xlu0 %v6283, 1
        %v6377 = vpop.permute.xlu0 %6376
        %6378 = vrot.lane.b32.xlu0 %v6284, 1
        %v6379 = vpop.permute.xlu0 %6378
        %6380 = vrot.lane.b32.xlu0 %v6285, 1
        %v6381 = vpop.permute.xlu0 %6380
        %v6414 = vsub.f32 %v6254, %v6319
        %v6415 = vsub.f32 %v6255, %v6321
        %v6416 = vsub.f32 %v6256, %v6323
        %v6417 = vsub.f32 %v6257, %v6325
        %v6418 = vsub.f32 %v6258, %v6327
        %v6419 = vsub.f32 %v6259, %v6329
        %v6420 = vsub.f32 %v6260, %v6331
        %v6421 = vsub.f32 %v6261, %v6333
        %v6422 = vsub.f32 %v6262, %v6335
        %v6423 = vsub.f32 %v6263, %v6337
        %v6424 = vsub.f32 %v6264, %v6339
        %v6425 = vsub.f32 %v6265, %v6341
        %v6426 = vsub.f32 %v6266, %v6343
        %v6427 = vsub.f32 %v6267, %v6345
        %v6428 = vsub.f32 %v6268, %v6347
        %v6429 = vsub.f32 %v6269, %v6349
        %v6430 = vsub.f32 %v6270, %v6351
        %v6431 = vsub.f32 %v6271, %v6353
        %v6432 = vsub.f32 %v6272, %v6355
        %v6433 = vsub.f32 %v6273, %v6357
        %v6434 = vsub.f32 %v6274, %v6359
        %v6435 = vsub.f32 %v6275, %v6361
        %v6436 = vsub.f32 %v6276, %v6363
        %v6437 = vsub.f32 %v6277, %v6365
        %v6438 = vsub.f32 %v6278, %v6367
        %v6439 = vsub.f32 %v6279, %v6369
        %v6440 = vsub.f32 %v6280, %v6371
        %v6441 = vsub.f32 %v6281, %v6373
        %v6442 = vsub.f32 %v6282, %v6375
        %v6443 = vsub.f32 %v6283, %v6377
        %v6444 = vsub.f32 %v6284, %v6379
        %v6445 = vsub.f32 %v6285, %v6381
        %v6446 = vmul.f32 %v6414, 1.442695
        %v6447 = vpow.pop %v6446
        %v6448 = vmul.f32 %v6415, 1.442695
        %v6449 = vpow.pop %v6448
        %v6450 = vmul.f32 %v6416, 1.442695
        %v6451 = vpow.pop %v6450
        %v6452 = vmul.f32 %v6417, 1.442695
        %v6453 = vpow.pop %v6452
        %v6454 = vmul.f32 %v6418, 1.442695
        %v6455 = vpow.pop %v6454
        %v6456 = vmul.f32 %v6419, 1.442695
        %v6457 = vpow.pop %v6456
        %v6458 = vmul.f32 %v6420, 1.442695
        %v6459 = vpow.pop %v6458
        %v6460 = vmul.f32 %v6421, 1.442695
        %v6461 = vpow.pop %v6460
        %v6462 = vmul.f32 %v6422, 1.442695
        %v6463 = vpow.pop %v6462
        %v6464 = vmul.f32 %v6423, 1.442695
        %v6465 = vpow.pop %v6464
        %v6466 = vmul.f32 %v6424, 1.442695
        %v6467 = vpow.pop %v6466
        %v6468 = vmul.f32 %v6425, 1.442695
        %v6469 = vpow.pop %v6468
        %v6470 = vmul.f32 %v6426, 1.442695
        %v6471 = vpow.pop %v6470
        %v6472 = vmul.f32 %v6427, 1.442695
        %v6473 = vpow.pop %v6472
        %v6474 = vmul.f32 %v6428, 1.442695
        %v6475 = vpow.pop %v6474
        %v6476 = vmul.f32 %v6429, 1.442695
        %v6477 = vpow.pop %v6476
        %v6478 = vmul.f32 %v6430, 1.442695
        %v6479 = vpow.pop %v6478
        %v6480 = vmul.f32 %v6431, 1.442695
        %v6481 = vpow.pop %v6480
        %v6482 = vmul.f32 %v6432, 1.442695
        %v6483 = vpow.pop %v6482
        %v6484 = vmul.f32 %v6433, 1.442695
        %v6485 = vpow.pop %v6484
        %v6486 = vmul.f32 %v6434, 1.442695
        %v6487 = vpow.pop %v6486
        %v6488 = vmul.f32 %v6435, 1.442695
        %v6489 = vpow.pop %v6488
        %v6490 = vmul.f32 %v6436, 1.442695
        %v6491 = vpow.pop %v6490
        %v6492 = vmul.f32 %v6437, 1.442695
        %v6493 = vpow.pop %v6492
        %v6494 = vmul.f32 %v6438, 1.442695
        %v6495 = vpow.pop %v6494
        %v6496 = vmul.f32 %v6439, 1.442695
        %v6497 = vpow.pop %v6496
        %v6498 = vmul.f32 %v6440, 1.442695
        %v6499 = vpow.pop %v6498
        %v6500 = vmul.f32 %v6441, 1.442695
        %v6501 = vpow.pop %v6500
        %v6502 = vmul.f32 %v6442, 1.442695
        %v6503 = vpow.pop %v6502
        %v6504 = vmul.f32 %v6443, 1.442695
        %v6505 = vpow.pop %v6504
        %v6506 = vmul.f32 %v6444, 1.442695
        %v6507 = vpow.pop %v6506
        %v6508 = vmul.f32 %v6445, 1.442695
        %v6509 = vpow.pop %v6508
        %v6510 = vadd.f32 %v6447, 1.0
        %v6511 = vadd.f32 %v6449, 1.0
        %v6512 = vadd.f32 %v6451, 1.0
        %v6513 = vadd.f32 %v6453, 1.0
        %v6514 = vadd.f32 %v6455, 1.0
        %v6515 = vadd.f32 %v6457, 1.0
        %v6516 = vadd.f32 %v6459, 1.0
        %v6517 = vadd.f32 %v6461, 1.0
        %v6518 = vadd.f32 %v6463, 1.0
        %v6519 = vadd.f32 %v6465, 1.0
        %v6520 = vadd.f32 %v6467, 1.0
        %v6521 = vadd.f32 %v6469, 1.0
        %v6522 = vadd.f32 %v6471, 1.0
        %v6523 = vadd.f32 %v6473, 1.0
        %v6524 = vadd.f32 %v6475, 1.0
        %v6525 = vadd.f32 %v6477, 1.0
        %v6526 = vadd.f32 %v6479, 1.0
        %v6527 = vadd.f32 %v6481, 1.0
        %v6528 = vadd.f32 %v6483, 1.0
        %v6529 = vadd.f32 %v6485, 1.0
        %v6530 = vadd.f32 %v6487, 1.0
        %v6531 = vadd.f32 %v6489, 1.0
        %v6532 = vadd.f32 %v6491, 1.0
        %v6533 = vadd.f32 %v6493, 1.0
        %v6534 = vadd.f32 %v6495, 1.0
        %v6535 = vadd.f32 %v6497, 1.0
        %v6536 = vadd.f32 %v6499, 1.0
        %v6537 = vadd.f32 %v6501, 1.0
        %v6538 = vadd.f32 %v6503, 1.0
        %v6539 = vadd.f32 %v6505, 1.0
        %v6540 = vadd.f32 %v6507, 1.0
        %v6541 = vadd.f32 %v6509, 1.0
        %v6542 = vrcp.pop %v6510
        %v6543 = vmul.f32 1.0, %v6542
        %v6544 = vrcp.pop %v6511
        %v6545 = vmul.f32 1.0, %v6544
        %v6546 = vrcp.pop %v6512
        %v6547 = vmul.f32 1.0, %v6546
        %v6548 = vrcp.pop %v6513
        %v6549 = vmul.f32 1.0, %v6548
        %v6550 = vrcp.pop %v6514
        %v6551 = vmul.f32 1.0, %v6550
        %v6552 = vrcp.pop %v6515
        %v6553 = vmul.f32 1.0, %v6552
        %v6554 = vrcp.pop %v6516
        %v6555 = vmul.f32 1.0, %v6554
        %v6556 = vrcp.pop %v6517
        %v6557 = vmul.f32 1.0, %v6556
        %v6558 = vrcp.pop %v6518
        %v6559 = vmul.f32 1.0, %v6558
        %v6560 = vrcp.pop %v6519
        %v6561 = vmul.f32 1.0, %v6560
        %v6562 = vrcp.pop %v6520
        %v6563 = vmul.f32 1.0, %v6562
        %v6564 = vrcp.pop %v6521
        %v6565 = vmul.f32 1.0, %v6564
        %v6566 = vrcp.pop %v6522
        %v6567 = vmul.f32 1.0, %v6566
        %v6568 = vrcp.pop %v6523
        %v6569 = vmul.f32 1.0, %v6568
        %v6570 = vrcp.pop %v6524
        %v6571 = vmul.f32 1.0, %v6570
        %v6572 = vrcp.pop %v6525
        %v6573 = vmul.f32 1.0, %v6572
        %v6574 = vrcp.pop %v6526
        %v6575 = vmul.f32 1.0, %v6574
        %v6576 = vrcp.pop %v6527
        %v6577 = vmul.f32 1.0, %v6576
        %v6578 = vrcp.pop %v6528
        %v6579 = vmul.f32 1.0, %v6578
        %v6580 = vrcp.pop %v6529
        %v6581 = vmul.f32 1.0, %v6580
        %v6582 = vrcp.pop %v6530
        %v6583 = vmul.f32 1.0, %v6582
        %v6584 = vrcp.pop %v6531
        %v6585 = vmul.f32 1.0, %v6584
        %v6586 = vrcp.pop %v6532
        %v6587 = vmul.f32 1.0, %v6586
        %v6588 = vrcp.pop %v6533
        %v6589 = vmul.f32 1.0, %v6588
        %v6590 = vrcp.pop %v6534
        %v6591 = vmul.f32 1.0, %v6590
        %v6592 = vrcp.pop %v6535
        %v6593 = vmul.f32 1.0, %v6592
        %v6594 = vrcp.pop %v6536
        %v6595 = vmul.f32 1.0, %v6594
        %v6596 = vrcp.pop %v6537
        %v6597 = vmul.f32 1.0, %v6596
        %v6598 = vrcp.pop %v6538
        %v6599 = vmul.f32 1.0, %v6598
        %v6600 = vrcp.pop %v6539
        %v6601 = vmul.f32 1.0, %v6600
        %v6602 = vrcp.pop %v6540
        %v6603 = vmul.f32 1.0, %v6602
        %v6604 = vrcp.pop %v6541
        %v6605 = vmul.f32 1.0, %v6604
        %v6606 = vunpack.c.l.bf16 %v4762
        %v6607 = vunpack.c.l.bf16 %v4763
        %v6608 = vunpack.c.l.bf16 %v4764
        %v6609 = vunpack.c.l.bf16 %v4765
        %v6610 = vunpack.c.l.bf16 %v4766
        %v6611 = vunpack.c.l.bf16 %v4767
        %v6612 = vunpack.c.l.bf16 %v4768
        %v6613 = vunpack.c.l.bf16 %v4769
        %v6614 = vunpack.c.l.bf16 %v4770
        %v6615 = vunpack.c.l.bf16 %v4771
        %v6616 = vunpack.c.l.bf16 %v4772
        %v6617 = vunpack.c.l.bf16 %v4773
        %v6618 = vunpack.c.l.bf16 %v4774
        %v6619 = vunpack.c.l.bf16 %v4775
        %v6620 = vunpack.c.l.bf16 %v4776
        %v6621 = vunpack.c.l.bf16 %v4777
        %v6622 = vunpack.c.l.bf16 %v4778
        %v6623 = vunpack.c.l.bf16 %v4779
        %v6624 = vunpack.c.l.bf16 %v4780
        %v6625 = vunpack.c.l.bf16 %v4781
        %v6626 = vunpack.c.l.bf16 %v4782
        %v6627 = vunpack.c.l.bf16 %v4783
        %v6628 = vunpack.c.l.bf16 %v4784
        %v6629 = vunpack.c.l.bf16 %v4785
        %v6630 = vunpack.c.l.bf16 %v4786
        %v6631 = vunpack.c.l.bf16 %v4787
        %v6632 = vunpack.c.l.bf16 %v4788
        %v6633 = vunpack.c.l.bf16 %v4789
        %v6634 = vunpack.c.l.bf16 %v4790
        %v6635 = vunpack.c.l.bf16 %v4791
        %v6636 = vunpack.c.l.bf16 %v4792
        %v6637 = vunpack.c.l.bf16 %v4793
        %6639 = vset.pattern.permute.xlu0 1
        %6640 = vperm.xlu0 %6639, %v6543
        %v6641 = vpop.permute.xlu0 %6640
        %6644 = vset.pattern.permute.xlu0 1
        %6645 = vperm.xlu0 %6644, %v6545
        %v6646 = vpop.permute.xlu0 %6645
        %6649 = vset.pattern.permute.xlu0 1
        %6650 = vperm.xlu0 %6649, %v6547
        %v6651 = vpop.permute.xlu0 %6650
        %6654 = vset.pattern.permute.xlu0 1
        %6655 = vperm.xlu0 %6654, %v6549
        %v6656 = vpop.permute.xlu0 %6655
        %6659 = vset.pattern.permute.xlu0 1
        %6660 = vperm.xlu0 %6659, %v6551
        %v6661 = vpop.permute.xlu0 %6660
        %6664 = vset.pattern.permute.xlu0 1
        %6665 = vperm.xlu0 %6664, %v6553
        %v6666 = vpop.permute.xlu0 %6665
        %6669 = vset.pattern.permute.xlu0 1
        %6670 = vperm.xlu0 %6669, %v6555
        %v6671 = vpop.permute.xlu0 %6670
        %6674 = vset.pattern.permute.xlu0 1
        %6675 = vperm.xlu0 %6674, %v6557
        %v6676 = vpop.permute.xlu0 %6675
        %6679 = vset.pattern.permute.xlu0 1
        %6680 = vperm.xlu0 %6679, %v6559
        %v6681 = vpop.permute.xlu0 %6680
        %6684 = vset.pattern.permute.xlu0 1
        %6685 = vperm.xlu0 %6684, %v6561
        %v6686 = vpop.permute.xlu0 %6685
        %6689 = vset.pattern.permute.xlu0 1
        %6690 = vperm.xlu0 %6689, %v6563
        %v6691 = vpop.permute.xlu0 %6690
        %6694 = vset.pattern.permute.xlu0 1
        %6695 = vperm.xlu0 %6694, %v6565
        %v6696 = vpop.permute.xlu0 %6695
        %6699 = vset.pattern.permute.xlu0 1
        %6700 = vperm.xlu0 %6699, %v6567
        %v6701 = vpop.permute.xlu0 %6700
        %6704 = vset.pattern.permute.xlu0 1
        %6705 = vperm.xlu0 %6704, %v6569
        %v6706 = vpop.permute.xlu0 %6705
        %6709 = vset.pattern.permute.xlu0 1
        %6710 = vperm.xlu0 %6709, %v6571
        %v6711 = vpop.permute.xlu0 %6710
        %6714 = vset.pattern.permute.xlu0 1
        %6715 = vperm.xlu0 %6714, %v6573
        %v6716 = vpop.permute.xlu0 %6715
        %6719 = vset.pattern.permute.xlu0 1
        %6720 = vperm.xlu0 %6719, %v6575
        %v6721 = vpop.permute.xlu0 %6720
        %6724 = vset.pattern.permute.xlu0 1
        %6725 = vperm.xlu0 %6724, %v6577
        %v6726 = vpop.permute.xlu0 %6725
        %6729 = vset.pattern.permute.xlu0 1
        %6730 = vperm.xlu0 %6729, %v6579
        %v6731 = vpop.permute.xlu0 %6730
        %6734 = vset.pattern.permute.xlu0 1
        %6735 = vperm.xlu0 %6734, %v6581
        %v6736 = vpop.permute.xlu0 %6735
        %6739 = vset.pattern.permute.xlu0 1
        %6740 = vperm.xlu0 %6739, %v6583
        %v6741 = vpop.permute.xlu0 %6740
        %6744 = vset.pattern.permute.xlu0 1
        %6745 = vperm.xlu0 %6744, %v6585
        %v6746 = vpop.permute.xlu0 %6745
        %6749 = vset.pattern.permute.xlu0 1
        %6750 = vperm.xlu0 %6749, %v6587
        %v6751 = vpop.permute.xlu0 %6750
        %6754 = vset.pattern.permute.xlu0 1
        %6755 = vperm.xlu0 %6754, %v6589
        %v6756 = vpop.permute.xlu0 %6755
        %6759 = vset.pattern.permute.xlu0 1
        %6760 = vperm.xlu0 %6759, %v6591
        %v6761 = vpop.permute.xlu0 %6760
        %6764 = vset.pattern.permute.xlu0 1
        %6765 = vperm.xlu0 %6764, %v6593
        %v6766 = vpop.permute.xlu0 %6765
        %6769 = vset.pattern.permute.xlu0 1
        %6770 = vperm.xlu0 %6769, %v6595
        %v6771 = vpop.permute.xlu0 %6770
        %6774 = vset.pattern.permute.xlu0 1
        %6775 = vperm.xlu0 %6774, %v6597
        %v6776 = vpop.permute.xlu0 %6775
        %6779 = vset.pattern.permute.xlu0 1
        %6780 = vperm.xlu0 %6779, %v6599
        %v6781 = vpop.permute.xlu0 %6780
        %6784 = vset.pattern.permute.xlu0 1
        %6785 = vperm.xlu0 %6784, %v6601
        %v6786 = vpop.permute.xlu0 %6785
        %6789 = vset.pattern.permute.xlu0 1
        %6790 = vperm.xlu0 %6789, %v6603
        %v6791 = vpop.permute.xlu0 %6790
        %6794 = vset.pattern.permute.xlu0 1
        %6795 = vperm.xlu0 %6794, %v6605
        %v6796 = vpop.permute.xlu0 %6795
        %v6798 = vmul.f32 %v6606, %v6641
        %v6799 = vmul.f32 %v6607, %v6646
        %v6800 = vmul.f32 %v6608, %v6651
        %v6801 = vmul.f32 %v6609, %v6656
        %v6802 = vmul.f32 %v6610, %v6661
        %v6803 = vmul.f32 %v6611, %v6666
        %v6804 = vmul.f32 %v6612, %v6671
        %v6805 = vmul.f32 %v6613, %v6676
        %v6806 = vmul.f32 %v6614, %v6681
        %v6807 = vmul.f32 %v6615, %v6686
        %v6808 = vmul.f32 %v6616, %v6691
        %v6809 = vmul.f32 %v6617, %v6696
        %v6810 = vmul.f32 %v6618, %v6701
        %v6811 = vmul.f32 %v6619, %v6706
        %v6812 = vmul.f32 %v6620, %v6711
        %v6813 = vmul.f32 %v6621, %v6716
        %v6814 = vmul.f32 %v6622, %v6721
        %v6815 = vmul.f32 %v6623, %v6726
        %v6816 = vmul.f32 %v6624, %v6731
        %v6817 = vmul.f32 %v6625, %v6736
        %v6818 = vmul.f32 %v6626, %v6741
        %v6819 = vmul.f32 %v6627, %v6746
        %v6820 = vmul.f32 %v6628, %v6751
        %v6821 = vmul.f32 %v6629, %v6756
        %v6822 = vmul.f32 %v6630, %v6761
        %v6823 = vmul.f32 %v6631, %v6766
        %v6824 = vmul.f32 %v6632, %v6771
        %v6825 = vmul.f32 %v6633, %v6776
        %v6826 = vmul.f32 %v6634, %v6781
        %v6827 = vmul.f32 %v6635, %v6786
        %v6828 = vmul.f32 %v6636, %v6791
        %v6829 = vmul.f32 %v6637, %v6796
        %v6830 = vunpack.c.l.bf16 %v4746
        %v6831 = vunpack.c.h.bf16 %v4746
        %v6832 = vunpack.c.l.bf16 %v4747
        %v6833 = vunpack.c.h.bf16 %v4747
        %v6834 = vunpack.c.l.bf16 %v4748
        %v6835 = vunpack.c.h.bf16 %v4748
        %v6836 = vunpack.c.l.bf16 %v4749
        %v6837 = vunpack.c.h.bf16 %v4749
        %v6838 = vunpack.c.l.bf16 %v4750
        %v6839 = vunpack.c.h.bf16 %v4750
        %v6840 = vunpack.c.l.bf16 %v4751
        %v6841 = vunpack.c.h.bf16 %v4751
        %v6842 = vunpack.c.l.bf16 %v4752
        %v6843 = vunpack.c.h.bf16 %v4752
        %v6844 = vunpack.c.l.bf16 %v4753
        %v6845 = vunpack.c.h.bf16 %v4753
        %v6846 = vunpack.c.l.bf16 %v4754
        %v6847 = vunpack.c.h.bf16 %v4754
        %v6848 = vunpack.c.l.bf16 %v4755
        %v6849 = vunpack.c.h.bf16 %v4755
        %v6850 = vunpack.c.l.bf16 %v4756
        %v6851 = vunpack.c.h.bf16 %v4756
        %v6852 = vunpack.c.l.bf16 %v4757
        %v6853 = vunpack.c.h.bf16 %v4757
        %v6854 = vunpack.c.l.bf16 %v4758
        %v6855 = vunpack.c.h.bf16 %v4758
        %v6856 = vunpack.c.l.bf16 %v4759
        %v6857 = vunpack.c.h.bf16 %v4759
        %v6858 = vunpack.c.l.bf16 %v4760
        %v6859 = vunpack.c.h.bf16 %v4760
        %v6860 = vunpack.c.l.bf16 %v4761
        %v6861 = vunpack.c.h.bf16 %v4761
        %v6862 = vsub.f32 1.0, %v6543
        %v6863 = vsub.f32 1.0, %v6545
        %v6864 = vsub.f32 1.0, %v6547
        %v6865 = vsub.f32 1.0, %v6549
        %v6866 = vsub.f32 1.0, %v6551
        %v6867 = vsub.f32 1.0, %v6553
        %v6868 = vsub.f32 1.0, %v6555
        %v6869 = vsub.f32 1.0, %v6557
        %v6870 = vsub.f32 1.0, %v6559
        %v6871 = vsub.f32 1.0, %v6561
        %v6872 = vsub.f32 1.0, %v6563
        %v6873 = vsub.f32 1.0, %v6565
        %v6874 = vsub.f32 1.0, %v6567
        %v6875 = vsub.f32 1.0, %v6569
        %v6876 = vsub.f32 1.0, %v6571
        %v6877 = vsub.f32 1.0, %v6573
        %v6878 = vsub.f32 1.0, %v6575
        %v6879 = vsub.f32 1.0, %v6577
        %v6880 = vsub.f32 1.0, %v6579
        %v6881 = vsub.f32 1.0, %v6581
        %v6882 = vsub.f32 1.0, %v6583
        %v6883 = vsub.f32 1.0, %v6585
        %v6884 = vsub.f32 1.0, %v6587
        %v6885 = vsub.f32 1.0, %v6589
        %v6886 = vsub.f32 1.0, %v6591
        %v6887 = vsub.f32 1.0, %v6593
        %v6888 = vsub.f32 1.0, %v6595
        %v6889 = vsub.f32 1.0, %v6597
        %v6890 = vsub.f32 1.0, %v6599
        %v6891 = vsub.f32 1.0, %v6601
        %v6892 = vsub.f32 1.0, %v6603
        %v6893 = vsub.f32 1.0, %v6605
        %6895 = vset.pattern.permute.xlu0 1
        %6896 = vperm.xlu0 %6895, %v6862
        %v6897 = vpop.permute.xlu0 %6896
        %6900 = vset.pattern.permute.xlu0 1
        %6901 = vperm.xlu0 %6900, %v6863
        %v6902 = vpop.permute.xlu0 %6901
        %6905 = vset.pattern.permute.xlu0 1
        %6906 = vperm.xlu0 %6905, %v6864
        %v6907 = vpop.permute.xlu0 %6906
        %6910 = vset.pattern.permute.xlu0 1
        %6911 = vperm.xlu0 %6910, %v6865
        %v6912 = vpop.permute.xlu0 %6911
        %6915 = vset.pattern.permute.xlu0 1
        %6916 = vperm.xlu0 %6915, %v6866
        %v6917 = vpop.permute.xlu0 %6916
        %6920 = vset.pattern.permute.xlu0 1
        %6921 = vperm.xlu0 %6920, %v6867
        %v6922 = vpop.permute.xlu0 %6921
        %6925 = vset.pattern.permute.xlu0 1
        %6926 = vperm.xlu0 %6925, %v6868
        %v6927 = vpop.permute.xlu0 %6926
        %6930 = vset.pattern.permute.xlu0 1
        %6931 = vperm.xlu0 %6930, %v6869
        %v6932 = vpop.permute.xlu0 %6931
        %6935 = vset.pattern.permute.xlu0 1
        %6936 = vperm.xlu0 %6935, %v6870
        %v6937 = vpop.permute.xlu0 %6936
        %6940 = vset.pattern.permute.xlu0 1
        %6941 = vperm.xlu0 %6940, %v6871
        %v6942 = vpop.permute.xlu0 %6941
        %6945 = vset.pattern.permute.xlu0 1
        %6946 = vperm.xlu0 %6945, %v6872
        %v6947 = vpop.permute.xlu0 %6946
        %6950 = vset.pattern.permute.xlu0 1
        %6951 = vperm.xlu0 %6950, %v6873
        %v6952 = vpop.permute.xlu0 %6951
        %6955 = vset.pattern.permute.xlu0 1
        %6956 = vperm.xlu0 %6955, %v6874
        %v6957 = vpop.permute.xlu0 %6956
        %6960 = vset.pattern.permute.xlu0 1
        %6961 = vperm.xlu0 %6960, %v6875
        %v6962 = vpop.permute.xlu0 %6961
        %6965 = vset.pattern.permute.xlu0 1
        %6966 = vperm.xlu0 %6965, %v6876
        %v6967 = vpop.permute.xlu0 %6966
        %6970 = vset.pattern.permute.xlu0 1
        %6971 = vperm.xlu0 %6970, %v6877
        %v6972 = vpop.permute.xlu0 %6971
        %6975 = vset.pattern.permute.xlu0 1
        %6976 = vperm.xlu0 %6975, %v6878
        %v6977 = vpop.permute.xlu0 %6976
        %6980 = vset.pattern.permute.xlu0 1
        %6981 = vperm.xlu0 %6980, %v6879
        %v6982 = vpop.permute.xlu0 %6981
        %6985 = vset.pattern.permute.xlu0 1
        %6986 = vperm.xlu0 %6985, %v6880
        %v6987 = vpop.permute.xlu0 %6986
        %6990 = vset.pattern.permute.xlu0 1
        %6991 = vperm.xlu0 %6990, %v6881
        %v6992 = vpop.permute.xlu0 %6991
        %6995 = vset.pattern.permute.xlu0 1
        %6996 = vperm.xlu0 %6995, %v6882
        %v6997 = vpop.permute.xlu0 %6996
        %7000 = vset.pattern.permute.xlu0 1
        %7001 = vperm.xlu0 %7000, %v6883
        %v7002 = vpop.permute.xlu0 %7001
        %7005 = vset.pattern.permute.xlu0 1
        %7006 = vperm.xlu0 %7005, %v6884
        %v7007 = vpop.permute.xlu0 %7006
        %7010 = vset.pattern.permute.xlu0 1
        %7011 = vperm.xlu0 %7010, %v6885
        %v7012 = vpop.permute.xlu0 %7011
        %7015 = vset.pattern.permute.xlu0 1
        %7016 = vperm.xlu0 %7015, %v6886
        %v7017 = vpop.permute.xlu0 %7016
        %7020 = vset.pattern.permute.xlu0 1
        %7021 = vperm.xlu0 %7020, %v6887
        %v7022 = vpop.permute.xlu0 %7021
        %7025 = vset.pattern.permute.xlu0 1
        %7026 = vperm.xlu0 %7025, %v6888
        %v7027 = vpop.permute.xlu0 %7026
        %7030 = vset.pattern.permute.xlu0 1
        %7031 = vperm.xlu0 %7030, %v6889
        %v7032 = vpop.permute.xlu0 %7031
        %7035 = vset.pattern.permute.xlu0 1
        %7036 = vperm.xlu0 %7035, %v6890
        %v7037 = vpop.permute.xlu0 %7036
        %7040 = vset.pattern.permute.xlu0 1
        %7041 = vperm.xlu0 %7040, %v6891
        %v7042 = vpop.permute.xlu0 %7041
        %7045 = vset.pattern.permute.xlu0 1
        %7046 = vperm.xlu0 %7045, %v6892
        %v7047 = vpop.permute.xlu0 %7046
        %7050 = vset.pattern.permute.xlu0 1
        %7051 = vperm.xlu0 %7050, %v6893
        %v7052 = vpop.permute.xlu0 %7051
        %v7054 = vmul.f32 %v6830, %v6897
        %v7055 = vmul.f32 %v6831, %v6902
        %v7056 = vmul.f32 %v6832, %v6907
        %v7057 = vmul.f32 %v6833, %v6912
        %v7058 = vmul.f32 %v6834, %v6917
        %v7059 = vmul.f32 %v6835, %v6922
        %v7060 = vmul.f32 %v6836, %v6927
        %v7061 = vmul.f32 %v6837, %v6932
        %v7062 = vmul.f32 %v6838, %v6937
        %v7063 = vmul.f32 %v6839, %v6942
        %v7064 = vmul.f32 %v6840, %v6947
        %v7065 = vmul.f32 %v6841, %v6952
        %v7066 = vmul.f32 %v6842, %v6957
        %v7067 = vmul.f32 %v6843, %v6962
        %v7068 = vmul.f32 %v6844, %v6967
        %v7069 = vmul.f32 %v6845, %v6972
        %v7070 = vmul.f32 %v6846, %v6977
        %v7071 = vmul.f32 %v6847, %v6982
        %v7072 = vmul.f32 %v6848, %v6987
        %v7073 = vmul.f32 %v6849, %v6992
        %v7074 = vmul.f32 %v6850, %v6997
        %v7075 = vmul.f32 %v6851, %v7002
        %v7076 = vmul.f32 %v6852, %v7007
        %v7077 = vmul.f32 %v6853, %v7012
        %v7078 = vmul.f32 %v6854, %v7017
        %v7079 = vmul.f32 %v6855, %v7022
        %v7080 = vmul.f32 %v6856, %v7027
        %v7081 = vmul.f32 %v6857, %v7032
        %v7082 = vmul.f32 %v6858, %v7037
        %v7083 = vmul.f32 %v6859, %v7042
        %v7084 = vmul.f32 %v6860, %v7047
        %v7085 = vmul.f32 %v6861, %v7052
        %v7086 = vadd.f32 %v6798, %v7054
        %v7087 = vadd.f32 %v6799, %v7055
        %v7088 = vadd.f32 %v6800, %v7056
        %v7089 = vadd.f32 %v6801, %v7057
        %v7090 = vadd.f32 %v6802, %v7058
        %v7091 = vadd.f32 %v6803, %v7059
        %v7092 = vadd.f32 %v6804, %v7060
        %v7093 = vadd.f32 %v6805, %v7061
        %v7094 = vadd.f32 %v6806, %v7062
        %v7095 = vadd.f32 %v6807, %v7063
        %v7096 = vadd.f32 %v6808, %v7064
        %v7097 = vadd.f32 %v6809, %v7065
        %v7098 = vadd.f32 %v6810, %v7066
        %v7099 = vadd.f32 %v6811, %v7067
        %v7100 = vadd.f32 %v6812, %v7068
        %v7101 = vadd.f32 %v6813, %v7069
        %v7102 = vadd.f32 %v6814, %v7070
        %v7103 = vadd.f32 %v6815, %v7071
        %v7104 = vadd.f32 %v6816, %v7072
        %v7105 = vadd.f32 %v6817, %v7073
        %v7106 = vadd.f32 %v6818, %v7074
        %v7107 = vadd.f32 %v6819, %v7075
        %v7108 = vadd.f32 %v6820, %v7076
        %v7109 = vadd.f32 %v6821, %v7077
        %v7110 = vadd.f32 %v6822, %v7078
        %v7111 = vadd.f32 %v6823, %v7079
        %v7112 = vadd.f32 %v6824, %v7080
        %v7113 = vadd.f32 %v6825, %v7081
        %v7114 = vadd.f32 %v6826, %v7082
        %v7115 = vadd.f32 %v6827, %v7083
        %v7116 = vadd.f32 %v6828, %v7084
        %v7117 = vadd.f32 %v6829, %v7085
        %v7118 = vpack.c.bf16 %v7087, %v7086
        %v7119 = vpack.c.bf16 %v7089, %v7088
        %v7120 = vpack.c.bf16 %v7091, %v7090
        %v7121 = vpack.c.bf16 %v7093, %v7092
        %v7122 = vpack.c.bf16 %v7095, %v7094
        %v7123 = vpack.c.bf16 %v7097, %v7096
        %v7124 = vpack.c.bf16 %v7099, %v7098
        %v7125 = vpack.c.bf16 %v7101, %v7100
        %v7126 = vpack.c.bf16 %v7103, %v7102
        %v7127 = vpack.c.bf16 %v7105, %v7104
        %v7128 = vpack.c.bf16 %v7107, %v7106
        %v7129 = vpack.c.bf16 %v7109, %v7108
        %v7130 = vpack.c.bf16 %v7111, %v7110
        %v7131 = vpack.c.bf16 %v7113, %v7112
        %v7132 = vpack.c.bf16 %v7115, %v7114
        %v7133 = vpack.c.bf16 %v7117, %v7116
        %v7150 = vunpack.c.l.b16 %v7118
        %v7151 = vunpack.c.h.b16 %v7118
        %v7152 = vunpack.c.l.b16 %v7119
        %v7153 = vunpack.c.h.b16 %v7119
        %v7154 = vunpack.c.l.b16 %v7120
        %v7155 = vunpack.c.h.b16 %v7120
        %v7156 = vunpack.c.l.b16 %v7121
        %v7157 = vunpack.c.h.b16 %v7121
        %v7158 = vunpack.c.l.b16 %v7122
        %v7159 = vunpack.c.h.b16 %v7122
        %v7160 = vunpack.c.l.b16 %v7123
        %v7161 = vunpack.c.h.b16 %v7123
        %v7162 = vunpack.c.l.b16 %v7124
        %v7163 = vunpack.c.h.b16 %v7124
        %v7164 = vunpack.c.l.b16 %v7125
        %v7165 = vunpack.c.h.b16 %v7125
        %v7166 = vunpack.c.l.b16 %v7126
        %v7167 = vunpack.c.h.b16 %v7126
        %v7168 = vunpack.c.l.b16 %v7127
        %v7169 = vunpack.c.h.b16 %v7127
        %v7170 = vunpack.c.l.b16 %v7128
        %v7171 = vunpack.c.h.b16 %v7128
        %v7172 = vunpack.c.l.b16 %v7129
        %v7173 = vunpack.c.h.b16 %v7129
        %v7174 = vunpack.c.l.b16 %v7130
        %v7175 = vunpack.c.h.b16 %v7130
        %v7176 = vunpack.c.l.b16 %v7131
        %v7177 = vunpack.c.h.b16 %v7131
        %v7178 = vunpack.c.l.b16 %v7132
        %v7179 = vunpack.c.h.b16 %v7132
        %v7180 = vunpack.c.l.b16 %v7133
        %v7181 = vunpack.c.h.b16 %v7133
        %v7182 = vpack.c.b16 %v7150, %v7150
        %v7183 = vpack.c.b16 %v7151, %v7151
        %v7184 = vpack.c.b16 %v7152, %v7152
        %v7185 = vpack.c.b16 %v7153, %v7153
        %v7186 = vpack.c.b16 %v7154, %v7154
        %v7187 = vpack.c.b16 %v7155, %v7155
        %v7188 = vpack.c.b16 %v7156, %v7156
        %v7189 = vpack.c.b16 %v7157, %v7157
        %v7190 = vpack.c.b16 %v7158, %v7158
        %v7191 = vpack.c.b16 %v7159, %v7159
        %v7192 = vpack.c.b16 %v7160, %v7160
        %v7193 = vpack.c.b16 %v7161, %v7161
        %v7194 = vpack.c.b16 %v7162, %v7162
        %v7195 = vpack.c.b16 %v7163, %v7163
        %v7196 = vpack.c.b16 %v7164, %v7164
        %v7197 = vpack.c.b16 %v7165, %v7165
        %v7198 = vpack.c.b16 %v7166, %v7166
        %v7199 = vpack.c.b16 %v7167, %v7167
        %v7200 = vpack.c.b16 %v7168, %v7168
        %v7201 = vpack.c.b16 %v7169, %v7169
        %v7202 = vpack.c.b16 %v7170, %v7170
        %v7203 = vpack.c.b16 %v7171, %v7171
        %v7204 = vpack.c.b16 %v7172, %v7172
        %v7205 = vpack.c.b16 %v7173, %v7173
        %v7206 = vpack.c.b16 %v7174, %v7174
        %v7207 = vpack.c.b16 %v7175, %v7175
        %v7208 = vpack.c.b16 %v7176, %v7176
        %v7209 = vpack.c.b16 %v7177, %v7177
        %v7210 = vpack.c.b16 %v7178, %v7178
        %v7211 = vpack.c.b16 %v7179, %v7179
        %v7212 = vpack.c.b16 %v7180, %v7180
        %v7213 = vpack.c.b16 %v7181, %v7181
        %vm7246 = vcmask 257024
        %7247 = vst.msk [vmem:[%s431] sm:$0xf] %vm7246, %v7182
        %7248 = vst.msk [vmem:[%s431 + $0x4] sm:$0xf] %vm7246, %v7183
        %7249 = vst.msk [vmem:[%s431 + $0x8] sm:$0xf] %vm7246, %v7184
        %7250 = vst.msk [vmem:[%s431 + $0xc] sm:$0xf] %vm7246, %v7185
        %7251 = vst.msk [vmem:[%s431 + $0x10] sm:$0xf] %vm7246, %v7186
        %7252 = vst.msk [vmem:[%s431 + $0x14] sm:$0xf] %vm7246, %v7187
        %7253 = vst.msk [vmem:[%s431 + $0x18] sm:$0xf] %vm7246, %v7188
        %7254 = vst.msk [vmem:[%s431 + $0x1c] sm:$0xf] %vm7246, %v7189
        %7255 = vst.msk [vmem:[%s431 + $0x20] sm:$0xf] %vm7246, %v7190
        %7256 = vst.msk [vmem:[%s431 + $0x24] sm:$0xf] %vm7246, %v7191
        %7257 = vst.msk [vmem:[%s431 + $0x28] sm:$0xf] %vm7246, %v7192
        %7258 = vst.msk [vmem:[%s431 + $0x2c] sm:$0xf] %vm7246, %v7193
        %7259 = vst.msk [vmem:[%s431 + $0x30] sm:$0xf] %vm7246, %v7194
        %7260 = vst.msk [vmem:[%s431 + $0x34] sm:$0xf] %vm7246, %v7195
        %7261 = vst.msk [vmem:[%s431 + $0x38] sm:$0xf] %vm7246, %v7196
        %7262 = vst.msk [vmem:[%s431 + $0x3c] sm:$0xf] %vm7246, %v7197
        %7263 = vst.msk [vmem:[%s431 + $0x40] sm:$0xf] %vm7246, %v7198
        %7264 = vst.msk [vmem:[%s431 + $0x44] sm:$0xf] %vm7246, %v7199
        %7265 = vst.msk [vmem:[%s431 + $0x48] sm:$0xf] %vm7246, %v7200
        %7266 = vst.msk [vmem:[%s431 + $0x4c] sm:$0xf] %vm7246, %v7201
        %7267 = vst.msk [vmem:[%s431 + $0x50] sm:$0xf] %vm7246, %v7202
        %7268 = vst.msk [vmem:[%s431 + $0x54] sm:$0xf] %vm7246, %v7203
        %7269 = vst.msk [vmem:[%s431 + $0x58] sm:$0xf] %vm7246, %v7204
        %7270 = vst.msk [vmem:[%s431 + $0x5c] sm:$0xf] %vm7246, %v7205
        %7271 = vst.msk [vmem:[%s431 + $0x60] sm:$0xf] %vm7246, %v7206
        %7272 = vst.msk [vmem:[%s431 + $0x64] sm:$0xf] %vm7246, %v7207
        %7273 = vst.msk [vmem:[%s431 + $0x68] sm:$0xf] %vm7246, %v7208
        %7274 = vst.msk [vmem:[%s431 + $0x6c] sm:$0xf] %vm7246, %v7209
        %7275 = vst.msk [vmem:[%s431 + $0x70] sm:$0xf] %vm7246, %v7210
        %7276 = vst.msk [vmem:[%s431 + $0x74] sm:$0xf] %vm7246, %v7211
        %7277 = vst.msk [vmem:[%s431 + $0x78] sm:$0xf] %vm7246, %v7212
        %7278 = vst.msk [vmem:[%s431 + $0x7c] sm:$0xf] %vm7246, %v7213
        %s7279 = sand.u32 %s292, 1
        %s7280 = scalar_lea.sflag [#allocation3], %s7279
        %s7281 = sand.u32 %s292, 1
        %s7282 = smul.addr %s7281, 128
        %s7283 = scalar_lea.vmem [#allocation2], %s7282
        // Predicated region
        $region65: #{tpu_custom_call.1} parent=63 // pred_check
          %p7284 = pneg %p302
        $region66: #{tpu_custom_call.1} parent=63 // pred_check_branch
          %7286 = sbr.rel (%p7284) target = $region68
        $region67: #{tpu_custom_call.1} parent=63 // pred_region
          %s7287 = smul.u32 16, %s30
          %s7289 = ssub.s32 2048, 2048
          %7290 = vsyncadd %s7280, %s7289
          %s7291 = smul.addr %s7287, 2
          %s7292 = smul.addr %s29, 32
          %s7293 = sadd.s32 %s7291, %s7292
          %s7294 = smul.addr %s7293, 64
          %s7295 = scalar_lea.hbm %s11, %s7294
          %s7296 = sshll.u32 %s7283, 4
          %s7297 = int_to_ptr.vmem [resolvable:$true] %s7296
          %7302 = dma.vmem_to_hbm [thread:$0]  %s7297, 2048, %s7295, %s7280, 64, 64, 4
        $region68: #{tpu_custom_call.1} parent=63 // pred_fallthru
          _
      $region64: #{tpu_custom_call.1} parent=5 // pred_fallthru
        _
      %p7303 = scmp.le.s32.totalorder 2, %s20
      // Predicated region
      $region69: #{tpu_custom_call.1} parent=5 // pred_check
        %p7304 = pneg %p7303
      $region70: #{tpu_custom_call.1} parent=5 // pred_check_branch
        %7306 = sbr.rel (%p7304) target = $region72
      $region71: #{tpu_custom_call.1} parent=5 // pred_region
        %s7307 = ssub.s32 %s20, 2
        // Predicated region
        $region73: #{tpu_custom_call.1} parent=71 // pred_check
          %p7308 = pneg %p308
        $region74: #{tpu_custom_call.1} parent=71 // pred_check_branch
          %7310 = sbr.rel (%p7308) target = $region76
        $region75: #{tpu_custom_call.1} parent=71 // pred_region
          %s7311 = sand.u32 %s293, 1
          %s7312 = scalar_lea.sflag [#allocation3], %s7311
          %s7313 = sand.u32 %s293, 1
          %s7314 = smul.addr %s7313, 128
          %s7315 = scalar_lea.vmem [#allocation2], %s7314
          %7316 = dma.done %s7312, 2048
        $region76: #{tpu_custom_call.1} parent=71 // pred_fallthru
          _
      $region72: #{tpu_custom_call.1} parent=5 // pred_fallthru
        _
    $region6: #{tpu_custom_call.1} parent=1 // loop_footer
      %s24 = sadd.s32 1, %s20
    $region7: #{tpu_custom_call.1} parent=1 // loop_footer_branch
      %19 = sbr.rel target = $region3
    $region8: #{tpu_custom_call.1} parent=1 // loop_exit
      _
    %7317 = vsyncpa [#allocation3], 1
    %s7318 = scalar_lea.sflag [#allocation3], 1
    %7319 = vsyncpa %s7318, 1

</llo_original>
